<compile_context>
chip_gen: v5e
topology: v5e:2x2
jax: 0.10.0
libtpu: 0.0.40
codegen_flags: <defaults>
</compile_context>

<pallas_src>
import numpy as np
import jax
import jax.numpy as jnp
from jax.experimental import pallas as pl
from jax.experimental.pallas import tpu as pltpu

# ----------------------------------------------------------------------------
# Constants (from the PyTorch module __init__, window = 'sqrt_hann', weight=1.)
# ----------------------------------------------------------------------------
SP = 6.910853e-06
SL = 0.1866055
NBINS = 512
NBARK = 49
NFREQ = NBINS // 2 + 1          # 257
POW_CORREC_FACTOR = 2.0 * 1.0   # sqrt_hann, window_weight=1.0

NBARK_EXT = NBARK + 1           # 49 bark bands + 1 folded-in SLL column
NCONST = 6                      # rows of the packed per-bark-band constant table

ABS_THRESH_POWER = np.array([
    51286152.0, 2454709.5, 70794.59375, 4897.788574, 1174.897705, 389.045166,
    104.71286, 45.70882, 17.782795, 9.772372, 4.897789, 3.090296, 1.905461,
    1.258925, 0.977237, 0.724436, 0.562341, 0.457088, 0.389045, 0.331131,
    0.295121, 0.269153, 0.25704, 0.251189, 0.251189, 0.251189, 0.251189,
    0.263027, 0.288403, 0.30903, 0.338844, 0.371535, 0.398107, 0.436516,
    0.467735, 0.489779, 0.501187, 0.501187, 0.512861, 0.524807, 0.524807,
    0.524807, 0.512861, 0.47863, 0.42658, 0.371535, 0.363078, 0.416869,
    0.537032], dtype=np.float32)

MODIFIED_ZWICKER = np.array(
    [0.25520097857560436] * 4 +
    [0.25168783742879913, 0.2480666573186961, 0.244767379124259,
     0.24173800119368227, 0.23893798876066405, 0.23633516221479894,
     0.23390360348392067, 0.23162209128929445] +
    [0.23] * 37, dtype=np.float32)

WIDTH_BARK = np.array([
    0.157344, 0.317994, 0.322441, 0.326934, 0.331474, 0.336061, 0.340697,
    0.345381, 0.350114, 0.354897, 0.359729, 0.364611, 0.369544, 0.374529,
    0.379565, 0.384653, 0.389794, 0.394989, 0.400236, 0.405538, 0.410894,
    0.416306, 0.421773, 0.427297, 0.432877, 0.438514, 0.444209, 0.449962,
    0.455774, 0.461645, 0.467577, 0.473569, 0.479621, 0.485736, 0.491912,
    0.498151, 0.504454, 0.510819, 0.51725, 0.523745, 0.530308, 0.536934,
    0.543629, 0.55039, 0.55722, 0.564119, 0.571085, 0.578125, 0.585232],
    dtype=np.float32)

SQRT_TOTAL_WIDTH = float(np.sqrt(np.sum(WIDTH_BARK)))

assert ABS_THRESH_POWER.shape[0] == NBARK
assert MODIFIED_ZWICKER.shape[0] == NBARK
assert WIDTH_BARK.shape[0] == NBARK


def make_mask_sll():
    mask = np.zeros((NFREQ,), dtype=np.float32)
    mask[11] = 0.5 * 25.0 / 31.25
    mask[12:104] = 1.0
    mask[104] = 0.5
    mask = mask * POW_CORREC_FACTOR * (NBINS + 2.0) / (NBINS * NBINS)
    return mask


def make_bark_matrix():
    # TODO(synk): original module loads 'bark_matrix_16k.mat'; here we build a
    # deterministic synthetic (257, 49) band-assignment matrix instead.
    m = np.zeros((NFREQ, NBARK), dtype=np.float32)
    idx = np.minimum((np.arange(NFREQ) * NBARK) // NFREQ, NBARK - 1)
    m[np.arange(NFREQ), idx] = 1.0
    return m


def make_bark_matrix_ext():
    """Bark matrix with the SLL mask folded in as an extra column, so a single
    MXU matmul yields both the bark bands and the per-frame SLL band sum."""
    m = np.zeros((NFREQ, NBARK_EXT), dtype=np.float32)
    m[:, :NBARK] = make_bark_matrix()
    m[:, NBARK] = make_mask_sll()
    return jnp.asarray(m)


def make_packed_constants():
    """Pack all per-bark-band constants (including hoisted transcendentals)
    into one (NCONST, NBARK_EXT) table.  Column NBARK (the SLL column of the
    extended bark matrix) gets inert values so it never contributes to the
    audible power, equalization, loudness or distortion terms."""
    thr = ABS_THRESH_POWER
    zw = MODIFIED_ZWICKER
    wid = WIDTH_BARK
    loud_const = SL * np.power(thr / 0.5, zw)     # hoisted EUP work
    half_over_thr = 0.5 / thr                     # turns a divide into a mul

    c = np.zeros((NCONST, NBARK_EXT), dtype=np.float32)
    c[0, :NBARK] = thr;           c[0, NBARK] = 1e30   # never audible
    c[1, :NBARK] = thr * 100.0;   c[1, NBARK] = 1e32   # never above thr*100
    c[2, :NBARK] = zw;            c[2, NBARK] = 1.0
    c[3, :NBARK] = loud_const;    c[3, NBARK] = 0.0    # zero loudness
    c[4, :NBARK] = half_over_thr; c[4, NBARK] = 0.0
    c[5, :NBARK] = wid;           c[5, NBARK] = 0.0    # zero band width
    return jnp.asarray(c)


# ----------------------------------------------------------------------------
# Pallas kernel: one batch element per grid step.
# ----------------------------------------------------------------------------
def pmsqe_kernel(spec_ref, pad_ref, cbark_ref, barkm_ref, wd_ref, wda_ref):
    spec = spec_ref[0]                 # (2*Tp, F): rows [0:Tp]=reference, [Tp:]=degraded
    pm = pad_ref[0]                    # (Tp, 1)
    barkm = barkm_ref[...]             # (F, NBARK_EXT)

    thr = cbark_ref[0:1, :]            # (1, NBARK_EXT) absolute hearing threshold
    thr100 = cbark_ref[1:2, :]         # thr * 100 (precomputed)
    zw = cbark_ref[2:3, :]             # modified Zwicker power
    loud_c = cbark_ref[3:4, :]         # Sl * (thr / 0.5) ** zw (precomputed)
    half_thr = cbark_ref[4:5, :]       # 0.5 / thr (precomputed)
    wid = cbark_ref[5:6, :]            # bark band widths

    tp = pm.shape[0]
    seq_len = jnp.sum(pm, axis=0, keepdims=True)                  # (1, 1)

    # --- fused bark computation (single MXU matmul over both spectra) --------
    raw = jnp.dot(spec, barkm, preferred_element_type=jnp.float32)  # (2Tp, NBARK_EXT)
    ref_raw = raw[:tp]
    deg_raw = raw[tp:]

    # --- magnitude at standard listening level --------------------------------
    # Column NBARK of the matmul is sum_f spec * mask_sll; the /NFREQ divisor of
    # the original mean() is kept.  The per-sequence SLL scale is deferred into
    # the bark domain (matmul is linear).
    band_sum_ref = jnp.sum(ref_raw[:, NBARK:NBARK + 1] * pm, axis=0, keepdims=True)
    band_sum_deg = jnp.sum(deg_raw[:, NBARK:NBARK + 1] * pm, axis=0, keepdims=True)
    ref_scale = (1e7 * NFREQ) * seq_len / band_sum_ref             # (1, 1)
    deg_scale = (1e7 * NFREQ) * seq_len / band_sum_deg

    ref_bark = (SP * ref_scale) * ref_raw            # (Tp, NBARK_EXT); col NBARK inert
    deg_bark = (SP * deg_scale) * deg_raw

    def audible_power(bark, threshold):
        return jnp.sum(jnp.where(bark > threshold, bark, 0.0),
                       axis=-1, keepdims=True)                     # (Tp, 1)

    # --- bark frequency equalization ------------------------------------------
    ap100 = audible_power(ref_bark, thr100)                        # (Tp, 1)
    not_silent = ap100 >= 1e7                                      # (Tp, 1)
    valid = jnp.logical_and(ref_bark >= thr100, not_silent)        # (Tp, NBARK_EXT)
    avg_ref = jnp.sum(jnp.where(valid, ref_bark, 0.0), axis=0, keepdims=True)
    avg_deg = jnp.sum(jnp.where(valid, deg_bark, 0.0), axis=0, keepdims=True)
    equalizer = jnp.clip((avg_ref + 1000.0) / (avg_deg + 1000.0), 0.01, 100.0)
    deg_bark = equalizer * deg_bark

    # --- bark gain equalization (ap_ref reused below as total ref power) ------
    ap_ref = audible_power(ref_bark, thr)                          # (Tp, 1)
    ap_deg = audible_power(deg_bark, thr)
    gain = jnp.clip((ap_ref + 5000.0) / (ap_deg + 5000.0), 0.0003, 5.0)
    deg_bark = gain * deg_bark

    # --- loudness & distortion tensors ----------------------------------------
    # TODO(synk): lane-pack ref/deg (ref -> lanes 0-48, deg -> lanes 64-112) to
    # halve the loudness EUP passes; lanes are only ~39% occupied at 50 bands.
    def loudness(bark):
        dens = loud_c * (jnp.power(0.5 + bark * half_thr, zw) - 1.0)
        return jnp.where(bark < thr, 0.0, dens)

    orig_loud = loudness(ref_bark)
    dist_loud = loudness(deg_bark)
    r = jnp.abs(dist_loud - orig_loud)
    m = 0.25 * jnp.minimum(orig_loud, dist_loud)
    D = jnp.maximum(r - m, 0.0)
    asym = jnp.power((deg_bark + 50.0) / (ref_bark + 50.0), 1.2)
    AF = jnp.where(asym < 3.0, 0.0, jnp.minimum(asym, 12.0))
    DA = AF * D

    # --- per-frame distortion --------------------------------------------------
    # Lane reductions produce (Tp, 1); the transcendental epilogue (pow, sqrt,
    # clamps) runs on lane-dense (1, Tp) rows after the transpose so it costs
    # ceil(Tp/128) vregs instead of ceil(Tp/8).
    Dw = D * wid
    d2_sum = jnp.sum(Dw * Dw, axis=-1, keepdims=True)              # (Tp, 1)
    da_sum = jnp.sum(DA * wid, axis=-1, keepdims=True)             # (Tp, 1)

    d2_row = d2_sum.T                                              # (1, Tp)
    da_row = da_sum.T
    ap_row = ap_ref.T
    # weights = ((ap_ref + 1e5) / 1e7) ** 0.04 ; multiply by its inverse directly
    inv_w = jnp.power((ap_row + 1e5) * 1e-7, -0.04)
    d_frame = jnp.sqrt(d2_row) * SQRT_TOTAL_WIDTH
    wd_ref[0] = jnp.minimum(d_frame * inv_w, 45.0)                 # (1, Tp)
    wda_ref[0] = jnp.minimum(da_row * inv_w, 45.0)                 # (1, Tp)


# ----------------------------------------------------------------------------
# Wrappers
# ----------------------------------------------------------------------------
def _vmem_limit_bytes(tp):
    # Device-aware cap: v7x has only 64 MiB physical VMEM, v5e/v6e have 128 MiB.
    try:
        cap = int(0.85 * pltpu.get_tpu_info().vmem_capacity_bytes)
    except Exception:  # pragma: no cover - conservative fallback
        cap = int(0.85 * (64 << 20))
    bytes_per_frame = 4 * (2 * 2 * 2 * 384    # stacked (2Tp, 384-lane) spectra, dbl-buffered
                           + 2 * 2 * 128      # pad-mask column, dbl-buffered
                           + 16 * 128         # live bark-domain temporaries
                           + 2 * 2 * 8)       # two (1, Tp) outputs, dbl-buffered
    est = bytes_per_frame * tp + (4 << 20)
    # TODO(synk): for very long sequences restructure into a T-tiled multi-pass
    # scheme (accumulate band_sum / avg_ref / avg_deg in small VMEM scratch,
    # then re-stream) instead of one whole-(T,F) block per grid step.
    return int(min(max(est, 32 << 20), cap))


def pmsqe_frames_pallas(spec_stacked, pad_mask_col, cbark, barkm_ext):
    B, T2, F = spec_stacked.shape
    Tp = T2 // 2
    assert F == NFREQ and Tp % 128 == 0
    assert pad_mask_col.shape == (B, Tp, 1)

    cost = pl.CostEstimate(
        flops=2 * B * T2 * F * NBARK_EXT,            # one fused (2Tp,F)x(F,50) matmul
        transcendentals=3 * B * Tp * NBARK_EXT,      # loudness pows + asym (+ epilogue)
        bytes_accessed=(B * T2 * F + 3 * B * Tp) * 4,
    )

    return pl.pallas_call(
        pmsqe_kernel,
        out_shape=(jax.ShapeDtypeStruct((B, 1, Tp), jnp.float32),
                   jax.ShapeDtypeStruct((B, 1, Tp), jnp.float32)),
        grid_spec=pltpu.PrefetchScalarGridSpec(
            num_scalar_prefetch=0,
            grid=(B,),
            in_specs=[
                pl.BlockSpec((1, T2, F), lambda b: (b, 0, 0)),        # stacked spectra
                pl.BlockSpec((1, Tp, 1), lambda b: (b, 0, 0)),        # pad_mask
                pl.BlockSpec((NCONST, NBARK_EXT), lambda b: (0, 0)),  # packed consts
                pl.BlockSpec((F, NBARK_EXT), lambda b: (0, 0)),       # bark + SLL col
            ],
            out_specs=[pl.BlockSpec((1, 1, Tp), lambda b: (b, 0, 0)),
                       pl.BlockSpec((1, 1, Tp), lambda b: (b, 0, 0))],
        ),
        compiler_params=pltpu.CompilerParams(
            # B >= 2 keeps both v7x TensorCores fed; single-TC chips ignore it.
            dimension_semantics=("parallel",),
            vmem_limit_bytes=_vmem_limit_bytes(Tp)),
        cost_estimate=cost,
    )(spec_stacked, pad_mask_col, cbark, barkm_ext)


def pmsqe_pallas(output, target, pad_mask, cbark, barkm_ext):
    B, T, F = target.shape
    assert F == NFREQ
    Tp = ((T + 127) // 128) * 128
    pad_t = Tp - T
    # Zero-padded frames have pad_mask == 0, contribute nothing to the SLL sums,
    # equalization averages or the final masked mean (matches module semantics).
    tgt = jnp.pad(target.astype(jnp.float32), ((0, 0), (0, pad_t), (0, 0)))
    out = jnp.pad(output.astype(jnp.float32), ((0, 0), (0, pad_t), (0, 0)))
    pm = jnp.pad(pad_mask.astype(jnp.float32), ((0, 0), (0, pad_t), (0, 0)))
    spec_stacked = jnp.concatenate([tgt, out], axis=1)             # (B, 2*Tp, F)

    wd_frame, wda_frame = pmsqe_frames_pallas(spec_stacked, pm, cbark, barkm_ext)
    pm2 = pm[..., 0]                                               # (B, Tp)
    denom = jnp.sum(pm2)
    wD = jnp.sum(wd_frame[:, 0, :] * pm2) / denom
    wDA = jnp.sum(wda_frame[:, 0, :] * pm2) / denom
    return wD, wDA


# ----------------------------------------------------------------------------
# Pure-JAX reference (mirrors the PyTorch forward) for verification.
# ----------------------------------------------------------------------------
def pmsqe_ref(output, target, pad_mask, params):
    mask_sll, bark_matrix, thr, zw, wid = params

    def sll(spectra):
        masked = spectra * pad_mask * mask_sll
        freq_mean = jnp.mean(masked, axis=-1, keepdims=True)
        sum_spec = jnp.sum(freq_mean, axis=-2, keepdims=True)
        seq_len = jnp.sum(pad_mask, axis=-2, keepdims=True)
        return spectra * (1e7 / (sum_spec / seq_len))

    def bark(spectra):
        return SP * jnp.matmul(spectra, bark_matrix,
                               precision=jax.lax.Precision.HIGHEST)

    def audible_power(b, f):
        return jnp.sum(jnp.where(b > thr * f, b, 0.0), axis=-1, keepdims=True)

    ref_b = bark(sll(target))
    deg_b = bark(sll(output))

    ap100 = audible_power(ref_b, 100.0)
    not_silent = ap100 >= 1e7
    cond = ref_b >= thr * 100.0
    ref_t = jnp.where(cond, ref_b, 0.0)
    deg_t = jnp.where(cond, deg_b, 0.0)
    avg_r = jnp.sum(jnp.where(not_silent, ref_t, 0.0), axis=-2, keepdims=True)
    avg_d = jnp.sum(jnp.where(not_silent, deg_t, 0.0), axis=-2, keepdims=True)
    eq = jnp.maximum(jnp.minimum((avg_r + 1000.0) / (avg_d + 1000.0), 100.0), 0.01)
    deg_b = eq * deg_b

    g = (audible_power(ref_b, 1.0) + 5000.0) / (audible_power(deg_b, 1.0) + 5000.0)
    g = jnp.maximum(jnp.minimum(g, 5.0), 0.0003)
    deg_b = g * deg_b

    def loud(b):
        d = SL * jnp.power(thr / 0.5, zw) * (jnp.power(0.5 + 0.5 * b / thr, zw) - 1.0)
        return jnp.where(b < thr, 0.0, d)

    ol, dl = loud(ref_b), loud(deg_b)
    r = jnp.abs(dl - ol)
    m = 0.25 * jnp.minimum(ol, dl)
    D = jnp.maximum(r - m, 0.0)
    asym = jnp.power((deg_b + 50.0) / (ref_b + 50.0), 1.2)
    AF = jnp.where(asym < 3.0, 0.0, jnp.minimum(asym, 12.0))
    DA = AF * D

    apr = audible_power(ref_b, 1.0)
    D_frame = jnp.sqrt(jnp.sum((D * wid) ** 2, axis=-1, keepdims=True)) * SQRT_TOTAL_WIDTH
    DA_frame = jnp.sum(DA * wid, axis=-1, keepdims=True)
    weights = jnp.power((apr + 1e5) / 1e7, 0.04)
    wDf = jnp.minimum(D_frame / weights, 45.0)
    wDAf = jnp.minimum(DA_frame / weights, 45.0)
    denom = jnp.sum(pad_mask)
    return jnp.sum(wDf * pad_mask) / denom, jnp.sum(wDAf * pad_mask) / denom


# ----------------------------------------------------------------------------
if __name__ == "__main__":
    B, T, F = 2, 8, NFREQ   # F is fixed by the module (512-point DFT -> 257 bins)

    key = jax.random.PRNGKey(0)
    k1, k2 = jax.random.split(key)
    output = jax.random.uniform(k1, (B, T, F), jnp.float32, 0.01, 1.0)
    target = jax.random.uniform(k2, (B, T, F), jnp.float32, 0.01, 1.0)
    pad_mask = jnp.concatenate(
        [jnp.ones((B, 6, 1), jnp.float32), jnp.zeros((B, 2, 1), jnp.float32)],
        axis=1)

    barkm_ext = make_bark_matrix_ext()
    cbark = make_packed_constants()

    wD, wDA = pmsqe_pallas(output, target, pad_mask, cbark, barkm_ext)
    jax.block_until_ready((wD, wDA))

    ref_params = (jnp.asarray(make_mask_sll()), jnp.asarray(make_bark_matrix()),
                  jnp.asarray(ABS_THRESH_POWER), jnp.asarray(MODIFIED_ZWICKER),
                  jnp.asarray(WIDTH_BARK))
    wD_ref, wDA_ref = pmsqe_ref(output, target, pad_mask, ref_params)
    jax.block_until_ready((wD_ref, wDA_ref))

    assert np.allclose(np.asarray(wD), np.asarray(wD_ref), rtol=2e-2, atol=1e-3), \
        (float(wD), float(wD_ref))
    assert np.allclose(np.asarray(wDA), np.asarray(wDA_ref), rtol=2e-2, atol=1e-3), \
        (float(wDA), float(wDA_ref))

    print("KERNEL_OK")
</pallas_src>

<mosaic_0001>
module attributes {stable_mosaic.version = 11 : i64} {
  func.func @pmsqe_kernel(%arg0: i32, %arg1: memref<1x256x257xf32, #tpu.memory_space<vmem>>, %arg2: memref<1x128x1xf32, #tpu.memory_space<vmem>>, %arg3: memref<6x50xf32, #tpu.memory_space<vmem>>, %arg4: memref<257x50xf32, #tpu.memory_space<vmem>>, %arg5: memref<1x1x128xf32, #tpu.memory_space<vmem>>, %arg6: memref<1x1x128xf32, #tpu.memory_space<vmem>>) attributes {dimension_semantics = [#tpu.dimension_semantics<parallel>], iteration_bounds = array<i64: 2>, scalar_prefetch = 0 : i64, scratch_operands = 0 : i64, tpu.core_type = #tpu.core_type<tc>, window_params = [{transform_indices = @transform_0, window_bounds = array<i64: 1, 256, 257>}, {transform_indices = @transform_1, window_bounds = array<i64: 1, 128, 1>}, {pipeline_mode = #tpu.pipeline_mode<synchronous>, transform_indices = @transform_2, window_bounds = array<i64: 6, 50>}, {pipeline_mode = #tpu.pipeline_mode<synchronous>, transform_indices = @transform_3, window_bounds = array<i64: 257, 50>}, {transform_indices = @transform_4, window_bounds = array<i64: 1, 1, 128>}, {transform_indices = @transform_5, window_bounds = array<i64: 1, 1, 128>}]} {
    %c0 = arith.constant 0 : index
    %c0_0 = arith.constant 0 : index
    %c0_1 = arith.constant 0 : index
    %0 = vector.load %arg1[%c0, %c0_0, %c0_1] : memref<1x256x257xf32, #tpu.memory_space<vmem>>, vector<1x256x257xf32>
    %1 = vector.shape_cast %0 : vector<1x256x257xf32> to vector<256x257xf32>
    %c0_2 = arith.constant 0 : index
    %c0_3 = arith.constant 0 : index
    %c0_4 = arith.constant 0 : index
    %2 = vector.load %arg2[%c0_2, %c0_3, %c0_4] : memref<1x128x1xf32, #tpu.memory_space<vmem>>, vector<1x128x1xf32>
    %3 = vector.shape_cast %2 : vector<1x128x1xf32> to vector<128x1xf32>
    %c0_5 = arith.constant 0 : index
    %c0_6 = arith.constant 0 : index
    %4 = vector.load %arg4[%c0_5, %c0_6] : memref<257x50xf32, #tpu.memory_space<vmem>>, vector<257x50xf32>
    %c0_7 = arith.constant 0 : index
    %c0_8 = arith.constant 0 : index
    %5 = vector.load %arg3[%c0_7, %c0_8] : memref<6x50xf32, #tpu.memory_space<vmem>>, vector<1x50xf32>
    %c1 = arith.constant 1 : index
    %c0_9 = arith.constant 0 : index
    %6 = vector.load %arg3[%c1, %c0_9] : memref<6x50xf32, #tpu.memory_space<vmem>>, vector<1x50xf32>
    %c2 = arith.constant 2 : index
    %c0_10 = arith.constant 0 : index
    %7 = vector.load %arg3[%c2, %c0_10] : memref<6x50xf32, #tpu.memory_space<vmem>>, vector<1x50xf32>
    %c3 = arith.constant 3 : index
    %c0_11 = arith.constant 0 : index
    %8 = vector.load %arg3[%c3, %c0_11] : memref<6x50xf32, #tpu.memory_space<vmem>>, vector<1x50xf32>
    %c4 = arith.constant 4 : index
    %c0_12 = arith.constant 0 : index
    %9 = vector.load %arg3[%c4, %c0_12] : memref<6x50xf32, #tpu.memory_space<vmem>>, vector<1x50xf32>
    %c5 = arith.constant 5 : index
    %c0_13 = arith.constant 0 : index
    %10 = vector.load %arg3[%c5, %c0_13] : memref<6x50xf32, #tpu.memory_space<vmem>>, vector<1x50xf32>
    %cst = arith.constant dense<0.000000e+00> : vector<1xf32>
    %11 = vector.multi_reduction <add>, %3, %cst [0] : vector<128x1xf32> to vector<1xf32>
    %12 = vector.shape_cast %11 : vector<1xf32> to vector<1x1xf32>
    %cst_14 = arith.constant dense<0.000000e+00> : vector<256x50xf32>
    %13 = tpu.matmul %1, %4, %cst_14 {dimension_numbers = #tpu.dot_dimension_numbers<[1], [0], [0], [1], [0, 0, 1, 1], [], []>} : vector<256x257xf32>, vector<257x50xf32>, vector<256x50xf32> -> vector<256x50xf32>
    %14 = vector.extract_strided_slice %13 {offsets = [0, 0], sizes = [128, 50], strides = [1, 1]} : vector<256x50xf32> to vector<128x50xf32>
    %15 = vector.extract_strided_slice %13 {offsets = [128, 0], sizes = [128, 50], strides = [1, 1]} : vector<256x50xf32> to vector<128x50xf32>
    %16 = vector.extract_strided_slice %14 {offsets = [0, 49], sizes = [128, 1], strides = [1, 1]} : vector<128x50xf32> to vector<128x1xf32>
    %17 = arith.mulf %16, %3 : vector<128x1xf32>
    %cst_15 = arith.constant dense<0.000000e+00> : vector<1xf32>
    %18 = vector.multi_reduction <add>, %17, %cst_15 [0] : vector<128x1xf32> to vector<1xf32>
    %19 = vector.shape_cast %18 : vector<1xf32> to vector<1x1xf32>
    %20 = vector.extract_strided_slice %15 {offsets = [0, 49], sizes = [128, 1], strides = [1, 1]} : vector<128x50xf32> to vector<128x1xf32>
    %21 = arith.mulf %20, %3 : vector<128x1xf32>
    %cst_16 = arith.constant dense<0.000000e+00> : vector<1xf32>
    %22 = vector.multi_reduction <add>, %21, %cst_16 [0] : vector<128x1xf32> to vector<1xf32>
    %23 = vector.shape_cast %22 : vector<1xf32> to vector<1x1xf32>
    %cst_17 = arith.constant 2.570000e+09 : f32
    %24 = vector.broadcast %cst_17 : f32 to vector<1x1xf32>
    %25 = arith.mulf %24, %12 : vector<1x1xf32>
    %26 = arith.divf %25, %19 : vector<1x1xf32>
    %cst_18 = arith.constant 2.570000e+09 : f32
    %27 = vector.broadcast %cst_18 : f32 to vector<1x1xf32>
    %28 = arith.mulf %27, %12 : vector<1x1xf32>
    %29 = arith.divf %28, %23 : vector<1x1xf32>
    %cst_19 = arith.constant 6.91085279E-6 : f32
    %30 = vector.broadcast %cst_19 : f32 to vector<1x1xf32>
    %31 = arith.mulf %30, %26 : vector<1x1xf32>
    %32 = vector.broadcast %31 : vector<1x1xf32> to vector<128x50xf32>
    %33 = arith.mulf %32, %14 : vector<128x50xf32>
    %cst_20 = arith.constant 6.91085279E-6 : f32
    %34 = vector.broadcast %cst_20 : f32 to vector<1x1xf32>
    %35 = arith.mulf %34, %29 : vector<1x1xf32>
    %36 = vector.broadcast %35 : vector<1x1xf32> to vector<128x50xf32>
    %37 = arith.mulf %36, %15 : vector<128x50xf32>
    %38 = vector.broadcast %6 : vector<1x50xf32> to vector<128x50xf32>
    %39 = arith.cmpf ogt, %33, %38 : vector<128x50xf32>
    %cst_21 = arith.constant 0.000000e+00 : f32
    %40 = vector.broadcast %cst_21 : f32 to vector<128x50xf32>
    %41 = arith.select %39, %33, %40 : vector<128x50xi1>, vector<128x50xf32>
    %cst_22 = arith.constant dense<0.000000e+00> : vector<128xf32>
    %42 = vector.multi_reduction <add>, %41, %cst_22 [1] : vector<128x50xf32> to vector<128xf32>
    %43 = vector.shape_cast %42 : vector<128xf32> to vector<128x1xf32>
    %cst_23 = arith.constant 1.000000e+07 : f32
    %44 = vector.broadcast %cst_23 : f32 to vector<128x1xf32>
    %45 = arith.cmpf oge, %43, %44 : vector<128x1xf32>
    %46 = vector.broadcast %6 : vector<1x50xf32> to vector<128x50xf32>
    %47 = arith.cmpf oge, %33, %46 : vector<128x50xf32>
    %48 = vector.broadcast %45 : vector<128x1xi1> to vector<128x50xi1>
    %49 = arith.andi %47, %48 : vector<128x50xi1>
    %cst_24 = arith.constant 0.000000e+00 : f32
    %50 = vector.broadcast %cst_24 : f32 to vector<128x50xf32>
    %51 = arith.select %49, %33, %50 : vector<128x50xi1>, vector<128x50xf32>
    %cst_25 = arith.constant dense<0.000000e+00> : vector<50xf32>
    %52 = vector.multi_reduction <add>, %51, %cst_25 [0] : vector<128x50xf32> to vector<50xf32>
    %53 = vector.shape_cast %52 : vector<50xf32> to vector<1x50xf32>
    %cst_26 = arith.constant 0.000000e+00 : f32
    %54 = vector.broadcast %cst_26 : f32 to vector<128x50xf32>
    %55 = arith.select %49, %37, %54 : vector<128x50xi1>, vector<128x50xf32>
    %cst_27 = arith.constant dense<0.000000e+00> : vector<50xf32>
    %56 = vector.multi_reduction <add>, %55, %cst_27 [0] : vector<128x50xf32> to vector<50xf32>
    %57 = vector.shape_cast %56 : vector<50xf32> to vector<1x50xf32>
    %cst_28 = arith.constant 1.000000e+03 : f32
    %58 = vector.broadcast %cst_28 : f32 to vector<1x50xf32>
    %59 = arith.addf %53, %58 : vector<1x50xf32>
    %cst_29 = arith.constant 1.000000e+03 : f32
    %60 = vector.broadcast %cst_29 : f32 to vector<1x50xf32>
    %61 = arith.addf %57, %60 : vector<1x50xf32>
    %62 = arith.divf %59, %61 : vector<1x50xf32>
    %cst_30 = arith.constant 0.00999999977 : f32
    %cst_31 = arith.constant 1.000000e+02 : f32
    %63 = vector.broadcast %cst_30 : f32 to vector<1x50xf32>
    %64 = arith.maximumf %63, %62 : vector<1x50xf32>
    %65 = vector.broadcast %cst_31 : f32 to vector<1x50xf32>
    %66 = arith.minimumf %65, %64 : vector<1x50xf32>
    %67 = vector.broadcast %66 : vector<1x50xf32> to vector<128x50xf32>
    %68 = arith.mulf %67, %37 : vector<128x50xf32>
    %69 = vector.broadcast %5 : vector<1x50xf32> to vector<128x50xf32>
    %70 = arith.cmpf ogt, %33, %69 : vector<128x50xf32>
    %cst_32 = arith.constant 0.000000e+00 : f32
    %71 = vector.broadcast %cst_32 : f32 to vector<128x50xf32>
    %72 = arith.select %70, %33, %71 : vector<128x50xi1>, vector<128x50xf32>
    %cst_33 = arith.constant dense<0.000000e+00> : vector<128xf32>
    %73 = vector.multi_reduction <add>, %72, %cst_33 [1] : vector<128x50xf32> to vector<128xf32>
    %74 = vector.shape_cast %73 : vector<128xf32> to vector<128x1xf32>
    %75 = vector.broadcast %5 : vector<1x50xf32> to vector<128x50xf32>
    %76 = arith.cmpf ogt, %68, %75 : vector<128x50xf32>
    %cst_34 = arith.constant 0.000000e+00 : f32
    %77 = vector.broadcast %cst_34 : f32 to vector<128x50xf32>
    %78 = arith.select %76, %68, %77 : vector<128x50xi1>, vector<128x50xf32>
    %cst_35 = arith.constant dense<0.000000e+00> : vector<128xf32>
    %79 = vector.multi_reduction <add>, %78, %cst_35 [1] : vector<128x50xf32> to vector<128xf32>
    %80 = vector.shape_cast %79 : vector<128xf32> to vector<128x1xf32>
    %cst_36 = arith.constant 5.000000e+03 : f32
    %81 = vector.broadcast %cst_36 : f32 to vector<128x1xf32>
    %82 = arith.addf %74, %81 : vector<128x1xf32>
    %cst_37 = arith.constant 5.000000e+03 : f32
    %83 = vector.broadcast %cst_37 : f32 to vector<128x1xf32>
    %84 = arith.addf %80, %83 : vector<128x1xf32>
    %85 = arith.divf %82, %84 : vector<128x1xf32>
    %cst_38 = arith.constant 3.000000e-04 : f32
    %cst_39 = arith.constant 5.000000e+00 : f32
    %86 = vector.broadcast %cst_38 : f32 to vector<128x1xf32>
    %87 = arith.maximumf %86, %85 : vector<128x1xf32>
    %88 = vector.broadcast %cst_39 : f32 to vector<128x1xf32>
    %89 = arith.minimumf %88, %87 : vector<128x1xf32>
    %90 = vector.broadcast %89 : vector<128x1xf32> to vector<128x50xf32>
    %91 = arith.mulf %90, %68 : vector<128x50xf32>
    %92 = vector.broadcast %9 : vector<1x50xf32> to vector<128x50xf32>
    %93 = arith.mulf %33, %92 : vector<128x50xf32>
    %cst_40 = arith.constant 5.000000e-01 : f32
    %94 = vector.broadcast %cst_40 : f32 to vector<128x50xf32>
    %95 = arith.addf %94, %93 : vector<128x50xf32>
    %96 = vector.broadcast %7 : vector<1x50xf32> to vector<128x50xf32>
    %97 = math.powf %95, %96 : vector<128x50xf32>
    %cst_41 = arith.constant 1.000000e+00 : f32
    %98 = vector.broadcast %cst_41 : f32 to vector<128x50xf32>
    %99 = arith.subf %97, %98 : vector<128x50xf32>
    %100 = vector.broadcast %8 : vector<1x50xf32> to vector<128x50xf32>
    %101 = arith.mulf %100, %99 : vector<128x50xf32>
    %102 = vector.broadcast %5 : vector<1x50xf32> to vector<128x50xf32>
    %103 = arith.cmpf olt, %33, %102 : vector<128x50xf32>
    %cst_42 = arith.constant 0.000000e+00 : f32
    %104 = vector.broadcast %cst_42 : f32 to vector<128x50xf32>
    %105 = arith.select %103, %104, %101 : vector<128x50xi1>, vector<128x50xf32>
    %106 = vector.broadcast %9 : vector<1x50xf32> to vector<128x50xf32>
    %107 = arith.mulf %91, %106 : vector<128x50xf32>
    %cst_43 = arith.constant 5.000000e-01 : f32
    %108 = vector.broadcast %cst_43 : f32 to vector<128x50xf32>
    %109 = arith.addf %108, %107 : vector<128x50xf32>
    %110 = vector.broadcast %7 : vector<1x50xf32> to vector<128x50xf32>
    %111 = math.powf %109, %110 : vector<128x50xf32>
    %cst_44 = arith.constant 1.000000e+00 : f32
    %112 = vector.broadcast %cst_44 : f32 to vector<128x50xf32>
    %113 = arith.subf %111, %112 : vector<128x50xf32>
    %114 = vector.broadcast %8 : vector<1x50xf32> to vector<128x50xf32>
    %115 = arith.mulf %114, %113 : vector<128x50xf32>
    %116 = vector.broadcast %5 : vector<1x50xf32> to vector<128x50xf32>
    %117 = arith.cmpf olt, %91, %116 : vector<128x50xf32>
    %cst_45 = arith.constant 0.000000e+00 : f32
    %118 = vector.broadcast %cst_45 : f32 to vector<128x50xf32>
    %119 = arith.select %117, %118, %115 : vector<128x50xi1>, vector<128x50xf32>
    %120 = arith.subf %119, %105 : vector<128x50xf32>
    %121 = math.absf %120 : vector<128x50xf32>
    %122 = arith.minimumf %105, %119 : vector<128x50xf32>
    %cst_46 = arith.constant 2.500000e-01 : f32
    %123 = vector.broadcast %cst_46 : f32 to vector<128x50xf32>
    %124 = arith.mulf %123, %122 : vector<128x50xf32>
    %125 = arith.subf %121, %124 : vector<128x50xf32>
    %cst_47 = arith.constant 0.000000e+00 : f32
    %126 = vector.broadcast %cst_47 : f32 to vector<128x50xf32>
    %127 = arith.maximumf %125, %126 : vector<128x50xf32>
    %cst_48 = arith.constant 5.000000e+01 : f32
    %128 = vector.broadcast %cst_48 : f32 to vector<128x50xf32>
    %129 = arith.addf %91, %128 : vector<128x50xf32>
    %cst_49 = arith.constant 5.000000e+01 : f32
    %130 = vector.broadcast %cst_49 : f32 to vector<128x50xf32>
    %131 = arith.addf %33, %130 : vector<128x50xf32>
    %132 = arith.divf %129, %131 : vector<128x50xf32>
    %cst_50 = arith.constant 1.200000e+00 : f32
    %133 = vector.broadcast %cst_50 : f32 to vector<128x50xf32>
    %134 = math.powf %132, %133 : vector<128x50xf32>
    %cst_51 = arith.constant 3.000000e+00 : f32
    %135 = vector.broadcast %cst_51 : f32 to vector<128x50xf32>
    %136 = arith.cmpf olt, %134, %135 : vector<128x50xf32>
    %cst_52 = arith.constant 1.200000e+01 : f32
    %137 = vector.broadcast %cst_52 : f32 to vector<128x50xf32>
    %138 = arith.minimumf %134, %137 : vector<128x50xf32>
    %cst_53 = arith.constant 0.000000e+00 : f32
    %139 = vector.broadcast %cst_53 : f32 to vector<128x50xf32>
    %140 = arith.select %136, %139, %138 : vector<128x50xi1>, vector<128x50xf32>
    %141 = arith.mulf %140, %127 : vector<128x50xf32>
    %142 = vector.broadcast %10 : vector<1x50xf32> to vector<128x50xf32>
    %143 = arith.mulf %127, %142 : vector<128x50xf32>
    %144 = arith.mulf %143, %143 : vector<128x50xf32>
    %cst_54 = arith.constant dense<0.000000e+00> : vector<128xf32>
    %145 = vector.multi_reduction <add>, %144, %cst_54 [1] : vector<128x50xf32> to vector<128xf32>
    %146 = vector.shape_cast %145 : vector<128xf32> to vector<128x1xf32>
    %147 = vector.broadcast %10 : vector<1x50xf32> to vector<128x50xf32>
    %148 = arith.mulf %141, %147 : vector<128x50xf32>
    %cst_55 = arith.constant dense<0.000000e+00> : vector<128xf32>
    %149 = vector.multi_reduction <add>, %148, %cst_55 [1] : vector<128x50xf32> to vector<128xf32>
    %150 = vector.shape_cast %149 : vector<128xf32> to vector<128x1xf32>
    %151 = tpu.transpose %146, [1, 0] : vector<128x1xf32> -> vector<1x128xf32>
    %152 = tpu.transpose %150, [1, 0] : vector<128x1xf32> -> vector<1x128xf32>
    %153 = tpu.transpose %74, [1, 0] : vector<128x1xf32> -> vector<1x128xf32>
    %cst_56 = arith.constant 1.000000e+05 : f32
    %154 = vector.broadcast %cst_56 : f32 to vector<1x128xf32>
    %155 = arith.addf %153, %154 : vector<1x128xf32>
    %cst_57 = arith.constant 1.000000e-07 : f32
    %156 = vector.broadcast %cst_57 : f32 to vector<1x128xf32>
    %157 = arith.mulf %155, %156 : vector<1x128xf32>
    %cst_58 = arith.constant -4.000000e-02 : f32
    %158 = vector.broadcast %cst_58 : f32 to vector<1x128xf32>
    %159 = math.powf %157, %158 : vector<1x128xf32>
    %160 = math.sqrt %151 : vector<1x128xf32>
    %cst_59 = arith.constant 4.61905289 : f32
    %161 = vector.broadcast %cst_59 : f32 to vector<1x128xf32>
    %162 = arith.mulf %160, %161 : vector<1x128xf32>
    %163 = arith.mulf %162, %159 : vector<1x128xf32>
    %cst_60 = arith.constant 4.500000e+01 : f32
    %164 = vector.broadcast %cst_60 : f32 to vector<1x128xf32>
    %165 = arith.minimumf %163, %164 : vector<1x128xf32>
    %c0_61 = arith.constant 0 : index
    %c0_62 = arith.constant 0 : index
    %c0_63 = arith.constant 0 : index
    %166 = vector.load %arg5[%c0_61, %c0_62, %c0_63] : memref<1x1x128xf32, #tpu.memory_space<vmem>>, vector<1x1x128xf32>
    %167 = vector.shape_cast %166 : vector<1x1x128xf32> to vector<1x128xf32>
    %168 = vector.shape_cast %165 : vector<1x128xf32> to vector<1x1x128xf32>
    tpu.vector_store %arg5[%c0_61, %c0_62, %c0_63], %168 {strides = array<i32>} : memref<1x1x128xf32, #tpu.memory_space<vmem>>, vector<1x1x128xf32>,
    %169 = arith.mulf %152, %159 : vector<1x128xf32>
    %cst_64 = arith.constant 4.500000e+01 : f32
    %170 = vector.broadcast %cst_64 : f32 to vector<1x128xf32>
    %171 = arith.minimumf %169, %170 : vector<1x128xf32>
    %c0_65 = arith.constant 0 : index
    %c0_66 = arith.constant 0 : index
    %c0_67 = arith.constant 0 : index
    %172 = vector.load %arg6[%c0_65, %c0_66, %c0_67] : memref<1x1x128xf32, #tpu.memory_space<vmem>>, vector<1x1x128xf32>
    %173 = vector.shape_cast %172 : vector<1x1x128xf32> to vector<1x128xf32>
    %174 = vector.shape_cast %171 : vector<1x128xf32> to vector<1x1x128xf32>
    tpu.vector_store %arg6[%c0_65, %c0_66, %c0_67], %174 {strides = array<i32>} : memref<1x1x128xf32, #tpu.memory_space<vmem>>, vector<1x1x128xf32>,
    return
  }
  func.func @transform_0(%arg0: i32) -> (i32, i32, i32) {
    %c0_i32 = arith.constant 0 : i32
    %c0_i32_0 = arith.constant 0 : i32
    %c0_i32_1 = arith.constant 0 : i32
    return %arg0, %c0_i32, %c0_i32_0 : i32, i32, i32
  }
  func.func @transform_1(%arg0: i32) -> (i32, i32, i32) {
    %c0_i32 = arith.constant 0 : i32
    %c0_i32_0 = arith.constant 0 : i32
    %c0_i32_1 = arith.constant 0 : i32
    return %arg0, %c0_i32, %c0_i32_0 : i32, i32, i32
  }
  func.func @transform_2(%arg0: i32) -> (i32, i32) {
    %c0_i32 = arith.constant 0 : i32
    %c0_i32_0 = arith.constant 0 : i32
    %c0_i32_1 = arith.constant 0 : i32
    return %c0_i32, %c0_i32_0 : i32, i32
  }
  func.func @transform_3(%arg0: i32) -> (i32, i32) {
    %c0_i32 = arith.constant 0 : i32
    %c0_i32_0 = arith.constant 0 : i32
    %c0_i32_1 = arith.constant 0 : i32
    return %c0_i32, %c0_i32_0 : i32, i32
  }
  func.func @transform_4(%arg0: i32) -> (i32, i32, i32) {
    %c0_i32 = arith.constant 0 : i32
    %c0_i32_0 = arith.constant 0 : i32
    %c0_i32_1 = arith.constant 0 : i32
    return %arg0, %c0_i32, %c0_i32_0 : i32, i32, i32
  }
  func.func @transform_5(%arg0: i32) -> (i32, i32, i32) {
    %c0_i32 = arith.constant 0 : i32
    %c0_i32_0 = arith.constant 0 : i32
    %c0_i32_1 = arith.constant 0 : i32
    return %arg0, %c0_i32, %c0_i32_0 : i32, i32, i32
  }
}

</mosaic_0001>

<llo_original>
// kernel: tpu_custom_call.1
$region0: #{tpu_custom_call.1}
  #allocation0 [shape = 'u32[]', space=smem, size = 0x4, offset = 0x4, fixed_abs, tag = 'smem constant byte address 0x4 - core index']
  #allocation1 [shape = 'u32[72,128]{1,0:T(1,128)}', space=vmem, size = 0x9000, scoped, tag = 'internal scratch']
  %s0 = inlined_call_operand.vmem [shape: f32[2,256,257], index: 0, kind: input, shape index: {}]
  %s1 = inlined_call_operand.vmem [shape: f32[2,128,1], index: 1, kind: input, shape index: {}]
  %s2 = inlined_call_operand.vmem [shape: f32[6,50], index: 2, kind: input, shape index: {}]
  %s3 = inlined_call_operand.vmem [shape: f32[257,50], index: 3, kind: input, shape index: {}]
  %s4 = inlined_call_operand.hbm [shape: f32[2,1,128], index: 4, kind: output, shape index: {0}]
  %s5 = inlined_call_operand.hbm [shape: f32[2,1,128], index: 5, kind: output, shape index: {1}]
  %6 = xla_tuple %s4, %s5
  %s7 = sld [smem:[#allocation0]]
  $region57: #{tpu_custom_call.1} parent=0
    _
  %s9 = ssub.s32 1, %s7
  %s10 = scalar_select 0, %s9, %s7
  $region1: #{tpu_custom_call.1} parent=0
    #allocation2 [shape = 'u8[1024]{0}', space=vmem, size = 0x400, scoped, tag = 'output window, operand 0']
    #allocation3 [shape = 's32[2]{0}', space=sflag, size = 0x8, scoped, tag = 'scoped memory for tpu_custom_call.1']
    #allocation4 [shape = 'u8[1024]{0}', space=vmem, size = 0x400, scoped, tag = 'output window, operand 1']
    #allocation5 [shape = 's32[2]{0}', space=sflag, size = 0x8, scoped, tag = 'scoped memory for tpu_custom_call.1']
    %11 = vsyncpa [#allocation3], 0
    %s12 = scalar_lea.sflag [#allocation3], 1
    %13 = vsyncpa %s12, 0
    %14 = vsyncpa [#allocation5], 0
    %s15 = scalar_lea.sflag [#allocation5], 1
    %16 = vsyncpa %s15, 0
    loop: start=0, step=1, limit=4
    $region2: #{tpu_custom_call.1} parent=1 // loop_pre_header
      _
    $region3: #{tpu_custom_call.1} parent=1 // loop_header
      %s18 = sphi 0, %s22
      %p19 = scmp.ge.s32.totalorder %s18, 4
      %s28 = sphi 0, %s30
      %s31 = sphi 0, %s28
      %s32 = sphi 0, %s31
      %s48 = sphi 0, %s32
      %s54 = sphi 0, %s56
      %s57 = sphi 0, %s54
      %s58 = sphi 0, %s57
      %s74 = sphi 0, %s58
      %s78 = sphi 0, %s78
      %s80 = sphi 0, %s78
      %s81 = sphi 0, %s80
      %s95 = sphi 0, %s81
      %s99 = sphi 0, %s99
      %s101 = sphi 0, %s99
      %s102 = sphi 0, %s101
      %s116 = sphi 0, %s102
      %s122 = sphi 0, %s124
      %s125 = sphi 0, %s122
      %s126 = sphi 0, %s125
      %s142 = sphi 0, %s126
      %s148 = sphi 0, %s150
      %s151 = sphi 0, %s148
      %s152 = sphi 0, %s151
      %s168 = sphi 0, %s152
    $region4: #{tpu_custom_call.1} parent=1 // loop_header_branch
      %21 = sbr.rel (%p19) target = $region8
    $region5: #{tpu_custom_call.1} parent=1 // loop_body
      %s23 = ssub.s32 %s18, 1
      %s24 = ssub.s32 %s18, 2
      %s25 = sadd.s32 %s18, 1
      %s26 = ssub.s32 %s18, %s25
      %p27 = scmp.eq.s32.totalorder %s26, 0
      %s29 = sadd.s32 %s28, 1
      %s30 = scalar_select %p27, %s28, %s29
      %p33 = pneg %p27
      %p34 = scmp.eq.s32.totalorder %s18, 1
      %p35 = por %p33, %p34
      %p36 = scmp.ne.s32.totalorder %s28, %s31
      %p37 = scmp.eq.s32.totalorder %s18, 0
      %p38 = por %p36, %p37
      %p39 = scmp.ne.s32.totalorder %s28, %s31
      %p40 = scmp.eq.s32.totalorder %s23, 1
      %p41 = por %p39, %p40
      %p42 = scmp.ne.s32.totalorder %s31, %s32
      %p43 = scmp.eq.s32.totalorder %s23, 0
      %p44 = por %p42, %p43
      %p45 = scmp.ne.s32.totalorder %s31, %s32
      %p46 = scmp.eq.s32.totalorder %s24, 1
      %p47 = por %p45, %p46
      %p49 = scmp.ne.s32.totalorder %s32, %s48
      %p50 = scmp.eq.s32.totalorder %s24, 0
      %p51 = por %p49, %p50
      %s52 = ssub.s32 %s18, %s25
      %p53 = scmp.eq.s32.totalorder %s52, 0
      %s55 = sadd.s32 %s54, 1
      %s56 = scalar_select %p53, %s54, %s55
      %p59 = pneg %p53
      %p60 = scmp.eq.s32.totalorder %s18, 1
      %p61 = por %p59, %p60
      %p62 = scmp.ne.s32.totalorder %s54, %s57
      %p63 = scmp.eq.s32.totalorder %s18, 0
      %p64 = por %p62, %p63
      %p65 = scmp.ne.s32.totalorder %s54, %s57
      %p66 = scmp.eq.s32.totalorder %s23, 1
      %p67 = por %p65, %p66
      %p68 = scmp.ne.s32.totalorder %s57, %s58
      %p69 = scmp.eq.s32.totalorder %s23, 0
      %p70 = por %p68, %p69
      %p71 = scmp.ne.s32.totalorder %s57, %s58
      %p72 = scmp.eq.s32.totalorder %s24, 1
      %p73 = por %p71, %p72
      %p75 = scmp.ne.s32.totalorder %s58, %s74
      %p76 = scmp.eq.s32.totalorder %s24, 0
      %p77 = por %p75, %p76
      %s79 = sadd.s32 %s78, 1
      %p82 = scmp.eq.s32.totalorder %s18, 1
      %p83 = scmp.ne.s32.totalorder %s78, %s80
      %p84 = scmp.eq.s32.totalorder %s18, 0
      %p85 = por %p83, %p84
      %p86 = scmp.ne.s32.totalorder %s78, %s80
      %p87 = scmp.eq.s32.totalorder %s23, 1
      %p88 = por %p86, %p87
      %p89 = scmp.ne.s32.totalorder %s80, %s81
      %p90 = scmp.eq.s32.totalorder %s23, 0
      %p91 = por %p89, %p90
      %p92 = scmp.ne.s32.totalorder %s80, %s81
      %p93 = scmp.eq.s32.totalorder %s24, 1
      %p94 = por %p92, %p93
      %p96 = scmp.ne.s32.totalorder %s81, %s95
      %p97 = scmp.eq.s32.totalorder %s24, 0
      %p98 = por %p96, %p97
      %s100 = sadd.s32 %s99, 1
      %p103 = scmp.eq.s32.totalorder %s18, 1
      %p104 = scmp.ne.s32.totalorder %s99, %s101
      %p105 = scmp.eq.s32.totalorder %s18, 0
      %p106 = por %p104, %p105
      %p107 = scmp.ne.s32.totalorder %s99, %s101
      %p108 = scmp.eq.s32.totalorder %s23, 1
      %p109 = por %p107, %p108
      %p110 = scmp.ne.s32.totalorder %s101, %s102
      %p111 = scmp.eq.s32.totalorder %s23, 0
      %p112 = por %p110, %p111
      %p113 = scmp.ne.s32.totalorder %s101, %s102
      %p114 = scmp.eq.s32.totalorder %s24, 1
      %p115 = por %p113, %p114
      %p117 = scmp.ne.s32.totalorder %s102, %s116
      %p118 = scmp.eq.s32.totalorder %s24, 0
      %p119 = por %p117, %p118
      %s120 = ssub.s32 %s18, %s25
      %p121 = scmp.eq.s32.totalorder %s120, 0
      %s123 = sadd.s32 %s122, 1
      %s124 = scalar_select %p121, %s122, %s123
      %p127 = pneg %p121
      %p128 = scmp.eq.s32.totalorder %s18, 1
      %p129 = por %p127, %p128
      %p130 = scmp.ne.s32.totalorder %s122, %s125
      %p131 = scmp.eq.s32.totalorder %s18, 0
      %p132 = por %p130, %p131
      %p133 = scmp.ne.s32.totalorder %s122, %s125
      %p134 = scmp.eq.s32.totalorder %s23, 1
      %p135 = por %p133, %p134
      %p136 = scmp.ne.s32.totalorder %s125, %s126
      %p137 = scmp.eq.s32.totalorder %s23, 0
      %p138 = por %p136, %p137
      %p139 = scmp.ne.s32.totalorder %s125, %s126
      %p140 = scmp.eq.s32.totalorder %s24, 1
      %p141 = por %p139, %p140
      %p143 = scmp.ne.s32.totalorder %s126, %s142
      %p144 = scmp.eq.s32.totalorder %s24, 0
      %p145 = por %p143, %p144
      %s146 = ssub.s32 %s18, %s25
      %p147 = scmp.eq.s32.totalorder %s146, 0
      %s149 = sadd.s32 %s148, 1
      %s150 = scalar_select %p147, %s148, %s149
      %p153 = pneg %p147
      %p154 = scmp.eq.s32.totalorder %s18, 1
      %p155 = por %p153, %p154
      %p156 = scmp.ne.s32.totalorder %s148, %s151
      %p157 = scmp.eq.s32.totalorder %s18, 0
      %p158 = por %p156, %p157
      %p159 = scmp.ne.s32.totalorder %s148, %s151
      %p160 = scmp.eq.s32.totalorder %s23, 1
      %p161 = por %p159, %p160
      %p162 = scmp.ne.s32.totalorder %s151, %s152
      %p163 = scmp.eq.s32.totalorder %s23, 0
      %p164 = por %p162, %p163
      %p165 = scmp.ne.s32.totalorder %s151, %s152
      %p166 = scmp.eq.s32.totalorder %s24, 1
      %p167 = por %p165, %p166
      %p169 = scmp.ne.s32.totalorder %s152, %s168
      %p170 = scmp.eq.s32.totalorder %s24, 0
      %p171 = por %p169, %p170
      %p172 = scmp.le.s32.totalorder 1, %s18
      %p173 = scmp.lt.s32.totalorder %s18, 3
      %p174 = pnand %p172, %p173
      %p175 = pneg %p174
      // Predicated region
      $region9: #{tpu_custom_call.1} parent=5 // pred_check
        _
      $region10: #{tpu_custom_call.1} parent=5 // pred_check_branch
        %177 = sbr.rel (%p174) target = $region12
      $region11: #{tpu_custom_call.1} parent=5 // pred_region
        %s178 = ssub.s32 %s18, 1
        // Predicated region
        $region13: #{tpu_custom_call.1} parent=11 // pred_check
          %p179 = pneg %p91
        $region14: #{tpu_custom_call.1} parent=11 // pred_check_branch
          %181 = sbr.rel (%p179) target = $region16
        $region15: #{tpu_custom_call.1} parent=11 // pred_region
          _
        $region16: #{tpu_custom_call.1} parent=11 // pred_fallthru
          _
        // Predicated region
        $region17: #{tpu_custom_call.1} parent=11 // pred_check
          %p182 = pneg %p112
        $region18: #{tpu_custom_call.1} parent=11 // pred_check_branch
          %184 = sbr.rel (%p182) target = $region20
        $region19: #{tpu_custom_call.1} parent=11 // pred_region
          _
        $region20: #{tpu_custom_call.1} parent=11 // pred_fallthru
          _
      $region12: #{tpu_custom_call.1} parent=5 // pred_fallthru
        _
      %p185 = scmp.lt.s32.totalorder %s18, 2
      // Predicated region
      $region21: #{tpu_custom_call.1} parent=5 // pred_check
        %p186 = pneg %p185
      $region22: #{tpu_custom_call.1} parent=5 // pred_check_branch
        %188 = sbr.rel (%p186) target = $region24
      $region23: #{tpu_custom_call.1} parent=5 // pred_region
        // Predicated region
        $region25: #{tpu_custom_call.1} parent=23 // pred_check
          %p189 = pneg %p38
        $region26: #{tpu_custom_call.1} parent=23 // pred_check_branch
          %191 = sbr.rel (%p189) target = $region28
        $region27: #{tpu_custom_call.1} parent=23 // pred_region
          %p192 = scmp.lt.s32.totalorder %s18, 1
          %s193 = scalar_select %p192, %s18, 1
          %s194 = smul.addr %s193, 96
          %s195 = smul.addr %s194, 8
          %s196 = scalar_lea.vmem %s0, %s195
        $region28: #{tpu_custom_call.1} parent=23 // pred_fallthru
          _
        // Predicated region
        $region29: #{tpu_custom_call.1} parent=23 // pred_check
          %p197 = pneg %p64
        $region30: #{tpu_custom_call.1} parent=23 // pred_check_branch
          %199 = sbr.rel (%p197) target = $region32
        $region31: #{tpu_custom_call.1} parent=23 // pred_region
          %p200 = scmp.lt.s32.totalorder %s18, 1
          %s201 = scalar_select %p200, %s18, 1
          %s202 = smul.addr %s201, 16
          %s203 = smul.addr %s202, 8
          %s204 = scalar_lea.vmem %s1, %s203
        $region32: #{tpu_custom_call.1} parent=23 // pred_fallthru
          _
      $region24: #{tpu_custom_call.1} parent=5 // pred_fallthru
        _
      %p205 = scmp.le.s32.totalorder 1, %s18
      %p206 = scmp.lt.s32.totalorder %s18, 3
      %p207 = pnand %p205, %p206
      %p208 = pneg %p207
      // Predicated region
      $region33: #{tpu_custom_call.1} parent=5 // pred_check
        _
      $region34: #{tpu_custom_call.1} parent=5 // pred_check_branch
        %210 = sbr.rel (%p207) target = $region36
      $region35: #{tpu_custom_call.1} parent=5 // pred_region
        %s211 = ssub.s32 %s18, 1
        %p212 = scmp.lt.s32.totalorder %s23, 1
        %s213 = scalar_select %p212, %s23, 1
        %s214 = smul.addr %s213, 96
        %s215 = smul.addr %s214, 8
        %s216 = scalar_lea.vmem %s0, %s215
        %p217 = pneg %p44
        %p218 = pneg %p41
        %p219 = scmp.lt.s32.totalorder %s23, 1
        %s220 = scalar_select %p219, %s23, 1
        %s221 = smul.addr %s220, 16
        %s222 = smul.addr %s221, 8
        %s223 = scalar_lea.vmem %s1, %s222
        %p224 = pneg %p70
        %p225 = pneg %p67
        %p226 = pneg %p91
        %p227 = pneg %p88
        %p228 = pneg %p112
        %p229 = pneg %p109
        %p230 = pneg %p138
        %p231 = pneg %p135
        %s232 = sand.u32 %s125, 1
        %s233 = scalar_lea.sflag [#allocation3], %s232
        %s234 = sand.u32 %s125, 1
        %s235 = scalar_lea.vmem [#allocation2], %s234
        %p236 = pneg %p164
        %p237 = pneg %p161
        %s238 = sand.u32 %s151, 1
        %s239 = scalar_lea.sflag [#allocation5], %s238
        %s240 = sand.u32 %s151, 1
        %s241 = scalar_lea.vmem [#allocation4], %s240
        %p242 = scmp.lt.s32.totalorder %s23, 1
        %s243 = scalar_select %p242, %s23, 1
        %s244 = smul.addr %s243, 96
        %s245 = smul.addr %s244, 8
        %s246 = scalar_lea.vmem %s0, %s245
        %p247 = scmp.lt.s32.totalorder %s23, 1
        %s248 = scalar_select %p247, %s23, 1
        %s249 = smul.addr %s248, 16
        %s250 = smul.addr %s249, 8
        %s251 = scalar_lea.vmem %s1, %s250
        %v252 = vld [vmem:[%s246] sm:$0xff]
        %v253 = vld [vmem:[%s246 + $0x8] sm:$0xff]
        %v254 = vld [vmem:[%s246 + $0x10] sm:$0xff]
        %v255 = vld [vmem:[%s246 + $0x18] sm:$0xff]
        %v256 = vld [vmem:[%s246 + $0x20] sm:$0xff]
        %v257 = vld [vmem:[%s246 + $0x28] sm:$0xff]
        %v258 = vld [vmem:[%s246 + $0x30] sm:$0xff]
        %v259 = vld [vmem:[%s246 + $0x38] sm:$0xff]
        %v260 = vld [vmem:[%s246 + $0x40] sm:$0xff]
        %v261 = vld [vmem:[%s246 + $0x48] sm:$0xff]
        %v262 = vld [vmem:[%s246 + $0x50] sm:$0xff]
        %v263 = vld [vmem:[%s246 + $0x58] sm:$0xff]
        %v264 = vld [vmem:[%s246 + $0x60] sm:$0xff]
        %v265 = vld [vmem:[%s246 + $0x68] sm:$0xff]
        %v266 = vld [vmem:[%s246 + $0x70] sm:$0xff]
        %v267 = vld [vmem:[%s246 + $0x78] sm:$0xff]
        %v268 = vld [vmem:[%s246 + $0x80] sm:$0xff]
        %v269 = vld [vmem:[%s246 + $0x88] sm:$0xff]
        %v270 = vld [vmem:[%s246 + $0x90] sm:$0xff]
        %v271 = vld [vmem:[%s246 + $0x98] sm:$0xff]
        %v272 = vld [vmem:[%s246 + $0xa0] sm:$0xff]
        %v273 = vld [vmem:[%s246 + $0xa8] sm:$0xff]
        %v274 = vld [vmem:[%s246 + $0xb0] sm:$0xff]
        %v275 = vld [vmem:[%s246 + $0xb8] sm:$0xff]
        %v276 = vld [vmem:[%s246 + $0xc0] sm:$0xff]
        %v277 = vld [vmem:[%s246 + $0xc8] sm:$0xff]
        %v278 = vld [vmem:[%s246 + $0xd0] sm:$0xff]
        %v279 = vld [vmem:[%s246 + $0xd8] sm:$0xff]
        %v280 = vld [vmem:[%s246 + $0xe0] sm:$0xff]
        %v281 = vld [vmem:[%s246 + $0xe8] sm:$0xff]
        %v282 = vld [vmem:[%s246 + $0xf0] sm:$0xff]
        %v283 = vld [vmem:[%s246 + $0xf8] sm:$0xff]
        %v284 = vld [vmem:[%s246 + $0x100] sm:$0xff]
        %v285 = vld [vmem:[%s246 + $0x108] sm:$0xff]
        %v286 = vld [vmem:[%s246 + $0x110] sm:$0xff]
        %v287 = vld [vmem:[%s246 + $0x118] sm:$0xff]
        %v288 = vld [vmem:[%s246 + $0x120] sm:$0xff]
        %v289 = vld [vmem:[%s246 + $0x128] sm:$0xff]
        %v290 = vld [vmem:[%s246 + $0x130] sm:$0xff]
        %v291 = vld [vmem:[%s246 + $0x138] sm:$0xff]
        %v292 = vld [vmem:[%s246 + $0x140] sm:$0xff]
        %v293 = vld [vmem:[%s246 + $0x148] sm:$0xff]
        %v294 = vld [vmem:[%s246 + $0x150] sm:$0xff]
        %v295 = vld [vmem:[%s246 + $0x158] sm:$0xff]
        %v296 = vld [vmem:[%s246 + $0x160] sm:$0xff]
        %v297 = vld [vmem:[%s246 + $0x168] sm:$0xff]
        %v298 = vld [vmem:[%s246 + $0x170] sm:$0xff]
        %v299 = vld [vmem:[%s246 + $0x178] sm:$0xff]
        %v300 = vld [vmem:[%s246 + $0x180] sm:$0xff]
        %v301 = vld [vmem:[%s246 + $0x188] sm:$0xff]
        %v302 = vld [vmem:[%s246 + $0x190] sm:$0xff]
        %v303 = vld [vmem:[%s246 + $0x198] sm:$0xff]
        %v304 = vld [vmem:[%s246 + $0x1a0] sm:$0xff]
        %v305 = vld [vmem:[%s246 + $0x1a8] sm:$0xff]
        %v306 = vld [vmem:[%s246 + $0x1b0] sm:$0xff]
        %v307 = vld [vmem:[%s246 + $0x1b8] sm:$0xff]
        %v308 = vld [vmem:[%s246 + $0x1c0] sm:$0xff]
        %v309 = vld [vmem:[%s246 + $0x1c8] sm:$0xff]
        %v310 = vld [vmem:[%s246 + $0x1d0] sm:$0xff]
        %v311 = vld [vmem:[%s246 + $0x1d8] sm:$0xff]
        %v312 = vld [vmem:[%s246 + $0x1e0] sm:$0xff]
        %v313 = vld [vmem:[%s246 + $0x1e8] sm:$0xff]
        %v314 = vld [vmem:[%s246 + $0x1f0] sm:$0xff]
        %v315 = vld [vmem:[%s246 + $0x1f8] sm:$0xff]
        %v316 = vld [vmem:[%s246 + $0x200] sm:$0xff]
        %v317 = vld [vmem:[%s246 + $0x208] sm:$0xff]
        %v318 = vld [vmem:[%s246 + $0x210] sm:$0xff]
        %v319 = vld [vmem:[%s246 + $0x218] sm:$0xff]
        %v320 = vld [vmem:[%s246 + $0x220] sm:$0xff]
        %v321 = vld [vmem:[%s246 + $0x228] sm:$0xff]
        %v322 = vld [vmem:[%s246 + $0x230] sm:$0xff]
        %v323 = vld [vmem:[%s246 + $0x238] sm:$0xff]
        %v324 = vld [vmem:[%s246 + $0x240] sm:$0xff]
        %v325 = vld [vmem:[%s246 + $0x248] sm:$0xff]
        %v326 = vld [vmem:[%s246 + $0x250] sm:$0xff]
        %v327 = vld [vmem:[%s246 + $0x258] sm:$0xff]
        %v328 = vld [vmem:[%s246 + $0x260] sm:$0xff]
        %v329 = vld [vmem:[%s246 + $0x268] sm:$0xff]
        %v330 = vld [vmem:[%s246 + $0x270] sm:$0xff]
        %v331 = vld [vmem:[%s246 + $0x278] sm:$0xff]
        %v332 = vld [vmem:[%s246 + $0x280] sm:$0xff]
        %v333 = vld [vmem:[%s246 + $0x288] sm:$0xff]
        %v334 = vld [vmem:[%s246 + $0x290] sm:$0xff]
        %v335 = vld [vmem:[%s246 + $0x298] sm:$0xff]
        %v336 = vld [vmem:[%s246 + $0x2a0] sm:$0xff]
        %v337 = vld [vmem:[%s246 + $0x2a8] sm:$0xff]
        %v338 = vld [vmem:[%s246 + $0x2b0] sm:$0xff]
        %v339 = vld [vmem:[%s246 + $0x2b8] sm:$0xff]
        %v340 = vld [vmem:[%s246 + $0x2c0] sm:$0xff]
        %v341 = vld [vmem:[%s246 + $0x2c8] sm:$0xff]
        %v342 = vld [vmem:[%s246 + $0x2d0] sm:$0xff]
        %v343 = vld [vmem:[%s246 + $0x2d8] sm:$0xff]
        %v344 = vld [vmem:[%s246 + $0x2e0] sm:$0xff]
        %v345 = vld [vmem:[%s246 + $0x2e8] sm:$0xff]
        %v346 = vld [vmem:[%s246 + $0x2f0] sm:$0xff]
        %v347 = vld [vmem:[%s246 + $0x2f8] sm:$0xff]
        %v348 = vld [vmem:[%s251] sm:$0xff]
        %v349 = vld [vmem:[%s251 + $0x8] sm:$0xff]
        %v350 = vld [vmem:[%s251 + $0x10] sm:$0xff]
        %v351 = vld [vmem:[%s251 + $0x18] sm:$0xff]
        %v352 = vld [vmem:[%s251 + $0x20] sm:$0xff]
        %v353 = vld [vmem:[%s251 + $0x28] sm:$0xff]
        %v354 = vld [vmem:[%s251 + $0x30] sm:$0xff]
        %v355 = vld [vmem:[%s251 + $0x38] sm:$0xff]
        %v356 = vld [vmem:[%s251 + $0x40] sm:$0xff]
        %v357 = vld [vmem:[%s251 + $0x48] sm:$0xff]
        %v358 = vld [vmem:[%s251 + $0x50] sm:$0xff]
        %v359 = vld [vmem:[%s251 + $0x58] sm:$0xff]
        %v360 = vld [vmem:[%s251 + $0x60] sm:$0xff]
        %v361 = vld [vmem:[%s251 + $0x68] sm:$0xff]
        %v362 = vld [vmem:[%s251 + $0x70] sm:$0xff]
        %v363 = vld [vmem:[%s251 + $0x78] sm:$0xff]
        %v364 = vld [vmem:[%s3] sm:$0xff]
        %v365 = vld [vmem:[%s3 + $0x8] sm:$0xff]
        %v366 = vld [vmem:[%s3 + $0x10] sm:$0xff]
        %v367 = vld [vmem:[%s3 + $0x18] sm:$0xff]
        %v368 = vld [vmem:[%s3 + $0x20] sm:$0xff]
        %v369 = vld [vmem:[%s3 + $0x28] sm:$0xff]
        %v370 = vld [vmem:[%s3 + $0x30] sm:$0xff]
        %v371 = vld [vmem:[%s3 + $0x38] sm:$0xff]
        %v372 = vld [vmem:[%s3 + $0x40] sm:$0xff]
        %v373 = vld [vmem:[%s3 + $0x48] sm:$0xff]
        %v374 = vld [vmem:[%s3 + $0x50] sm:$0xff]
        %v375 = vld [vmem:[%s3 + $0x58] sm:$0xff]
        %v376 = vld [vmem:[%s3 + $0x60] sm:$0xff]
        %v377 = vld [vmem:[%s3 + $0x68] sm:$0xff]
        %v378 = vld [vmem:[%s3 + $0x70] sm:$0xff]
        %v379 = vld [vmem:[%s3 + $0x78] sm:$0xff]
        %v380 = vld [vmem:[%s3 + $0x80] sm:$0xff]
        %v381 = vld [vmem:[%s3 + $0x88] sm:$0xff]
        %v382 = vld [vmem:[%s3 + $0x90] sm:$0xff]
        %v383 = vld [vmem:[%s3 + $0x98] sm:$0xff]
        %v384 = vld [vmem:[%s3 + $0xa0] sm:$0xff]
        %v385 = vld [vmem:[%s3 + $0xa8] sm:$0xff]
        %v386 = vld [vmem:[%s3 + $0xb0] sm:$0xff]
        %v387 = vld [vmem:[%s3 + $0xb8] sm:$0xff]
        %v388 = vld [vmem:[%s3 + $0xc0] sm:$0xff]
        %v389 = vld [vmem:[%s3 + $0xc8] sm:$0xff]
        %v390 = vld [vmem:[%s3 + $0xd0] sm:$0xff]
        %v391 = vld [vmem:[%s3 + $0xd8] sm:$0xff]
        %v392 = vld [vmem:[%s3 + $0xe0] sm:$0xff]
        %v393 = vld [vmem:[%s3 + $0xe8] sm:$0xff]
        %v394 = vld [vmem:[%s3 + $0xf0] sm:$0xff]
        %v395 = vld [vmem:[%s3 + $0xf8] sm:$0xff]
        %v396 = vld [vmem:[%s3 + $0x100] sm:$0x1]
        %v397 = vld [vmem:[%s2] sm:$0x1]
        %v398 = vld [vmem:[%s2 + $0x1] sm:$0x1]
        %v399 = vld [vmem:[%s2 + $0x2] sm:$0x1]
        %v400 = vld [vmem:[%s2 + $0x3] sm:$0x1]
        %v401 = vld [vmem:[%s2 + $0x4] sm:$0x1]
        %v402 = vld [vmem:[%s2 + $0x5] sm:$0x1]
        %vm403 = vcmask 7168
        %v404 = vsel %vm403, %v348, 0.0
        %v405 = vsel %vm403, %v349, 0.0
        %v406 = vadd.f32 %v404, %v405
        %v407 = vsel %vm403, %v350, 0.0
        %v408 = vadd.f32 %v406, %v407
        %v409 = vsel %vm403, %v351, 0.0
        %v410 = vadd.f32 %v408, %v409
        %v411 = vsel %vm403, %v352, 0.0
        %v412 = vadd.f32 %v410, %v411
        %v413 = vsel %vm403, %v353, 0.0
        %v414 = vadd.f32 %v412, %v413
        %v415 = vsel %vm403, %v354, 0.0
        %v416 = vadd.f32 %v414, %v415
        %v417 = vsel %vm403, %v355, 0.0
        %v418 = vadd.f32 %v416, %v417
        %v419 = vsel %vm403, %v356, 0.0
        %v420 = vadd.f32 %v418, %v419
        %v421 = vsel %vm403, %v357, 0.0
        %v422 = vadd.f32 %v420, %v421
        %v423 = vsel %vm403, %v358, 0.0
        %v424 = vadd.f32 %v422, %v423
        %v425 = vsel %vm403, %v359, 0.0
        %v426 = vadd.f32 %v424, %v425
        %v427 = vsel %vm403, %v360, 0.0
        %v428 = vadd.f32 %v426, %v427
        %v429 = vsel %vm403, %v361, 0.0
        %v430 = vadd.f32 %v428, %v429
        %v431 = vsel %vm403, %v362, 0.0
        %v432 = vadd.f32 %v430, %v431
        %v433 = vsel %vm403, %v363, 0.0
        %v434 = vadd.f32 %v432, %v433
        %v435 = vrot.slane %v434, 4
        %v436 = vadd.f32 %v434, %v435
        %v437 = vrot.slane %v436, 2
        %v438 = vadd.f32 %v436, %v437
        %v439 = vrot.slane %v438, 1
        %v440 = vadd.f32 %v438, %v439
        %v442 = vsel %vm403, %v254, 0
        %v445 = vsel %vm403, %v257, 0
        %v448 = vsel %vm403, %v260, 0
        %v451 = vsel %vm403, %v263, 0
        %v454 = vsel %vm403, %v266, 0
        %v457 = vsel %vm403, %v269, 0
        %v460 = vsel %vm403, %v272, 0
        %v463 = vsel %vm403, %v275, 0
        %v466 = vsel %vm403, %v278, 0
        %v469 = vsel %vm403, %v281, 0
        %v472 = vsel %vm403, %v284, 0
        %v475 = vsel %vm403, %v287, 0
        %v478 = vsel %vm403, %v290, 0
        %v481 = vsel %vm403, %v293, 0
        %v484 = vsel %vm403, %v296, 0
        %v487 = vsel %vm403, %v299, 0
        %v490 = vsel %vm403, %v302, 0
        %v493 = vsel %vm403, %v305, 0
        %v496 = vsel %vm403, %v308, 0
        %v499 = vsel %vm403, %v311, 0
        %v502 = vsel %vm403, %v314, 0
        %v505 = vsel %vm403, %v317, 0
        %v508 = vsel %vm403, %v320, 0
        %v511 = vsel %vm403, %v323, 0
        %v514 = vsel %vm403, %v326, 0
        %v517 = vsel %vm403, %v329, 0
        %v520 = vsel %vm403, %v332, 0
        %v523 = vsel %vm403, %v335, 0
        %v526 = vsel %vm403, %v338, 0
        %v529 = vsel %vm403, %v341, 0
        %v532 = vsel %vm403, %v344, 0
        %v535 = vsel %vm403, %v347, 0
        %vm537 = vcmask 1040384
        %v539 = vsel %vm537, %v396, 0
        %541 = vmatpush.msra.mxu0 %v379
        %542 = vmatpush.msra.mxu0 %v378
        %543 = vmatpush.msra.mxu0 %v377
        %544 = vmatpush.msra.mxu0 %v376
        %545 = vmatpush.msra.mxu0 %v375
        %546 = vmatpush.msra.mxu0 %v374
        %547 = vmatpush.msra.mxu0 %v373
        %548 = vmatpush.msra.mxu0 %v372
        %549 = vmatpush.msra.mxu0 %v371
        %550 = vmatpush.msra.mxu0 %v370
        %551 = vmatpush.msra.mxu0 %v369
        %552 = vmatpush.msra.mxu0 %v368
        %553 = vmatpush.msra.mxu0 %v367
        %554 = vmatpush.msra.mxu0 %v366
        %555 = vmatpush.msra.mxu0 %v365
        %556 = vmatpush.msra.mxu0 %v364
        %557 = vmatmul.f32.gmra.mxu0 %v252
        %v558 = vpop.f32.mrf.mxu0
        %v559 = vadd.f32 0.0, %v558
        %560 = vmatmul.f32.gmra.mxu0 %v255
        %v561 = vpop.f32.mrf.mxu0
        %v562 = vadd.f32 0.0, %v561
        %563 = vmatmul.f32.gmra.mxu0 %v258
        %v564 = vpop.f32.mrf.mxu0
        %v565 = vadd.f32 0.0, %v564
        %566 = vmatmul.f32.gmra.mxu0 %v261
        %v567 = vpop.f32.mrf.mxu0
        %v568 = vadd.f32 0.0, %v567
        %569 = vmatmul.f32.gmra.mxu0 %v264
        %v570 = vpop.f32.mrf.mxu0
        %v571 = vadd.f32 0.0, %v570
        %572 = vmatmul.f32.gmra.mxu0 %v267
        %v573 = vpop.f32.mrf.mxu0
        %v574 = vadd.f32 0.0, %v573
        %575 = vmatmul.f32.gmra.mxu0 %v270
        %v576 = vpop.f32.mrf.mxu0
        %v577 = vadd.f32 0.0, %v576
        %578 = vmatmul.f32.gmra.mxu0 %v273
        %v579 = vpop.f32.mrf.mxu0
        %v580 = vadd.f32 0.0, %v579
        %581 = vmatmul.f32.gmra.mxu0 %v276
        %v582 = vpop.f32.mrf.mxu0
        %v583 = vadd.f32 0.0, %v582
        %584 = vmatmul.f32.gmra.mxu0 %v279
        %v585 = vpop.f32.mrf.mxu0
        %v586 = vadd.f32 0.0, %v585
        %587 = vmatmul.f32.gmra.mxu0 %v282
        %v588 = vpop.f32.mrf.mxu0
        %v589 = vadd.f32 0.0, %v588
        %590 = vmatmul.f32.gmra.mxu0 %v285
        %v591 = vpop.f32.mrf.mxu0
        %v592 = vadd.f32 0.0, %v591
        %593 = vmatmul.f32.gmra.mxu0 %v288
        %v594 = vpop.f32.mrf.mxu0
        %v595 = vadd.f32 0.0, %v594
        %596 = vmatmul.f32.gmra.mxu0 %v291
        %v597 = vpop.f32.mrf.mxu0
        %v598 = vadd.f32 0.0, %v597
        %599 = vmatmul.f32.gmra.mxu0 %v294
        %v600 = vpop.f32.mrf.mxu0
        %v601 = vadd.f32 0.0, %v600
        %602 = vmatmul.f32.gmra.mxu0 %v297
        %v603 = vpop.f32.mrf.mxu0
        %v604 = vadd.f32 0.0, %v603
        %605 = vmatmul.f32.gmra.mxu0 %v300
        %v606 = vpop.f32.mrf.mxu0
        %v607 = vadd.f32 0.0, %v606
        %608 = vmatmul.f32.gmra.mxu0 %v303
        %v609 = vpop.f32.mrf.mxu0
        %v610 = vadd.f32 0.0, %v609
        %611 = vmatmul.f32.gmra.mxu0 %v306
        %v612 = vpop.f32.mrf.mxu0
        %v613 = vadd.f32 0.0, %v612
        %614 = vmatmul.f32.gmra.mxu0 %v309
        %v615 = vpop.f32.mrf.mxu0
        %v616 = vadd.f32 0.0, %v615
        %617 = vmatmul.f32.gmra.mxu0 %v312
        %v618 = vpop.f32.mrf.mxu0
        %v619 = vadd.f32 0.0, %v618
        %620 = vmatmul.f32.gmra.mxu0 %v315
        %v621 = vpop.f32.mrf.mxu0
        %v622 = vadd.f32 0.0, %v621
        %623 = vmatmul.f32.gmra.mxu0 %v318
        %v624 = vpop.f32.mrf.mxu0
        %v625 = vadd.f32 0.0, %v624
        %626 = vmatmul.f32.gmra.mxu0 %v321
        %v627 = vpop.f32.mrf.mxu0
        %v628 = vadd.f32 0.0, %v627
        %629 = vmatmul.f32.gmra.mxu0 %v324
        %v630 = vpop.f32.mrf.mxu0
        %v631 = vadd.f32 0.0, %v630
        %632 = vmatmul.f32.gmra.mxu0 %v327
        %v633 = vpop.f32.mrf.mxu0
        %v634 = vadd.f32 0.0, %v633
        %635 = vmatmul.f32.gmra.mxu0 %v330
        %v636 = vpop.f32.mrf.mxu0
        %v637 = vadd.f32 0.0, %v636
        %638 = vmatmul.f32.gmra.mxu0 %v333
        %v639 = vpop.f32.mrf.mxu0
        %v640 = vadd.f32 0.0, %v639
        %641 = vmatmul.f32.gmra.mxu0 %v336
        %v642 = vpop.f32.mrf.mxu0
        %v643 = vadd.f32 0.0, %v642
        %644 = vmatmul.f32.gmra.mxu0 %v339
        %v645 = vpop.f32.mrf.mxu0
        %v646 = vadd.f32 0.0, %v645
        %647 = vmatmul.f32.gmra.mxu0 %v342
        %v648 = vpop.f32.mrf.mxu0
        %v649 = vadd.f32 0.0, %v648
        %650 = vmatmul.f32.gmra.mxu0 %v345
        %v651 = vpop.f32.mrf.mxu0
        %v652 = vadd.f32 0.0, %v651
        %653 = vdwg.mxu0
        %654 = vmatpush.msra.mxu0 %v395
        %655 = vmatpush.msra.mxu0 %v394
        %656 = vmatpush.msra.mxu0 %v393
        %657 = vmatpush.msra.mxu0 %v392
        %658 = vmatpush.msra.mxu0 %v391
        %659 = vmatpush.msra.mxu0 %v390
        %660 = vmatpush.msra.mxu0 %v389
        %661 = vmatpush.msra.mxu0 %v388
        %662 = vmatpush.msra.mxu0 %v387
        %663 = vmatpush.msra.mxu0 %v386
        %664 = vmatpush.msra.mxu0 %v385
        %665 = vmatpush.msra.mxu0 %v384
        %666 = vmatpush.msra.mxu0 %v383
        %667 = vmatpush.msra.mxu0 %v382
        %668 = vmatpush.msra.mxu0 %v381
        %669 = vmatpush.msra.mxu0 %v380
        %670 = vmatmul.f32.gmra.mxu0 %v253
        %v671 = vpop.f32.mrf.mxu0
        %v672 = vadd.f32 %v559, %v671
        %673 = vmatmul.f32.gmra.mxu0 %v256
        %v674 = vpop.f32.mrf.mxu0
        %v675 = vadd.f32 %v562, %v674
        %676 = vmatmul.f32.gmra.mxu0 %v259
        %v677 = vpop.f32.mrf.mxu0
        %v678 = vadd.f32 %v565, %v677
        %679 = vmatmul.f32.gmra.mxu0 %v262
        %v680 = vpop.f32.mrf.mxu0
        %v681 = vadd.f32 %v568, %v680
        %682 = vmatmul.f32.gmra.mxu0 %v265
        %v683 = vpop.f32.mrf.mxu0
        %v684 = vadd.f32 %v571, %v683
        %685 = vmatmul.f32.gmra.mxu0 %v268
        %v686 = vpop.f32.mrf.mxu0
        %v687 = vadd.f32 %v574, %v686
        %688 = vmatmul.f32.gmra.mxu0 %v271
        %v689 = vpop.f32.mrf.mxu0
        %v690 = vadd.f32 %v577, %v689
        %691 = vmatmul.f32.gmra.mxu0 %v274
        %v692 = vpop.f32.mrf.mxu0
        %v693 = vadd.f32 %v580, %v692
        %694 = vmatmul.f32.gmra.mxu0 %v277
        %v695 = vpop.f32.mrf.mxu0
        %v696 = vadd.f32 %v583, %v695
        %697 = vmatmul.f32.gmra.mxu0 %v280
        %v698 = vpop.f32.mrf.mxu0
        %v699 = vadd.f32 %v586, %v698
        %700 = vmatmul.f32.gmra.mxu0 %v283
        %v701 = vpop.f32.mrf.mxu0
        %v702 = vadd.f32 %v589, %v701
        %703 = vmatmul.f32.gmra.mxu0 %v286
        %v704 = vpop.f32.mrf.mxu0
        %v705 = vadd.f32 %v592, %v704
        %706 = vmatmul.f32.gmra.mxu0 %v289
        %v707 = vpop.f32.mrf.mxu0
        %v708 = vadd.f32 %v595, %v707
        %709 = vmatmul.f32.gmra.mxu0 %v292
        %v710 = vpop.f32.mrf.mxu0
        %v711 = vadd.f32 %v598, %v710
        %712 = vmatmul.f32.gmra.mxu0 %v295
        %v713 = vpop.f32.mrf.mxu0
        %v714 = vadd.f32 %v601, %v713
        %715 = vmatmul.f32.gmra.mxu0 %v298
        %v716 = vpop.f32.mrf.mxu0
        %v717 = vadd.f32 %v604, %v716
        %718 = vmatmul.f32.gmra.mxu0 %v301
        %v719 = vpop.f32.mrf.mxu0
        %v720 = vadd.f32 %v607, %v719
        %721 = vmatmul.f32.gmra.mxu0 %v304
        %v722 = vpop.f32.mrf.mxu0
        %v723 = vadd.f32 %v610, %v722
        %724 = vmatmul.f32.gmra.mxu0 %v307
        %v725 = vpop.f32.mrf.mxu0
        %v726 = vadd.f32 %v613, %v725
        %727 = vmatmul.f32.gmra.mxu0 %v310
        %v728 = vpop.f32.mrf.mxu0
        %v729 = vadd.f32 %v616, %v728
        %730 = vmatmul.f32.gmra.mxu0 %v313
        %v731 = vpop.f32.mrf.mxu0
        %v732 = vadd.f32 %v619, %v731
        %733 = vmatmul.f32.gmra.mxu0 %v316
        %v734 = vpop.f32.mrf.mxu0
        %v735 = vadd.f32 %v622, %v734
        %736 = vmatmul.f32.gmra.mxu0 %v319
        %v737 = vpop.f32.mrf.mxu0
        %v738 = vadd.f32 %v625, %v737
        %739 = vmatmul.f32.gmra.mxu0 %v322
        %v740 = vpop.f32.mrf.mxu0
        %v741 = vadd.f32 %v628, %v740
        %742 = vmatmul.f32.gmra.mxu0 %v325
        %v743 = vpop.f32.mrf.mxu0
        %v744 = vadd.f32 %v631, %v743
        %745 = vmatmul.f32.gmra.mxu0 %v328
        %v746 = vpop.f32.mrf.mxu0
        %v747 = vadd.f32 %v634, %v746
        %748 = vmatmul.f32.gmra.mxu0 %v331
        %v749 = vpop.f32.mrf.mxu0
        %v750 = vadd.f32 %v637, %v749
        %751 = vmatmul.f32.gmra.mxu0 %v334
        %v752 = vpop.f32.mrf.mxu0
        %v753 = vadd.f32 %v640, %v752
        %754 = vmatmul.f32.gmra.mxu0 %v337
        %v755 = vpop.f32.mrf.mxu0
        %v756 = vadd.f32 %v643, %v755
        %757 = vmatmul.f32.gmra.mxu0 %v340
        %v758 = vpop.f32.mrf.mxu0
        %v759 = vadd.f32 %v646, %v758
        %760 = vmatmul.f32.gmra.mxu0 %v343
        %v761 = vpop.f32.mrf.mxu0
        %v762 = vadd.f32 %v649, %v761
        %763 = vmatmul.f32.gmra.mxu0 %v346
        %v764 = vpop.f32.mrf.mxu0
        %v765 = vadd.f32 %v652, %v764
        %766 = vdwg.mxu0
        %767 = vmatpush.msra.mxu0 0.0
        %768 = vmatpush.msra.mxu0 0.0
        %769 = vmatpush.msra.mxu0 0.0
        %770 = vmatpush.msra.mxu0 0.0
        %771 = vmatpush.msra.mxu0 0.0
        %772 = vmatpush.msra.mxu0 0.0
        %773 = vmatpush.msra.mxu0 0.0
        %774 = vmatpush.msra.mxu0 0.0
        %775 = vmatpush.msra.mxu0 0.0
        %776 = vmatpush.msra.mxu0 0.0
        %777 = vmatpush.msra.mxu0 0.0
        %778 = vmatpush.msra.mxu0 0.0
        %779 = vmatpush.msra.mxu0 0.0
        %780 = vmatpush.msra.mxu0 0.0
        %781 = vmatpush.msra.mxu0 0.0
        %782 = vmatpush.msra.mxu0 %v539
        %783 = vmatmul.f32.gmra.mxu0 %v442
        %v784 = vpop.f32.mrf.mxu0
        %v785 = vadd.f32 %v672, %v784
        %786 = vmatmul.f32.gmra.mxu0 %v445
        %v787 = vpop.f32.mrf.mxu0
        %v788 = vadd.f32 %v675, %v787
        %789 = vmatmul.f32.gmra.mxu0 %v448
        %v790 = vpop.f32.mrf.mxu0
        %v791 = vadd.f32 %v678, %v790
        %792 = vmatmul.f32.gmra.mxu0 %v451
        %v793 = vpop.f32.mrf.mxu0
        %v794 = vadd.f32 %v681, %v793
        %795 = vmatmul.f32.gmra.mxu0 %v454
        %v796 = vpop.f32.mrf.mxu0
        %v797 = vadd.f32 %v684, %v796
        %798 = vmatmul.f32.gmra.mxu0 %v457
        %v799 = vpop.f32.mrf.mxu0
        %v800 = vadd.f32 %v687, %v799
        %801 = vmatmul.f32.gmra.mxu0 %v460
        %v802 = vpop.f32.mrf.mxu0
        %v803 = vadd.f32 %v690, %v802
        %804 = vmatmul.f32.gmra.mxu0 %v463
        %v805 = vpop.f32.mrf.mxu0
        %v806 = vadd.f32 %v693, %v805
        %807 = vmatmul.f32.gmra.mxu0 %v466
        %v808 = vpop.f32.mrf.mxu0
        %v809 = vadd.f32 %v696, %v808
        %810 = vmatmul.f32.gmra.mxu0 %v469
        %v811 = vpop.f32.mrf.mxu0
        %v812 = vadd.f32 %v699, %v811
        %813 = vmatmul.f32.gmra.mxu0 %v472
        %v814 = vpop.f32.mrf.mxu0
        %v815 = vadd.f32 %v702, %v814
        %816 = vmatmul.f32.gmra.mxu0 %v475
        %v817 = vpop.f32.mrf.mxu0
        %v818 = vadd.f32 %v705, %v817
        %819 = vmatmul.f32.gmra.mxu0 %v478
        %v820 = vpop.f32.mrf.mxu0
        %v821 = vadd.f32 %v708, %v820
        %822 = vmatmul.f32.gmra.mxu0 %v481
        %v823 = vpop.f32.mrf.mxu0
        %v824 = vadd.f32 %v711, %v823
        %825 = vmatmul.f32.gmra.mxu0 %v484
        %v826 = vpop.f32.mrf.mxu0
        %v827 = vadd.f32 %v714, %v826
        %828 = vmatmul.f32.gmra.mxu0 %v487
        %v829 = vpop.f32.mrf.mxu0
        %v830 = vadd.f32 %v717, %v829
        %831 = vmatmul.f32.gmra.mxu0 %v490
        %v832 = vpop.f32.mrf.mxu0
        %v833 = vadd.f32 %v720, %v832
        %834 = vmatmul.f32.gmra.mxu0 %v493
        %v835 = vpop.f32.mrf.mxu0
        %v836 = vadd.f32 %v723, %v835
        %837 = vmatmul.f32.gmra.mxu0 %v496
        %v838 = vpop.f32.mrf.mxu0
        %v839 = vadd.f32 %v726, %v838
        %840 = vmatmul.f32.gmra.mxu0 %v499
        %v841 = vpop.f32.mrf.mxu0
        %v842 = vadd.f32 %v729, %v841
        %843 = vmatmul.f32.gmra.mxu0 %v502
        %v844 = vpop.f32.mrf.mxu0
        %v845 = vadd.f32 %v732, %v844
        %846 = vmatmul.f32.gmra.mxu0 %v505
        %v847 = vpop.f32.mrf.mxu0
        %v848 = vadd.f32 %v735, %v847
        %849 = vmatmul.f32.gmra.mxu0 %v508
        %v850 = vpop.f32.mrf.mxu0
        %v851 = vadd.f32 %v738, %v850
        %852 = vmatmul.f32.gmra.mxu0 %v511
        %v853 = vpop.f32.mrf.mxu0
        %v854 = vadd.f32 %v741, %v853
        %855 = vmatmul.f32.gmra.mxu0 %v514
        %v856 = vpop.f32.mrf.mxu0
        %v857 = vadd.f32 %v744, %v856
        %858 = vmatmul.f32.gmra.mxu0 %v517
        %v859 = vpop.f32.mrf.mxu0
        %v860 = vadd.f32 %v747, %v859
        %861 = vmatmul.f32.gmra.mxu0 %v520
        %v862 = vpop.f32.mrf.mxu0
        %v863 = vadd.f32 %v750, %v862
        %864 = vmatmul.f32.gmra.mxu0 %v523
        %v865 = vpop.f32.mrf.mxu0
        %v866 = vadd.f32 %v753, %v865
        %867 = vmatmul.f32.gmra.mxu0 %v526
        %v868 = vpop.f32.mrf.mxu0
        %v869 = vadd.f32 %v756, %v868
        %870 = vmatmul.f32.gmra.mxu0 %v529
        %v871 = vpop.f32.mrf.mxu0
        %v872 = vadd.f32 %v759, %v871
        %873 = vmatmul.f32.gmra.mxu0 %v532
        %v874 = vpop.f32.mrf.mxu0
        %v875 = vadd.f32 %v762, %v874
        %876 = vmatmul.f32.gmra.mxu0 %v535
        %v877 = vpop.f32.mrf.mxu0
        %v878 = vadd.f32 %v765, %v877
        %879 = vdwg.mxu0
        %896 = vrot.lane.b32.xlu0 %v348, 49
        %v897 = vpop.permute.xlu0 %896
        %898 = vrot.lane.b32.xlu0 %v349, 49
        %v899 = vpop.permute.xlu0 %898
        %900 = vrot.lane.b32.xlu0 %v350, 49
        %v901 = vpop.permute.xlu0 %900
        %902 = vrot.lane.b32.xlu0 %v351, 49
        %v903 = vpop.permute.xlu0 %902
        %904 = vrot.lane.b32.xlu0 %v352, 49
        %v905 = vpop.permute.xlu0 %904
        %906 = vrot.lane.b32.xlu0 %v353, 49
        %v907 = vpop.permute.xlu0 %906
        %908 = vrot.lane.b32.xlu0 %v354, 49
        %v909 = vpop.permute.xlu0 %908
        %910 = vrot.lane.b32.xlu0 %v355, 49
        %v911 = vpop.permute.xlu0 %910
        %912 = vrot.lane.b32.xlu0 %v356, 49
        %v913 = vpop.permute.xlu0 %912
        %914 = vrot.lane.b32.xlu0 %v357, 49
        %v915 = vpop.permute.xlu0 %914
        %916 = vrot.lane.b32.xlu0 %v358, 49
        %v917 = vpop.permute.xlu0 %916
        %918 = vrot.lane.b32.xlu0 %v359, 49
        %v919 = vpop.permute.xlu0 %918
        %920 = vrot.lane.b32.xlu0 %v360, 49
        %v921 = vpop.permute.xlu0 %920
        %922 = vrot.lane.b32.xlu0 %v361, 49
        %v923 = vpop.permute.xlu0 %922
        %924 = vrot.lane.b32.xlu0 %v362, 49
        %v925 = vpop.permute.xlu0 %924
        %926 = vrot.lane.b32.xlu0 %v363, 49
        %v927 = vpop.permute.xlu0 %926
        %v944 = vmul.f32 %v785, %v897
        %v945 = vmul.f32 %v788, %v899
        %v946 = vmul.f32 %v791, %v901
        %v947 = vmul.f32 %v794, %v903
        %v948 = vmul.f32 %v797, %v905
        %v949 = vmul.f32 %v800, %v907
        %v950 = vmul.f32 %v803, %v909
        %v951 = vmul.f32 %v806, %v911
        %v952 = vmul.f32 %v809, %v913
        %v953 = vmul.f32 %v812, %v915
        %v954 = vmul.f32 %v815, %v917
        %v955 = vmul.f32 %v818, %v919
        %v956 = vmul.f32 %v821, %v921
        %v957 = vmul.f32 %v824, %v923
        %v958 = vmul.f32 %v827, %v925
        %v959 = vmul.f32 %v830, %v927
        %vm960 = vcmask 408968
        %v961 = vsel %vm960, %v944, 0.0
        %v962 = vsel %vm960, %v945, 0.0
        %v963 = vadd.f32 %v961, %v962
        %v964 = vsel %vm960, %v946, 0.0
        %v965 = vadd.f32 %v963, %v964
        %v966 = vsel %vm960, %v947, 0.0
        %v967 = vadd.f32 %v965, %v966
        %v968 = vsel %vm960, %v948, 0.0
        %v969 = vadd.f32 %v967, %v968
        %v970 = vsel %vm960, %v949, 0.0
        %v971 = vadd.f32 %v969, %v970
        %v972 = vsel %vm960, %v950, 0.0
        %v973 = vadd.f32 %v971, %v972
        %v974 = vsel %vm960, %v951, 0.0
        %v975 = vadd.f32 %v973, %v974
        %v976 = vsel %vm960, %v952, 0.0
        %v977 = vadd.f32 %v975, %v976
        %v978 = vsel %vm960, %v953, 0.0
        %v979 = vadd.f32 %v977, %v978
        %v980 = vsel %vm960, %v954, 0.0
        %v981 = vadd.f32 %v979, %v980
        %v982 = vsel %vm960, %v955, 0.0
        %v983 = vadd.f32 %v981, %v982
        %v984 = vsel %vm960, %v956, 0.0
        %v985 = vadd.f32 %v983, %v984
        %v986 = vsel %vm960, %v957, 0.0
        %v987 = vadd.f32 %v985, %v986
        %v988 = vsel %vm960, %v958, 0.0
        %v989 = vadd.f32 %v987, %v988
        %v990 = vsel %vm960, %v959, 0.0
        %v991 = vadd.f32 %v989, %v990
        %v992 = vrot.slane %v991, 4
        %v993 = vadd.f32 %v991, %v992
        %v994 = vrot.slane %v993, 2
        %v995 = vadd.f32 %v993, %v994
        %v996 = vrot.slane %v995, 1
        %v997 = vadd.f32 %v995, %v996
        %v998 = vmul.f32 %v833, %v897
        %v999 = vmul.f32 %v836, %v899
        %v1000 = vmul.f32 %v839, %v901
        %v1001 = vmul.f32 %v842, %v903
        %v1002 = vmul.f32 %v845, %v905
        %v1003 = vmul.f32 %v848, %v907
        %v1004 = vmul.f32 %v851, %v909
        %v1005 = vmul.f32 %v854, %v911
        %v1006 = vmul.f32 %v857, %v913
        %v1007 = vmul.f32 %v860, %v915
        %v1008 = vmul.f32 %v863, %v917
        %v1009 = vmul.f32 %v866, %v919
        %v1010 = vmul.f32 %v869, %v921
        %v1011 = vmul.f32 %v872, %v923
        %v1012 = vmul.f32 %v875, %v925
        %v1013 = vmul.f32 %v878, %v927
        %v1014 = vsel %vm960, %v998, 0.0
        %v1015 = vsel %vm960, %v999, 0.0
        %v1016 = vadd.f32 %v1014, %v1015
        %v1017 = vsel %vm960, %v1000, 0.0
        %v1018 = vadd.f32 %v1016, %v1017
        %v1019 = vsel %vm960, %v1001, 0.0
        %v1020 = vadd.f32 %v1018, %v1019
        %v1021 = vsel %vm960, %v1002, 0.0
        %v1022 = vadd.f32 %v1020, %v1021
        %v1023 = vsel %vm960, %v1003, 0.0
        %v1024 = vadd.f32 %v1022, %v1023
        %v1025 = vsel %vm960, %v1004, 0.0
        %v1026 = vadd.f32 %v1024, %v1025
        %v1027 = vsel %vm960, %v1005, 0.0
        %v1028 = vadd.f32 %v1026, %v1027
        %v1029 = vsel %vm960, %v1006, 0.0
        %v1030 = vadd.f32 %v1028, %v1029
        %v1031 = vsel %vm960, %v1007, 0.0
        %v1032 = vadd.f32 %v1030, %v1031
        %v1033 = vsel %vm960, %v1008, 0.0
        %v1034 = vadd.f32 %v1032, %v1033
        %v1035 = vsel %vm960, %v1009, 0.0
        %v1036 = vadd.f32 %v1034, %v1035
        %v1037 = vsel %vm960, %v1010, 0.0
        %v1038 = vadd.f32 %v1036, %v1037
        %v1039 = vsel %vm960, %v1011, 0.0
        %v1040 = vadd.f32 %v1038, %v1039
        %v1041 = vsel %vm960, %v1012, 0.0
        %v1042 = vadd.f32 %v1040, %v1041
        %v1043 = vsel %vm960, %v1013, 0.0
        %v1044 = vadd.f32 %v1042, %v1043
        %v1045 = vrot.slane %v1044, 4
        %v1046 = vadd.f32 %v1044, %v1045
        %v1047 = vrot.slane %v1046, 2
        %v1048 = vadd.f32 %v1046, %v1047
        %v1049 = vrot.slane %v1048, 1
        %v1050 = vadd.f32 %v1048, %v1049
        %v1051 = vmul.f32 %v440, 2.5699999e+09
        %1053 = vrot.lane.b32.xlu0 %v997, 79
        %v1054 = vpop.permute.xlu0 %1053
        %v1056 = vrcp.pop %v1054
        %v1057 = vmul.f32 %v1054, %v1056
        %v1058 = vsub.f32 1.0, %v1057
        %v1059 = vmul.f32 %v1056, %v1058
        %v1060 = vadd.f32 %v1056, %v1059
        %vm1061 = vweird.f32 %v1054
        %vm1062 = vweird.f32 %v1056
        %vm1063 = vmor %vm1061, %vm1062
        %v1064 = vsel %vm1063, %v1056, %v1060
        %v1065 = vand.u32 2147483647, %v1054
        %vm1066 = vcmp.eq.f32.partialorder %v1065, 8.507059e+37
        %v1067 = vand.u32 %v1054, 2147483648
        %v1068 = vor.u32 1.1754944e-38, %v1067
        %v1069 = vsel %vm1066, %v1068, %v1064
        %v1070 = vmul.f32 %v1051, %v1069
        %1072 = vrot.lane.b32.xlu0 %v1050, 79
        %v1073 = vpop.permute.xlu0 %1072
        %v1075 = vrcp.pop %v1073
        %v1076 = vmul.f32 %v1073, %v1075
        %v1077 = vsub.f32 1.0, %v1076
        %v1078 = vmul.f32 %v1075, %v1077
        %v1079 = vadd.f32 %v1075, %v1078
        %vm1080 = vweird.f32 %v1073
        %vm1081 = vweird.f32 %v1075
        %vm1082 = vmor %vm1080, %vm1081
        %v1083 = vsel %vm1082, %v1075, %v1079
        %v1084 = vand.u32 2147483647, %v1073
        %vm1085 = vcmp.eq.f32.partialorder %v1084, 8.507059e+37
        %v1086 = vand.u32 %v1073, 2147483648
        %v1087 = vor.u32 1.1754944e-38, %v1086
        %v1088 = vsel %vm1085, %v1087, %v1083
        %v1089 = vmul.f32 %v1051, %v1088
        %v1090 = vmul.f32 %v1070, 6.910853e-06
        %s1092 = vtos %v1090
        %v1093 = vstv %s1092
        %v1095 = vmul.f32 %v1093, %v785
        %v1096 = vmul.f32 %v1093, %v788
        %v1097 = vmul.f32 %v1093, %v791
        %v1098 = vmul.f32 %v1093, %v794
        %v1099 = vmul.f32 %v1093, %v797
        %v1100 = vmul.f32 %v1093, %v800
        %v1101 = vmul.f32 %v1093, %v803
        %v1102 = vmul.f32 %v1093, %v806
        %v1103 = vmul.f32 %v1093, %v809
        %v1104 = vmul.f32 %v1093, %v812
        %v1105 = vmul.f32 %v1093, %v815
        %v1106 = vmul.f32 %v1093, %v818
        %v1107 = vmul.f32 %v1093, %v821
        %v1108 = vmul.f32 %v1093, %v824
        %v1109 = vmul.f32 %v1093, %v827
        %v1110 = vmul.f32 %v1093, %v830
        %v1111 = vmul.f32 %v1089, 6.910853e-06
        %s1113 = vtos %v1111
        %v1114 = vstv %s1113
        %v1116 = vmul.f32 %v1114, %v833
        %v1117 = vmul.f32 %v1114, %v836
        %v1118 = vmul.f32 %v1114, %v839
        %v1119 = vmul.f32 %v1114, %v842
        %v1120 = vmul.f32 %v1114, %v845
        %v1121 = vmul.f32 %v1114, %v848
        %v1122 = vmul.f32 %v1114, %v851
        %v1123 = vmul.f32 %v1114, %v854
        %v1124 = vmul.f32 %v1114, %v857
        %v1125 = vmul.f32 %v1114, %v860
        %v1126 = vmul.f32 %v1114, %v863
        %v1127 = vmul.f32 %v1114, %v866
        %v1128 = vmul.f32 %v1114, %v869
        %v1129 = vmul.f32 %v1114, %v872
        %v1130 = vmul.f32 %v1114, %v875
        %v1131 = vmul.f32 %v1114, %v878
        %v1132 = vperm.slane %v398, 0
        %vm1133 = vcmp.gt.f32.partialorder %v1095, %v1132
        %vm1134 = vcmp.gt.f32.partialorder %v1096, %v1132
        %vm1135 = vcmp.gt.f32.partialorder %v1097, %v1132
        %vm1136 = vcmp.gt.f32.partialorder %v1098, %v1132
        %vm1137 = vcmp.gt.f32.partialorder %v1099, %v1132
        %vm1138 = vcmp.gt.f32.partialorder %v1100, %v1132
        %vm1139 = vcmp.gt.f32.partialorder %v1101, %v1132
        %vm1140 = vcmp.gt.f32.partialorder %v1102, %v1132
        %vm1141 = vcmp.gt.f32.partialorder %v1103, %v1132
        %vm1142 = vcmp.gt.f32.partialorder %v1104, %v1132
        %vm1143 = vcmp.gt.f32.partialorder %v1105, %v1132
        %vm1144 = vcmp.gt.f32.partialorder %v1106, %v1132
        %vm1145 = vcmp.gt.f32.partialorder %v1107, %v1132
        %vm1146 = vcmp.gt.f32.partialorder %v1108, %v1132
        %vm1147 = vcmp.gt.f32.partialorder %v1109, %v1132
        %vm1148 = vcmp.gt.f32.partialorder %v1110, %v1132
        %v1149 = vsel %vm1133, %v1095, 0.0
        %v1150 = vsel %vm1134, %v1096, 0.0
        %v1151 = vsel %vm1135, %v1097, 0.0
        %v1152 = vsel %vm1136, %v1098, 0.0
        %v1153 = vsel %vm1137, %v1099, 0.0
        %v1154 = vsel %vm1138, %v1100, 0.0
        %v1155 = vsel %vm1139, %v1101, 0.0
        %v1156 = vsel %vm1140, %v1102, 0.0
        %v1157 = vsel %vm1141, %v1103, 0.0
        %v1158 = vsel %vm1142, %v1104, 0.0
        %v1159 = vsel %vm1143, %v1105, 0.0
        %v1160 = vsel %vm1144, %v1106, 0.0
        %v1161 = vsel %vm1145, %v1107, 0.0
        %v1162 = vsel %vm1146, %v1108, 0.0
        %v1163 = vsel %vm1147, %v1109, 0.0
        %v1164 = vsel %vm1148, %v1110, 0.0
        %vm1165 = vcmask 408576
        %v1166 = vsel %vm1165, %v1149, 0.0
        %1167 = vadd.xlane.f32.xlu0 %v1166
        %v1168 = vpop.xlane.xlu0 %1167
        %v1169 = vsel %vm1165, %v1150, 0.0
        %1170 = vadd.xlane.f32.xlu0 %v1169
        %v1171 = vpop.xlane.xlu0 %1170
        %v1172 = vsel %vm1165, %v1151, 0.0
        %1173 = vadd.xlane.f32.xlu0 %v1172
        %v1174 = vpop.xlane.xlu0 %1173
        %v1175 = vsel %vm1165, %v1152, 0.0
        %1176 = vadd.xlane.f32.xlu0 %v1175
        %v1177 = vpop.xlane.xlu0 %1176
        %v1178 = vsel %vm1165, %v1153, 0.0
        %1179 = vadd.xlane.f32.xlu0 %v1178
        %v1180 = vpop.xlane.xlu0 %1179
        %v1181 = vsel %vm1165, %v1154, 0.0
        %1182 = vadd.xlane.f32.xlu0 %v1181
        %v1183 = vpop.xlane.xlu0 %1182
        %v1184 = vsel %vm1165, %v1155, 0.0
        %1185 = vadd.xlane.f32.xlu0 %v1184
        %v1186 = vpop.xlane.xlu0 %1185
        %v1187 = vsel %vm1165, %v1156, 0.0
        %1188 = vadd.xlane.f32.xlu0 %v1187
        %v1189 = vpop.xlane.xlu0 %1188
        %v1190 = vsel %vm1165, %v1157, 0.0
        %1191 = vadd.xlane.f32.xlu0 %v1190
        %v1192 = vpop.xlane.xlu0 %1191
        %v1193 = vsel %vm1165, %v1158, 0.0
        %1194 = vadd.xlane.f32.xlu0 %v1193
        %v1195 = vpop.xlane.xlu0 %1194
        %v1196 = vsel %vm1165, %v1159, 0.0
        %1197 = vadd.xlane.f32.xlu0 %v1196
        %v1198 = vpop.xlane.xlu0 %1197
        %v1199 = vsel %vm1165, %v1160, 0.0
        %1200 = vadd.xlane.f32.xlu0 %v1199
        %v1201 = vpop.xlane.xlu0 %1200
        %v1202 = vsel %vm1165, %v1161, 0.0
        %1203 = vadd.xlane.f32.xlu0 %v1202
        %v1204 = vpop.xlane.xlu0 %1203
        %v1205 = vsel %vm1165, %v1162, 0.0
        %1206 = vadd.xlane.f32.xlu0 %v1205
        %v1207 = vpop.xlane.xlu0 %1206
        %v1208 = vsel %vm1165, %v1163, 0.0
        %1209 = vadd.xlane.f32.xlu0 %v1208
        %v1210 = vpop.xlane.xlu0 %1209
        %v1211 = vsel %vm1165, %v1164, 0.0
        %1212 = vadd.xlane.f32.xlu0 %v1211
        %v1213 = vpop.xlane.xlu0 %1212
        %vm1214 = vcmp.ge.f32.partialorder %v1168, 10000000.0
        %vm1215 = vcmp.ge.f32.partialorder %v1171, 10000000.0
        %vm1216 = vcmp.ge.f32.partialorder %v1174, 10000000.0
        %vm1217 = vcmp.ge.f32.partialorder %v1177, 10000000.0
        %vm1218 = vcmp.ge.f32.partialorder %v1180, 10000000.0
        %vm1219 = vcmp.ge.f32.partialorder %v1183, 10000000.0
        %vm1220 = vcmp.ge.f32.partialorder %v1186, 10000000.0
        %vm1221 = vcmp.ge.f32.partialorder %v1189, 10000000.0
        %vm1222 = vcmp.ge.f32.partialorder %v1192, 10000000.0
        %vm1223 = vcmp.ge.f32.partialorder %v1195, 10000000.0
        %vm1224 = vcmp.ge.f32.partialorder %v1198, 10000000.0
        %vm1225 = vcmp.ge.f32.partialorder %v1201, 10000000.0
        %vm1226 = vcmp.ge.f32.partialorder %v1204, 10000000.0
        %vm1227 = vcmp.ge.f32.partialorder %v1207, 10000000.0
        %vm1228 = vcmp.ge.f32.partialorder %v1210, 10000000.0
        %vm1229 = vcmp.ge.f32.partialorder %v1213, 10000000.0
        %vm1230 = vcmp.ge.f32.partialorder %v1095, %v1132
        %vm1231 = vcmp.ge.f32.partialorder %v1096, %v1132
        %vm1232 = vcmp.ge.f32.partialorder %v1097, %v1132
        %vm1233 = vcmp.ge.f32.partialorder %v1098, %v1132
        %vm1234 = vcmp.ge.f32.partialorder %v1099, %v1132
        %vm1235 = vcmp.ge.f32.partialorder %v1100, %v1132
        %vm1236 = vcmp.ge.f32.partialorder %v1101, %v1132
        %vm1237 = vcmp.ge.f32.partialorder %v1102, %v1132
        %vm1238 = vcmp.ge.f32.partialorder %v1103, %v1132
        %vm1239 = vcmp.ge.f32.partialorder %v1104, %v1132
        %vm1240 = vcmp.ge.f32.partialorder %v1105, %v1132
        %vm1241 = vcmp.ge.f32.partialorder %v1106, %v1132
        %vm1242 = vcmp.ge.f32.partialorder %v1107, %v1132
        %vm1243 = vcmp.ge.f32.partialorder %v1108, %v1132
        %vm1244 = vcmp.ge.f32.partialorder %v1109, %v1132
        %vm1245 = vcmp.ge.f32.partialorder %v1110, %v1132
        %v1246 = vsel %vm1214, 1, 0
        %v1247 = vsel %vm1215, 1, 0
        %v1248 = vsel %vm1216, 1, 0
        %v1249 = vsel %vm1217, 1, 0
        %v1250 = vsel %vm1218, 1, 0
        %v1251 = vsel %vm1219, 1, 0
        %v1252 = vsel %vm1220, 1, 0
        %v1253 = vsel %vm1221, 1, 0
        %v1254 = vsel %vm1222, 1, 0
        %v1255 = vsel %vm1223, 1, 0
        %v1256 = vsel %vm1224, 1, 0
        %v1257 = vsel %vm1225, 1, 0
        %v1258 = vsel %vm1226, 1, 0
        %v1259 = vsel %vm1227, 1, 0
        %v1260 = vsel %vm1228, 1, 0
        %v1261 = vsel %vm1229, 1, 0
        %vm1262 = vcmp.eq.s32.totalorder %v1246, 1
        %vm1263 = vcmp.eq.s32.totalorder %v1247, 1
        %vm1264 = vcmp.eq.s32.totalorder %v1248, 1
        %vm1265 = vcmp.eq.s32.totalorder %v1249, 1
        %vm1266 = vcmp.eq.s32.totalorder %v1250, 1
        %vm1267 = vcmp.eq.s32.totalorder %v1251, 1
        %vm1268 = vcmp.eq.s32.totalorder %v1252, 1
        %vm1269 = vcmp.eq.s32.totalorder %v1253, 1
        %vm1270 = vcmp.eq.s32.totalorder %v1254, 1
        %vm1271 = vcmp.eq.s32.totalorder %v1255, 1
        %vm1272 = vcmp.eq.s32.totalorder %v1256, 1
        %vm1273 = vcmp.eq.s32.totalorder %v1257, 1
        %vm1274 = vcmp.eq.s32.totalorder %v1258, 1
        %vm1275 = vcmp.eq.s32.totalorder %v1259, 1
        %vm1276 = vcmp.eq.s32.totalorder %v1260, 1
        %vm1277 = vcmp.eq.s32.totalorder %v1261, 1
        %vm1278 = vmand %vm1230, %vm1262
        %vm1279 = vmand %vm1231, %vm1263
        %vm1280 = vmand %vm1232, %vm1264
        %vm1281 = vmand %vm1233, %vm1265
        %vm1282 = vmand %vm1234, %vm1266
        %vm1283 = vmand %vm1235, %vm1267
        %vm1284 = vmand %vm1236, %vm1268
        %vm1285 = vmand %vm1237, %vm1269
        %vm1286 = vmand %vm1238, %vm1270
        %vm1287 = vmand %vm1239, %vm1271
        %vm1288 = vmand %vm1240, %vm1272
        %vm1289 = vmand %vm1241, %vm1273
        %vm1290 = vmand %vm1242, %vm1274
        %vm1291 = vmand %vm1243, %vm1275
        %vm1292 = vmand %vm1244, %vm1276
        %vm1293 = vmand %vm1245, %vm1277
        %v1294 = vsel %vm1278, %v1095, 0.0
        %v1295 = vsel %vm1279, %v1096, 0.0
        %v1296 = vsel %vm1280, %v1097, 0.0
        %v1297 = vsel %vm1281, %v1098, 0.0
        %v1298 = vsel %vm1282, %v1099, 0.0
        %v1299 = vsel %vm1283, %v1100, 0.0
        %v1300 = vsel %vm1284, %v1101, 0.0
        %v1301 = vsel %vm1285, %v1102, 0.0
        %v1302 = vsel %vm1286, %v1103, 0.0
        %v1303 = vsel %vm1287, %v1104, 0.0
        %v1304 = vsel %vm1288, %v1105, 0.0
        %v1305 = vsel %vm1289, %v1106, 0.0
        %v1306 = vsel %vm1290, %v1107, 0.0
        %v1307 = vsel %vm1291, %v1108, 0.0
        %v1308 = vsel %vm1292, %v1109, 0.0
        %v1309 = vsel %vm1293, %v1110, 0.0
        %v1310 = vsel %vm1165, %v1294, 0.0
        %v1311 = vsel %vm1165, %v1295, 0.0
        %v1312 = vadd.f32 %v1310, %v1311
        %v1313 = vsel %vm1165, %v1296, 0.0
        %v1314 = vadd.f32 %v1312, %v1313
        %v1315 = vsel %vm1165, %v1297, 0.0
        %v1316 = vadd.f32 %v1314, %v1315
        %v1317 = vsel %vm1165, %v1298, 0.0
        %v1318 = vadd.f32 %v1316, %v1317
        %v1319 = vsel %vm1165, %v1299, 0.0
        %v1320 = vadd.f32 %v1318, %v1319
        %v1321 = vsel %vm1165, %v1300, 0.0
        %v1322 = vadd.f32 %v1320, %v1321
        %v1323 = vsel %vm1165, %v1301, 0.0
        %v1324 = vadd.f32 %v1322, %v1323
        %v1325 = vsel %vm1165, %v1302, 0.0
        %v1326 = vadd.f32 %v1324, %v1325
        %v1327 = vsel %vm1165, %v1303, 0.0
        %v1328 = vadd.f32 %v1326, %v1327
        %v1329 = vsel %vm1165, %v1304, 0.0
        %v1330 = vadd.f32 %v1328, %v1329
        %v1331 = vsel %vm1165, %v1305, 0.0
        %v1332 = vadd.f32 %v1330, %v1331
        %v1333 = vsel %vm1165, %v1306, 0.0
        %v1334 = vadd.f32 %v1332, %v1333
        %v1335 = vsel %vm1165, %v1307, 0.0
        %v1336 = vadd.f32 %v1334, %v1335
        %v1337 = vsel %vm1165, %v1308, 0.0
        %v1338 = vadd.f32 %v1336, %v1337
        %v1339 = vsel %vm1165, %v1309, 0.0
        %v1340 = vadd.f32 %v1338, %v1339
        %v1341 = vrot.slane %v1340, 4
        %v1342 = vadd.f32 %v1340, %v1341
        %v1343 = vrot.slane %v1342, 2
        %v1344 = vadd.f32 %v1342, %v1343
        %v1345 = vrot.slane %v1344, 1
        %v1346 = vadd.f32 %v1344, %v1345
        %v1347 = vsel %vm1278, %v1116, 0.0
        %v1348 = vsel %vm1279, %v1117, 0.0
        %v1349 = vsel %vm1280, %v1118, 0.0
        %v1350 = vsel %vm1281, %v1119, 0.0
        %v1351 = vsel %vm1282, %v1120, 0.0
        %v1352 = vsel %vm1283, %v1121, 0.0
        %v1353 = vsel %vm1284, %v1122, 0.0
        %v1354 = vsel %vm1285, %v1123, 0.0
        %v1355 = vsel %vm1286, %v1124, 0.0
        %v1356 = vsel %vm1287, %v1125, 0.0
        %v1357 = vsel %vm1288, %v1126, 0.0
        %v1358 = vsel %vm1289, %v1127, 0.0
        %v1359 = vsel %vm1290, %v1128, 0.0
        %v1360 = vsel %vm1291, %v1129, 0.0
        %v1361 = vsel %vm1292, %v1130, 0.0
        %v1362 = vsel %vm1293, %v1131, 0.0
        %v1363 = vsel %vm1165, %v1347, 0.0
        %v1364 = vsel %vm1165, %v1348, 0.0
        %v1365 = vadd.f32 %v1363, %v1364
        %v1366 = vsel %vm1165, %v1349, 0.0
        %v1367 = vadd.f32 %v1365, %v1366
        %v1368 = vsel %vm1165, %v1350, 0.0
        %v1369 = vadd.f32 %v1367, %v1368
        %v1370 = vsel %vm1165, %v1351, 0.0
        %v1371 = vadd.f32 %v1369, %v1370
        %v1372 = vsel %vm1165, %v1352, 0.0
        %v1373 = vadd.f32 %v1371, %v1372
        %v1374 = vsel %vm1165, %v1353, 0.0
        %v1375 = vadd.f32 %v1373, %v1374
        %v1376 = vsel %vm1165, %v1354, 0.0
        %v1377 = vadd.f32 %v1375, %v1376
        %v1378 = vsel %vm1165, %v1355, 0.0
        %v1379 = vadd.f32 %v1377, %v1378
        %v1380 = vsel %vm1165, %v1356, 0.0
        %v1381 = vadd.f32 %v1379, %v1380
        %v1382 = vsel %vm1165, %v1357, 0.0
        %v1383 = vadd.f32 %v1381, %v1382
        %v1384 = vsel %vm1165, %v1358, 0.0
        %v1385 = vadd.f32 %v1383, %v1384
        %v1386 = vsel %vm1165, %v1359, 0.0
        %v1387 = vadd.f32 %v1385, %v1386
        %v1388 = vsel %vm1165, %v1360, 0.0
        %v1389 = vadd.f32 %v1387, %v1388
        %v1390 = vsel %vm1165, %v1361, 0.0
        %v1391 = vadd.f32 %v1389, %v1390
        %v1392 = vsel %vm1165, %v1362, 0.0
        %v1393 = vadd.f32 %v1391, %v1392
        %v1394 = vrot.slane %v1393, 4
        %v1395 = vadd.f32 %v1393, %v1394
        %v1396 = vrot.slane %v1395, 2
        %v1397 = vadd.f32 %v1395, %v1396
        %v1398 = vrot.slane %v1397, 1
        %v1399 = vadd.f32 %v1397, %v1398
        %v1400 = vadd.f32 %v1346, 1000.0
        %v1401 = vadd.f32 %v1399, 1000.0
        %v1402 = vrcp.pop %v1401
        %v1403 = vmul.f32 %v1401, %v1402
        %v1404 = vsub.f32 1.0, %v1403
        %v1405 = vmul.f32 %v1402, %v1404
        %v1406 = vadd.f32 %v1402, %v1405
        %vm1407 = vweird.f32 %v1401
        %vm1408 = vweird.f32 %v1402
        %vm1409 = vmor %vm1407, %vm1408
        %v1410 = vsel %vm1409, %v1402, %v1406
        %v1411 = vand.u32 2147483647, %v1401
        %vm1412 = vcmp.eq.f32.partialorder %v1411, 8.507059e+37
        %v1413 = vand.u32 %v1401, 2147483648
        %v1414 = vor.u32 1.1754944e-38, %v1413
        %v1415 = vsel %vm1412, %v1414, %v1410
        %v1416 = vmul.f32 %v1400, %v1415
        %v1417 = vmax.f32 %v1416, 0.01
        %v1418 = vmin.f32 %v1417, 100.0
        %v1419 = vmul.f32 %v1418, %v1116
        %v1420 = vmul.f32 %v1418, %v1117
        %v1421 = vmul.f32 %v1418, %v1118
        %v1422 = vmul.f32 %v1418, %v1119
        %v1423 = vmul.f32 %v1418, %v1120
        %v1424 = vmul.f32 %v1418, %v1121
        %v1425 = vmul.f32 %v1418, %v1122
        %v1426 = vmul.f32 %v1418, %v1123
        %v1427 = vmul.f32 %v1418, %v1124
        %v1428 = vmul.f32 %v1418, %v1125
        %v1429 = vmul.f32 %v1418, %v1126
        %v1430 = vmul.f32 %v1418, %v1127
        %v1431 = vmul.f32 %v1418, %v1128
        %v1432 = vmul.f32 %v1418, %v1129
        %v1433 = vmul.f32 %v1418, %v1130
        %v1434 = vmul.f32 %v1418, %v1131
        %v1435 = vperm.slane %v397, 0
        %vm1436 = vcmp.gt.f32.partialorder %v1095, %v1435
        %vm1437 = vcmp.gt.f32.partialorder %v1096, %v1435
        %vm1438 = vcmp.gt.f32.partialorder %v1097, %v1435
        %vm1439 = vcmp.gt.f32.partialorder %v1098, %v1435
        %vm1440 = vcmp.gt.f32.partialorder %v1099, %v1435
        %vm1441 = vcmp.gt.f32.partialorder %v1100, %v1435
        %vm1442 = vcmp.gt.f32.partialorder %v1101, %v1435
        %vm1443 = vcmp.gt.f32.partialorder %v1102, %v1435
        %vm1444 = vcmp.gt.f32.partialorder %v1103, %v1435
        %vm1445 = vcmp.gt.f32.partialorder %v1104, %v1435
        %vm1446 = vcmp.gt.f32.partialorder %v1105, %v1435
        %vm1447 = vcmp.gt.f32.partialorder %v1106, %v1435
        %vm1448 = vcmp.gt.f32.partialorder %v1107, %v1435
        %vm1449 = vcmp.gt.f32.partialorder %v1108, %v1435
        %vm1450 = vcmp.gt.f32.partialorder %v1109, %v1435
        %vm1451 = vcmp.gt.f32.partialorder %v1110, %v1435
        %v1452 = vsel %vm1436, %v1095, 0.0
        %v1453 = vsel %vm1437, %v1096, 0.0
        %v1454 = vsel %vm1438, %v1097, 0.0
        %v1455 = vsel %vm1439, %v1098, 0.0
        %v1456 = vsel %vm1440, %v1099, 0.0
        %v1457 = vsel %vm1441, %v1100, 0.0
        %v1458 = vsel %vm1442, %v1101, 0.0
        %v1459 = vsel %vm1443, %v1102, 0.0
        %v1460 = vsel %vm1444, %v1103, 0.0
        %v1461 = vsel %vm1445, %v1104, 0.0
        %v1462 = vsel %vm1446, %v1105, 0.0
        %v1463 = vsel %vm1447, %v1106, 0.0
        %v1464 = vsel %vm1448, %v1107, 0.0
        %v1465 = vsel %vm1449, %v1108, 0.0
        %v1466 = vsel %vm1450, %v1109, 0.0
        %v1467 = vsel %vm1451, %v1110, 0.0
        %v1468 = vsel %vm1165, %v1452, 0.0
        %1469 = vadd.xlane.f32.xlu0 %v1468
        %v1470 = vpop.xlane.xlu0 %1469
        %v1471 = vsel %vm1165, %v1453, 0.0
        %1472 = vadd.xlane.f32.xlu0 %v1471
        %v1473 = vpop.xlane.xlu0 %1472
        %v1474 = vsel %vm1165, %v1454, 0.0
        %1475 = vadd.xlane.f32.xlu0 %v1474
        %v1476 = vpop.xlane.xlu0 %1475
        %v1477 = vsel %vm1165, %v1455, 0.0
        %1478 = vadd.xlane.f32.xlu0 %v1477
        %v1479 = vpop.xlane.xlu0 %1478
        %v1480 = vsel %vm1165, %v1456, 0.0
        %1481 = vadd.xlane.f32.xlu0 %v1480
        %v1482 = vpop.xlane.xlu0 %1481
        %v1483 = vsel %vm1165, %v1457, 0.0
        %1484 = vadd.xlane.f32.xlu0 %v1483
        %v1485 = vpop.xlane.xlu0 %1484
        %v1486 = vsel %vm1165, %v1458, 0.0
        %1487 = vadd.xlane.f32.xlu0 %v1486
        %v1488 = vpop.xlane.xlu0 %1487
        %v1489 = vsel %vm1165, %v1459, 0.0
        %1490 = vadd.xlane.f32.xlu0 %v1489
        %v1491 = vpop.xlane.xlu0 %1490
        %v1492 = vsel %vm1165, %v1460, 0.0
        %1493 = vadd.xlane.f32.xlu0 %v1492
        %v1494 = vpop.xlane.xlu0 %1493
        %v1495 = vsel %vm1165, %v1461, 0.0
        %1496 = vadd.xlane.f32.xlu0 %v1495
        %v1497 = vpop.xlane.xlu0 %1496
        %v1498 = vsel %vm1165, %v1462, 0.0
        %1499 = vadd.xlane.f32.xlu0 %v1498
        %v1500 = vpop.xlane.xlu0 %1499
        %v1501 = vsel %vm1165, %v1463, 0.0
        %1502 = vadd.xlane.f32.xlu0 %v1501
        %v1503 = vpop.xlane.xlu0 %1502
        %v1504 = vsel %vm1165, %v1464, 0.0
        %1505 = vadd.xlane.f32.xlu0 %v1504
        %v1506 = vpop.xlane.xlu0 %1505
        %v1507 = vsel %vm1165, %v1465, 0.0
        %1508 = vadd.xlane.f32.xlu0 %v1507
        %v1509 = vpop.xlane.xlu0 %1508
        %v1510 = vsel %vm1165, %v1466, 0.0
        %1511 = vadd.xlane.f32.xlu0 %v1510
        %v1512 = vpop.xlane.xlu0 %1511
        %v1513 = vsel %vm1165, %v1467, 0.0
        %1514 = vadd.xlane.f32.xlu0 %v1513
        %v1515 = vpop.xlane.xlu0 %1514
        %vm1516 = vcmp.gt.f32.partialorder %v1419, %v1435
        %vm1517 = vcmp.gt.f32.partialorder %v1420, %v1435
        %vm1518 = vcmp.gt.f32.partialorder %v1421, %v1435
        %vm1519 = vcmp.gt.f32.partialorder %v1422, %v1435
        %vm1520 = vcmp.gt.f32.partialorder %v1423, %v1435
        %vm1521 = vcmp.gt.f32.partialorder %v1424, %v1435
        %vm1522 = vcmp.gt.f32.partialorder %v1425, %v1435
        %vm1523 = vcmp.gt.f32.partialorder %v1426, %v1435
        %vm1524 = vcmp.gt.f32.partialorder %v1427, %v1435
        %vm1525 = vcmp.gt.f32.partialorder %v1428, %v1435
        %vm1526 = vcmp.gt.f32.partialorder %v1429, %v1435
        %vm1527 = vcmp.gt.f32.partialorder %v1430, %v1435
        %vm1528 = vcmp.gt.f32.partialorder %v1431, %v1435
        %vm1529 = vcmp.gt.f32.partialorder %v1432, %v1435
        %vm1530 = vcmp.gt.f32.partialorder %v1433, %v1435
        %vm1531 = vcmp.gt.f32.partialorder %v1434, %v1435
        %v1532 = vsel %vm1516, %v1419, 0.0
        %v1533 = vsel %vm1517, %v1420, 0.0
        %v1534 = vsel %vm1518, %v1421, 0.0
        %v1535 = vsel %vm1519, %v1422, 0.0
        %v1536 = vsel %vm1520, %v1423, 0.0
        %v1537 = vsel %vm1521, %v1424, 0.0
        %v1538 = vsel %vm1522, %v1425, 0.0
        %v1539 = vsel %vm1523, %v1426, 0.0
        %v1540 = vsel %vm1524, %v1427, 0.0
        %v1541 = vsel %vm1525, %v1428, 0.0
        %v1542 = vsel %vm1526, %v1429, 0.0
        %v1543 = vsel %vm1527, %v1430, 0.0
        %v1544 = vsel %vm1528, %v1431, 0.0
        %v1545 = vsel %vm1529, %v1432, 0.0
        %v1546 = vsel %vm1530, %v1433, 0.0
        %v1547 = vsel %vm1531, %v1434, 0.0
        %v1548 = vsel %vm1165, %v1532, 0.0
        %1549 = vadd.xlane.f32.xlu0 %v1548
        %v1550 = vpop.xlane.xlu0 %1549
        %v1551 = vsel %vm1165, %v1533, 0.0
        %1552 = vadd.xlane.f32.xlu0 %v1551
        %v1553 = vpop.xlane.xlu0 %1552
        %v1554 = vsel %vm1165, %v1534, 0.0
        %1555 = vadd.xlane.f32.xlu0 %v1554
        %v1556 = vpop.xlane.xlu0 %1555
        %v1557 = vsel %vm1165, %v1535, 0.0
        %1558 = vadd.xlane.f32.xlu0 %v1557
        %v1559 = vpop.xlane.xlu0 %1558
        %v1560 = vsel %vm1165, %v1536, 0.0
        %1561 = vadd.xlane.f32.xlu0 %v1560
        %v1562 = vpop.xlane.xlu0 %1561
        %v1563 = vsel %vm1165, %v1537, 0.0
        %1564 = vadd.xlane.f32.xlu0 %v1563
        %v1565 = vpop.xlane.xlu0 %1564
        %v1566 = vsel %vm1165, %v1538, 0.0
        %1567 = vadd.xlane.f32.xlu0 %v1566
        %v1568 = vpop.xlane.xlu0 %1567
        %v1569 = vsel %vm1165, %v1539, 0.0
        %1570 = vadd.xlane.f32.xlu0 %v1569
        %v1571 = vpop.xlane.xlu0 %1570
        %v1572 = vsel %vm1165, %v1540, 0.0
        %1573 = vadd.xlane.f32.xlu0 %v1572
        %v1574 = vpop.xlane.xlu0 %1573
        %v1575 = vsel %vm1165, %v1541, 0.0
        %1576 = vadd.xlane.f32.xlu0 %v1575
        %v1577 = vpop.xlane.xlu0 %1576
        %v1578 = vsel %vm1165, %v1542, 0.0
        %1579 = vadd.xlane.f32.xlu0 %v1578
        %v1580 = vpop.xlane.xlu0 %1579
        %v1581 = vsel %vm1165, %v1543, 0.0
        %1582 = vadd.xlane.f32.xlu0 %v1581
        %v1583 = vpop.xlane.xlu0 %1582
        %v1584 = vsel %vm1165, %v1544, 0.0
        %1585 = vadd.xlane.f32.xlu0 %v1584
        %v1586 = vpop.xlane.xlu0 %1585
        %v1587 = vsel %vm1165, %v1545, 0.0
        %1588 = vadd.xlane.f32.xlu0 %v1587
        %v1589 = vpop.xlane.xlu0 %1588
        %v1590 = vsel %vm1165, %v1546, 0.0
        %1591 = vadd.xlane.f32.xlu0 %v1590
        %v1592 = vpop.xlane.xlu0 %1591
        %v1593 = vsel %vm1165, %v1547, 0.0
        %1594 = vadd.xlane.f32.xlu0 %v1593
        %v1595 = vpop.xlane.xlu0 %1594
        %v1596 = vadd.f32 %v1470, 5000.0
        %v1597 = vadd.f32 %v1473, 5000.0
        %v1598 = vadd.f32 %v1476, 5000.0
        %v1599 = vadd.f32 %v1479, 5000.0
        %v1600 = vadd.f32 %v1482, 5000.0
        %v1601 = vadd.f32 %v1485, 5000.0
        %v1602 = vadd.f32 %v1488, 5000.0
        %v1603 = vadd.f32 %v1491, 5000.0
        %v1604 = vadd.f32 %v1494, 5000.0
        %v1605 = vadd.f32 %v1497, 5000.0
        %v1606 = vadd.f32 %v1500, 5000.0
        %v1607 = vadd.f32 %v1503, 5000.0
        %v1608 = vadd.f32 %v1506, 5000.0
        %v1609 = vadd.f32 %v1509, 5000.0
        %v1610 = vadd.f32 %v1512, 5000.0
        %v1611 = vadd.f32 %v1515, 5000.0
        %v1612 = vadd.f32 %v1550, 5000.0
        %v1613 = vadd.f32 %v1553, 5000.0
        %v1614 = vadd.f32 %v1556, 5000.0
        %v1615 = vadd.f32 %v1559, 5000.0
        %v1616 = vadd.f32 %v1562, 5000.0
        %v1617 = vadd.f32 %v1565, 5000.0
        %v1618 = vadd.f32 %v1568, 5000.0
        %v1619 = vadd.f32 %v1571, 5000.0
        %v1620 = vadd.f32 %v1574, 5000.0
        %v1621 = vadd.f32 %v1577, 5000.0
        %v1622 = vadd.f32 %v1580, 5000.0
        %v1623 = vadd.f32 %v1583, 5000.0
        %v1624 = vadd.f32 %v1586, 5000.0
        %v1625 = vadd.f32 %v1589, 5000.0
        %v1626 = vadd.f32 %v1592, 5000.0
        %v1627 = vadd.f32 %v1595, 5000.0
        %v1628 = vrcp.pop %v1612
        %v1629 = vmul.f32 %v1612, %v1628
        %v1630 = vsub.f32 1.0, %v1629
        %v1631 = vmul.f32 %v1628, %v1630
        %v1632 = vadd.f32 %v1628, %v1631
        %vm1633 = vweird.f32 %v1612
        %vm1634 = vweird.f32 %v1628
        %vm1635 = vmor %vm1633, %vm1634
        %v1636 = vsel %vm1635, %v1628, %v1632
        %v1637 = vand.u32 2147483647, %v1612
        %vm1638 = vcmp.eq.f32.partialorder %v1637, 8.507059e+37
        %v1639 = vand.u32 %v1612, 2147483648
        %v1640 = vor.u32 1.1754944e-38, %v1639
        %v1641 = vsel %vm1638, %v1640, %v1636
        %v1642 = vmul.f32 %v1596, %v1641
        %v1643 = vrcp.pop %v1613
        %v1644 = vmul.f32 %v1613, %v1643
        %v1645 = vsub.f32 1.0, %v1644
        %v1646 = vmul.f32 %v1643, %v1645
        %v1647 = vadd.f32 %v1643, %v1646
        %vm1648 = vweird.f32 %v1613
        %vm1649 = vweird.f32 %v1643
        %vm1650 = vmor %vm1648, %vm1649
        %v1651 = vsel %vm1650, %v1643, %v1647
        %v1652 = vand.u32 2147483647, %v1613
        %vm1653 = vcmp.eq.f32.partialorder %v1652, 8.507059e+37
        %v1654 = vand.u32 %v1613, 2147483648
        %v1655 = vor.u32 1.1754944e-38, %v1654
        %v1656 = vsel %vm1653, %v1655, %v1651
        %v1657 = vmul.f32 %v1597, %v1656
        %v1658 = vrcp.pop %v1614
        %v1659 = vmul.f32 %v1614, %v1658
        %v1660 = vsub.f32 1.0, %v1659
        %v1661 = vmul.f32 %v1658, %v1660
        %v1662 = vadd.f32 %v1658, %v1661
        %vm1663 = vweird.f32 %v1614
        %vm1664 = vweird.f32 %v1658
        %vm1665 = vmor %vm1663, %vm1664
        %v1666 = vsel %vm1665, %v1658, %v1662
        %v1667 = vand.u32 2147483647, %v1614
        %vm1668 = vcmp.eq.f32.partialorder %v1667, 8.507059e+37
        %v1669 = vand.u32 %v1614, 2147483648
        %v1670 = vor.u32 1.1754944e-38, %v1669
        %v1671 = vsel %vm1668, %v1670, %v1666
        %v1672 = vmul.f32 %v1598, %v1671
        %v1673 = vrcp.pop %v1615
        %v1674 = vmul.f32 %v1615, %v1673
        %v1675 = vsub.f32 1.0, %v1674
        %v1676 = vmul.f32 %v1673, %v1675
        %v1677 = vadd.f32 %v1673, %v1676
        %vm1678 = vweird.f32 %v1615
        %vm1679 = vweird.f32 %v1673
        %vm1680 = vmor %vm1678, %vm1679
        %v1681 = vsel %vm1680, %v1673, %v1677
        %v1682 = vand.u32 2147483647, %v1615
        %vm1683 = vcmp.eq.f32.partialorder %v1682, 8.507059e+37
        %v1684 = vand.u32 %v1615, 2147483648
        %v1685 = vor.u32 1.1754944e-38, %v1684
        %v1686 = vsel %vm1683, %v1685, %v1681
        %v1687 = vmul.f32 %v1599, %v1686
        %v1688 = vrcp.pop %v1616
        %v1689 = vmul.f32 %v1616, %v1688
        %v1690 = vsub.f32 1.0, %v1689
        %v1691 = vmul.f32 %v1688, %v1690
        %v1692 = vadd.f32 %v1688, %v1691
        %vm1693 = vweird.f32 %v1616
        %vm1694 = vweird.f32 %v1688
        %vm1695 = vmor %vm1693, %vm1694
        %v1696 = vsel %vm1695, %v1688, %v1692
        %v1697 = vand.u32 2147483647, %v1616
        %vm1698 = vcmp.eq.f32.partialorder %v1697, 8.507059e+37
        %v1699 = vand.u32 %v1616, 2147483648
        %v1700 = vor.u32 1.1754944e-38, %v1699
        %v1701 = vsel %vm1698, %v1700, %v1696
        %v1702 = vmul.f32 %v1600, %v1701
        %v1703 = vrcp.pop %v1617
        %v1704 = vmul.f32 %v1617, %v1703
        %v1705 = vsub.f32 1.0, %v1704
        %v1706 = vmul.f32 %v1703, %v1705
        %v1707 = vadd.f32 %v1703, %v1706
        %vm1708 = vweird.f32 %v1617
        %vm1709 = vweird.f32 %v1703
        %vm1710 = vmor %vm1708, %vm1709
        %v1711 = vsel %vm1710, %v1703, %v1707
        %v1712 = vand.u32 2147483647, %v1617
        %vm1713 = vcmp.eq.f32.partialorder %v1712, 8.507059e+37
        %v1714 = vand.u32 %v1617, 2147483648
        %v1715 = vor.u32 1.1754944e-38, %v1714
        %v1716 = vsel %vm1713, %v1715, %v1711
        %v1717 = vmul.f32 %v1601, %v1716
        %v1718 = vrcp.pop %v1618
        %v1719 = vmul.f32 %v1618, %v1718
        %v1720 = vsub.f32 1.0, %v1719
        %v1721 = vmul.f32 %v1718, %v1720
        %v1722 = vadd.f32 %v1718, %v1721
        %vm1723 = vweird.f32 %v1618
        %vm1724 = vweird.f32 %v1718
        %vm1725 = vmor %vm1723, %vm1724
        %v1726 = vsel %vm1725, %v1718, %v1722
        %v1727 = vand.u32 2147483647, %v1618
        %vm1728 = vcmp.eq.f32.partialorder %v1727, 8.507059e+37
        %v1729 = vand.u32 %v1618, 2147483648
        %v1730 = vor.u32 1.1754944e-38, %v1729
        %v1731 = vsel %vm1728, %v1730, %v1726
        %v1732 = vmul.f32 %v1602, %v1731
        %v1733 = vrcp.pop %v1619
        %v1734 = vmul.f32 %v1619, %v1733
        %v1735 = vsub.f32 1.0, %v1734
        %v1736 = vmul.f32 %v1733, %v1735
        %v1737 = vadd.f32 %v1733, %v1736
        %vm1738 = vweird.f32 %v1619
        %vm1739 = vweird.f32 %v1733
        %vm1740 = vmor %vm1738, %vm1739
        %v1741 = vsel %vm1740, %v1733, %v1737
        %v1742 = vand.u32 2147483647, %v1619
        %vm1743 = vcmp.eq.f32.partialorder %v1742, 8.507059e+37
        %v1744 = vand.u32 %v1619, 2147483648
        %v1745 = vor.u32 1.1754944e-38, %v1744
        %v1746 = vsel %vm1743, %v1745, %v1741
        %v1747 = vmul.f32 %v1603, %v1746
        %v1748 = vrcp.pop %v1620
        %v1749 = vmul.f32 %v1620, %v1748
        %v1750 = vsub.f32 1.0, %v1749
        %v1751 = vmul.f32 %v1748, %v1750
        %v1752 = vadd.f32 %v1748, %v1751
        %vm1753 = vweird.f32 %v1620
        %vm1754 = vweird.f32 %v1748
        %vm1755 = vmor %vm1753, %vm1754
        %v1756 = vsel %vm1755, %v1748, %v1752
        %v1757 = vand.u32 2147483647, %v1620
        %vm1758 = vcmp.eq.f32.partialorder %v1757, 8.507059e+37
        %v1759 = vand.u32 %v1620, 2147483648
        %v1760 = vor.u32 1.1754944e-38, %v1759
        %v1761 = vsel %vm1758, %v1760, %v1756
        %v1762 = vmul.f32 %v1604, %v1761
        %v1763 = vrcp.pop %v1621
        %v1764 = vmul.f32 %v1621, %v1763
        %v1765 = vsub.f32 1.0, %v1764
        %v1766 = vmul.f32 %v1763, %v1765
        %v1767 = vadd.f32 %v1763, %v1766
        %vm1768 = vweird.f32 %v1621
        %vm1769 = vweird.f32 %v1763
        %vm1770 = vmor %vm1768, %vm1769
        %v1771 = vsel %vm1770, %v1763, %v1767
        %v1772 = vand.u32 2147483647, %v1621
        %vm1773 = vcmp.eq.f32.partialorder %v1772, 8.507059e+37
        %v1774 = vand.u32 %v1621, 2147483648
        %v1775 = vor.u32 1.1754944e-38, %v1774
        %v1776 = vsel %vm1773, %v1775, %v1771
        %v1777 = vmul.f32 %v1605, %v1776
        %v1778 = vrcp.pop %v1622
        %v1779 = vmul.f32 %v1622, %v1778
        %v1780 = vsub.f32 1.0, %v1779
        %v1781 = vmul.f32 %v1778, %v1780
        %v1782 = vadd.f32 %v1778, %v1781
        %vm1783 = vweird.f32 %v1622
        %vm1784 = vweird.f32 %v1778
        %vm1785 = vmor %vm1783, %vm1784
        %v1786 = vsel %vm1785, %v1778, %v1782
        %v1787 = vand.u32 2147483647, %v1622
        %vm1788 = vcmp.eq.f32.partialorder %v1787, 8.507059e+37
        %v1789 = vand.u32 %v1622, 2147483648
        %v1790 = vor.u32 1.1754944e-38, %v1789
        %v1791 = vsel %vm1788, %v1790, %v1786
        %v1792 = vmul.f32 %v1606, %v1791
        %v1793 = vrcp.pop %v1623
        %v1794 = vmul.f32 %v1623, %v1793
        %v1795 = vsub.f32 1.0, %v1794
        %v1796 = vmul.f32 %v1793, %v1795
        %v1797 = vadd.f32 %v1793, %v1796
        %vm1798 = vweird.f32 %v1623
        %vm1799 = vweird.f32 %v1793
        %vm1800 = vmor %vm1798, %vm1799
        %v1801 = vsel %vm1800, %v1793, %v1797
        %v1802 = vand.u32 2147483647, %v1623
        %vm1803 = vcmp.eq.f32.partialorder %v1802, 8.507059e+37
        %v1804 = vand.u32 %v1623, 2147483648
        %v1805 = vor.u32 1.1754944e-38, %v1804
        %v1806 = vsel %vm1803, %v1805, %v1801
        %v1807 = vmul.f32 %v1607, %v1806
        %v1808 = vrcp.pop %v1624
        %v1809 = vmul.f32 %v1624, %v1808
        %v1810 = vsub.f32 1.0, %v1809
        %v1811 = vmul.f32 %v1808, %v1810
        %v1812 = vadd.f32 %v1808, %v1811
        %vm1813 = vweird.f32 %v1624
        %vm1814 = vweird.f32 %v1808
        %vm1815 = vmor %vm1813, %vm1814
        %v1816 = vsel %vm1815, %v1808, %v1812
        %v1817 = vand.u32 2147483647, %v1624
        %vm1818 = vcmp.eq.f32.partialorder %v1817, 8.507059e+37
        %v1819 = vand.u32 %v1624, 2147483648
        %v1820 = vor.u32 1.1754944e-38, %v1819
        %v1821 = vsel %vm1818, %v1820, %v1816
        %v1822 = vmul.f32 %v1608, %v1821
        %v1823 = vrcp.pop %v1625
        %v1824 = vmul.f32 %v1625, %v1823
        %v1825 = vsub.f32 1.0, %v1824
        %v1826 = vmul.f32 %v1823, %v1825
        %v1827 = vadd.f32 %v1823, %v1826
        %vm1828 = vweird.f32 %v1625
        %vm1829 = vweird.f32 %v1823
        %vm1830 = vmor %vm1828, %vm1829
        %v1831 = vsel %vm1830, %v1823, %v1827
        %v1832 = vand.u32 2147483647, %v1625
        %vm1833 = vcmp.eq.f32.partialorder %v1832, 8.507059e+37
        %v1834 = vand.u32 %v1625, 2147483648
        %v1835 = vor.u32 1.1754944e-38, %v1834
        %v1836 = vsel %vm1833, %v1835, %v1831
        %v1837 = vmul.f32 %v1609, %v1836
        %v1838 = vrcp.pop %v1626
        %v1839 = vmul.f32 %v1626, %v1838
        %v1840 = vsub.f32 1.0, %v1839
        %v1841 = vmul.f32 %v1838, %v1840
        %v1842 = vadd.f32 %v1838, %v1841
        %vm1843 = vweird.f32 %v1626
        %vm1844 = vweird.f32 %v1838
        %vm1845 = vmor %vm1843, %vm1844
        %v1846 = vsel %vm1845, %v1838, %v1842
        %v1847 = vand.u32 2147483647, %v1626
        %vm1848 = vcmp.eq.f32.partialorder %v1847, 8.507059e+37
        %v1849 = vand.u32 %v1626, 2147483648
        %v1850 = vor.u32 1.1754944e-38, %v1849
        %v1851 = vsel %vm1848, %v1850, %v1846
        %v1852 = vmul.f32 %v1610, %v1851
        %v1853 = vrcp.pop %v1627
        %v1854 = vmul.f32 %v1627, %v1853
        %v1855 = vsub.f32 1.0, %v1854
        %v1856 = vmul.f32 %v1853, %v1855
        %v1857 = vadd.f32 %v1853, %v1856
        %vm1858 = vweird.f32 %v1627
        %vm1859 = vweird.f32 %v1853
        %vm1860 = vmor %vm1858, %vm1859
        %v1861 = vsel %vm1860, %v1853, %v1857
        %v1862 = vand.u32 2147483647, %v1627
        %vm1863 = vcmp.eq.f32.partialorder %v1862, 8.507059e+37
        %v1864 = vand.u32 %v1627, 2147483648
        %v1865 = vor.u32 1.1754944e-38, %v1864
        %v1866 = vsel %vm1863, %v1865, %v1861
        %v1867 = vmul.f32 %v1611, %v1866
        %v1868 = vmax.f32 %v1642, 0.0003
        %v1869 = vmax.f32 %v1657, 0.0003
        %v1870 = vmax.f32 %v1672, 0.0003
        %v1871 = vmax.f32 %v1687, 0.0003
        %v1872 = vmax.f32 %v1702, 0.0003
        %v1873 = vmax.f32 %v1717, 0.0003
        %v1874 = vmax.f32 %v1732, 0.0003
        %v1875 = vmax.f32 %v1747, 0.0003
        %v1876 = vmax.f32 %v1762, 0.0003
        %v1877 = vmax.f32 %v1777, 0.0003
        %v1878 = vmax.f32 %v1792, 0.0003
        %v1879 = vmax.f32 %v1807, 0.0003
        %v1880 = vmax.f32 %v1822, 0.0003
        %v1881 = vmax.f32 %v1837, 0.0003
        %v1882 = vmax.f32 %v1852, 0.0003
        %v1883 = vmax.f32 %v1867, 0.0003
        %v1884 = vmin.f32 %v1868, 5.0
        %v1885 = vmin.f32 %v1869, 5.0
        %v1886 = vmin.f32 %v1870, 5.0
        %v1887 = vmin.f32 %v1871, 5.0
        %v1888 = vmin.f32 %v1872, 5.0
        %v1889 = vmin.f32 %v1873, 5.0
        %v1890 = vmin.f32 %v1874, 5.0
        %v1891 = vmin.f32 %v1875, 5.0
        %v1892 = vmin.f32 %v1876, 5.0
        %v1893 = vmin.f32 %v1877, 5.0
        %v1894 = vmin.f32 %v1878, 5.0
        %v1895 = vmin.f32 %v1879, 5.0
        %v1896 = vmin.f32 %v1880, 5.0
        %v1897 = vmin.f32 %v1881, 5.0
        %v1898 = vmin.f32 %v1882, 5.0
        %v1899 = vmin.f32 %v1883, 5.0
        %v1900 = vmul.f32 %v1884, %v1419
        %v1901 = vmul.f32 %v1885, %v1420
        %v1902 = vmul.f32 %v1886, %v1421
        %v1903 = vmul.f32 %v1887, %v1422
        %v1904 = vmul.f32 %v1888, %v1423
        %v1905 = vmul.f32 %v1889, %v1424
        %v1906 = vmul.f32 %v1890, %v1425
        %v1907 = vmul.f32 %v1891, %v1426
        %v1908 = vmul.f32 %v1892, %v1427
        %v1909 = vmul.f32 %v1893, %v1428
        %v1910 = vmul.f32 %v1894, %v1429
        %v1911 = vmul.f32 %v1895, %v1430
        %v1912 = vmul.f32 %v1896, %v1431
        %v1913 = vmul.f32 %v1897, %v1432
        %v1914 = vmul.f32 %v1898, %v1433
        %v1915 = vmul.f32 %v1899, %v1434
        %v1916 = vperm.slane %v401, 0
        %v1917 = vmul.f32 %v1095, %v1916
        %v1918 = vmul.f32 %v1096, %v1916
        %v1919 = vmul.f32 %v1097, %v1916
        %v1920 = vmul.f32 %v1098, %v1916
        %v1921 = vmul.f32 %v1099, %v1916
        %v1922 = vmul.f32 %v1100, %v1916
        %v1923 = vmul.f32 %v1101, %v1916
        %v1924 = vmul.f32 %v1102, %v1916
        %v1925 = vmul.f32 %v1103, %v1916
        %v1926 = vmul.f32 %v1104, %v1916
        %v1927 = vmul.f32 %v1105, %v1916
        %v1928 = vmul.f32 %v1106, %v1916
        %v1929 = vmul.f32 %v1107, %v1916
        %v1930 = vmul.f32 %v1108, %v1916
        %v1931 = vmul.f32 %v1109, %v1916
        %v1932 = vmul.f32 %v1110, %v1916
        %v1933 = vadd.f32 %v1917, 0.5
        %v1934 = vadd.f32 %v1918, 0.5
        %v1935 = vadd.f32 %v1919, 0.5
        %v1936 = vadd.f32 %v1920, 0.5
        %v1937 = vadd.f32 %v1921, 0.5
        %v1938 = vadd.f32 %v1922, 0.5
        %v1939 = vadd.f32 %v1923, 0.5
        %v1940 = vadd.f32 %v1924, 0.5
        %v1941 = vadd.f32 %v1925, 0.5
        %v1942 = vadd.f32 %v1926, 0.5
        %v1943 = vadd.f32 %v1927, 0.5
        %v1944 = vadd.f32 %v1928, 0.5
        %v1945 = vadd.f32 %v1929, 0.5
        %v1946 = vadd.f32 %v1930, 0.5
        %v1947 = vadd.f32 %v1931, 0.5
        %v1948 = vadd.f32 %v1932, 0.5
        %v1949 = vperm.slane %v399, 0
        %v1950 = vpow.f32 %v1933, %v1949
        %v1951 = vpow.f32 %v1934, %v1949
        %v1952 = vpow.f32 %v1935, %v1949
        %v1953 = vpow.f32 %v1936, %v1949
        %v1954 = vpow.f32 %v1937, %v1949
        %v1955 = vpow.f32 %v1938, %v1949
        %v1956 = vpow.f32 %v1939, %v1949
        %v1957 = vpow.f32 %v1940, %v1949
        %v1958 = vpow.f32 %v1941, %v1949
        %v1959 = vpow.f32 %v1942, %v1949
        %v1960 = vpow.f32 %v1943, %v1949
        %v1961 = vpow.f32 %v1944, %v1949
        %v1962 = vpow.f32 %v1945, %v1949
        %v1963 = vpow.f32 %v1946, %v1949
        %v1964 = vpow.f32 %v1947, %v1949
        %v1965 = vpow.f32 %v1948, %v1949
        %v1966 = vsub.f32 %v1950, 1.0
        %v1967 = vsub.f32 %v1951, 1.0
        %v1968 = vsub.f32 %v1952, 1.0
        %v1969 = vsub.f32 %v1953, 1.0
        %v1970 = vsub.f32 %v1954, 1.0
        %v1971 = vsub.f32 %v1955, 1.0
        %v1972 = vsub.f32 %v1956, 1.0
        %v1973 = vsub.f32 %v1957, 1.0
        %v1974 = vsub.f32 %v1958, 1.0
        %v1975 = vsub.f32 %v1959, 1.0
        %v1976 = vsub.f32 %v1960, 1.0
        %v1977 = vsub.f32 %v1961, 1.0
        %v1978 = vsub.f32 %v1962, 1.0
        %v1979 = vsub.f32 %v1963, 1.0
        %v1980 = vsub.f32 %v1964, 1.0
        %v1981 = vsub.f32 %v1965, 1.0
        %v1982 = vperm.slane %v400, 0
        %v1983 = vmul.f32 %v1982, %v1966
        %v1984 = vmul.f32 %v1982, %v1967
        %v1985 = vmul.f32 %v1982, %v1968
        %v1986 = vmul.f32 %v1982, %v1969
        %v1987 = vmul.f32 %v1982, %v1970
        %v1988 = vmul.f32 %v1982, %v1971
        %v1989 = vmul.f32 %v1982, %v1972
        %v1990 = vmul.f32 %v1982, %v1973
        %v1991 = vmul.f32 %v1982, %v1974
        %v1992 = vmul.f32 %v1982, %v1975
        %v1993 = vmul.f32 %v1982, %v1976
        %v1994 = vmul.f32 %v1982, %v1977
        %v1995 = vmul.f32 %v1982, %v1978
        %v1996 = vmul.f32 %v1982, %v1979
        %v1997 = vmul.f32 %v1982, %v1980
        %v1998 = vmul.f32 %v1982, %v1981
        %vm1999 = vcmp.lt.f32.partialorder %v1095, %v1435
        %vm2000 = vcmp.lt.f32.partialorder %v1096, %v1435
        %vm2001 = vcmp.lt.f32.partialorder %v1097, %v1435
        %vm2002 = vcmp.lt.f32.partialorder %v1098, %v1435
        %vm2003 = vcmp.lt.f32.partialorder %v1099, %v1435
        %vm2004 = vcmp.lt.f32.partialorder %v1100, %v1435
        %vm2005 = vcmp.lt.f32.partialorder %v1101, %v1435
        %vm2006 = vcmp.lt.f32.partialorder %v1102, %v1435
        %vm2007 = vcmp.lt.f32.partialorder %v1103, %v1435
        %vm2008 = vcmp.lt.f32.partialorder %v1104, %v1435
        %vm2009 = vcmp.lt.f32.partialorder %v1105, %v1435
        %vm2010 = vcmp.lt.f32.partialorder %v1106, %v1435
        %vm2011 = vcmp.lt.f32.partialorder %v1107, %v1435
        %vm2012 = vcmp.lt.f32.partialorder %v1108, %v1435
        %vm2013 = vcmp.lt.f32.partialorder %v1109, %v1435
        %vm2014 = vcmp.lt.f32.partialorder %v1110, %v1435
        %v2015 = vsel %vm1999, 0.0, %v1983
        %v2016 = vsel %vm2000, 0.0, %v1984
        %v2017 = vsel %vm2001, 0.0, %v1985
        %v2018 = vsel %vm2002, 0.0, %v1986
        %v2019 = vsel %vm2003, 0.0, %v1987
        %v2020 = vsel %vm2004, 0.0, %v1988
        %v2021 = vsel %vm2005, 0.0, %v1989
        %v2022 = vsel %vm2006, 0.0, %v1990
        %v2023 = vsel %vm2007, 0.0, %v1991
        %v2024 = vsel %vm2008, 0.0, %v1992
        %v2025 = vsel %vm2009, 0.0, %v1993
        %v2026 = vsel %vm2010, 0.0, %v1994
        %v2027 = vsel %vm2011, 0.0, %v1995
        %v2028 = vsel %vm2012, 0.0, %v1996
        %v2029 = vsel %vm2013, 0.0, %v1997
        %v2030 = vsel %vm2014, 0.0, %v1998
        %v2031 = vmul.f32 %v1900, %v1916
        %v2032 = vmul.f32 %v1901, %v1916
        %v2033 = vmul.f32 %v1902, %v1916
        %v2034 = vmul.f32 %v1903, %v1916
        %v2035 = vmul.f32 %v1904, %v1916
        %v2036 = vmul.f32 %v1905, %v1916
        %v2037 = vmul.f32 %v1906, %v1916
        %v2038 = vmul.f32 %v1907, %v1916
        %v2039 = vmul.f32 %v1908, %v1916
        %v2040 = vmul.f32 %v1909, %v1916
        %v2041 = vmul.f32 %v1910, %v1916
        %v2042 = vmul.f32 %v1911, %v1916
        %v2043 = vmul.f32 %v1912, %v1916
        %v2044 = vmul.f32 %v1913, %v1916
        %v2045 = vmul.f32 %v1914, %v1916
        %v2046 = vmul.f32 %v1915, %v1916
        %v2047 = vadd.f32 %v2031, 0.5
        %v2048 = vadd.f32 %v2032, 0.5
        %v2049 = vadd.f32 %v2033, 0.5
        %v2050 = vadd.f32 %v2034, 0.5
        %v2051 = vadd.f32 %v2035, 0.5
        %v2052 = vadd.f32 %v2036, 0.5
        %v2053 = vadd.f32 %v2037, 0.5
        %v2054 = vadd.f32 %v2038, 0.5
        %v2055 = vadd.f32 %v2039, 0.5
        %v2056 = vadd.f32 %v2040, 0.5
        %v2057 = vadd.f32 %v2041, 0.5
        %v2058 = vadd.f32 %v2042, 0.5
        %v2059 = vadd.f32 %v2043, 0.5
        %v2060 = vadd.f32 %v2044, 0.5
        %v2061 = vadd.f32 %v2045, 0.5
        %v2062 = vadd.f32 %v2046, 0.5
        %v2063 = vpow.f32 %v2047, %v1949
        %v2064 = vpow.f32 %v2048, %v1949
        %v2065 = vpow.f32 %v2049, %v1949
        %v2066 = vpow.f32 %v2050, %v1949
        %v2067 = vpow.f32 %v2051, %v1949
        %v2068 = vpow.f32 %v2052, %v1949
        %v2069 = vpow.f32 %v2053, %v1949
        %v2070 = vpow.f32 %v2054, %v1949
        %v2071 = vpow.f32 %v2055, %v1949
        %v2072 = vpow.f32 %v2056, %v1949
        %v2073 = vpow.f32 %v2057, %v1949
        %v2074 = vpow.f32 %v2058, %v1949
        %v2075 = vpow.f32 %v2059, %v1949
        %v2076 = vpow.f32 %v2060, %v1949
        %v2077 = vpow.f32 %v2061, %v1949
        %v2078 = vpow.f32 %v2062, %v1949
        %v2079 = vsub.f32 %v2063, 1.0
        %v2080 = vsub.f32 %v2064, 1.0
        %v2081 = vsub.f32 %v2065, 1.0
        %v2082 = vsub.f32 %v2066, 1.0
        %v2083 = vsub.f32 %v2067, 1.0
        %v2084 = vsub.f32 %v2068, 1.0
        %v2085 = vsub.f32 %v2069, 1.0
        %v2086 = vsub.f32 %v2070, 1.0
        %v2087 = vsub.f32 %v2071, 1.0
        %v2088 = vsub.f32 %v2072, 1.0
        %v2089 = vsub.f32 %v2073, 1.0
        %v2090 = vsub.f32 %v2074, 1.0
        %v2091 = vsub.f32 %v2075, 1.0
        %v2092 = vsub.f32 %v2076, 1.0
        %v2093 = vsub.f32 %v2077, 1.0
        %v2094 = vsub.f32 %v2078, 1.0
        %v2095 = vmul.f32 %v1982, %v2079
        %v2096 = vmul.f32 %v1982, %v2080
        %v2097 = vmul.f32 %v1982, %v2081
        %v2098 = vmul.f32 %v1982, %v2082
        %v2099 = vmul.f32 %v1982, %v2083
        %v2100 = vmul.f32 %v1982, %v2084
        %v2101 = vmul.f32 %v1982, %v2085
        %v2102 = vmul.f32 %v1982, %v2086
        %v2103 = vmul.f32 %v1982, %v2087
        %v2104 = vmul.f32 %v1982, %v2088
        %v2105 = vmul.f32 %v1982, %v2089
        %v2106 = vmul.f32 %v1982, %v2090
        %v2107 = vmul.f32 %v1982, %v2091
        %v2108 = vmul.f32 %v1982, %v2092
        %v2109 = vmul.f32 %v1982, %v2093
        %v2110 = vmul.f32 %v1982, %v2094
        %vm2111 = vcmp.lt.f32.partialorder %v1900, %v1435
        %vm2112 = vcmp.lt.f32.partialorder %v1901, %v1435
        %vm2113 = vcmp.lt.f32.partialorder %v1902, %v1435
        %vm2114 = vcmp.lt.f32.partialorder %v1903, %v1435
        %vm2115 = vcmp.lt.f32.partialorder %v1904, %v1435
        %vm2116 = vcmp.lt.f32.partialorder %v1905, %v1435
        %vm2117 = vcmp.lt.f32.partialorder %v1906, %v1435
        %vm2118 = vcmp.lt.f32.partialorder %v1907, %v1435
        %vm2119 = vcmp.lt.f32.partialorder %v1908, %v1435
        %vm2120 = vcmp.lt.f32.partialorder %v1909, %v1435
        %vm2121 = vcmp.lt.f32.partialorder %v1910, %v1435
        %vm2122 = vcmp.lt.f32.partialorder %v1911, %v1435
        %vm2123 = vcmp.lt.f32.partialorder %v1912, %v1435
        %vm2124 = vcmp.lt.f32.partialorder %v1913, %v1435
        %vm2125 = vcmp.lt.f32.partialorder %v1914, %v1435
        %vm2126 = vcmp.lt.f32.partialorder %v1915, %v1435
        %v2127 = vsel %vm2111, 0.0, %v2095
        %v2128 = vsel %vm2112, 0.0, %v2096
        %v2129 = vsel %vm2113, 0.0, %v2097
        %v2130 = vsel %vm2114, 0.0, %v2098
        %v2131 = vsel %vm2115, 0.0, %v2099
        %v2132 = vsel %vm2116, 0.0, %v2100
        %v2133 = vsel %vm2117, 0.0, %v2101
        %v2134 = vsel %vm2118, 0.0, %v2102
        %v2135 = vsel %vm2119, 0.0, %v2103
        %v2136 = vsel %vm2120, 0.0, %v2104
        %v2137 = vsel %vm2121, 0.0, %v2105
        %v2138 = vsel %vm2122, 0.0, %v2106
        %v2139 = vsel %vm2123, 0.0, %v2107
        %v2140 = vsel %vm2124, 0.0, %v2108
        %v2141 = vsel %vm2125, 0.0, %v2109
        %v2142 = vsel %vm2126, 0.0, %v2110
        %v2143 = vsub.f32 %v2127, %v2015
        %v2144 = vsub.f32 %v2128, %v2016
        %v2145 = vsub.f32 %v2129, %v2017
        %v2146 = vsub.f32 %v2130, %v2018
        %v2147 = vsub.f32 %v2131, %v2019
        %v2148 = vsub.f32 %v2132, %v2020
        %v2149 = vsub.f32 %v2133, %v2021
        %v2150 = vsub.f32 %v2134, %v2022
        %v2151 = vsub.f32 %v2135, %v2023
        %v2152 = vsub.f32 %v2136, %v2024
        %v2153 = vsub.f32 %v2137, %v2025
        %v2154 = vsub.f32 %v2138, %v2026
        %v2155 = vsub.f32 %v2139, %v2027
        %v2156 = vsub.f32 %v2140, %v2028
        %v2157 = vsub.f32 %v2141, %v2029
        %v2158 = vsub.f32 %v2142, %v2030
        %v2159 = vand.u32 2147483647, %v2143
        %v2160 = vand.u32 2147483647, %v2144
        %v2161 = vand.u32 2147483647, %v2145
        %v2162 = vand.u32 2147483647, %v2146
        %v2163 = vand.u32 2147483647, %v2147
        %v2164 = vand.u32 2147483647, %v2148
        %v2165 = vand.u32 2147483647, %v2149
        %v2166 = vand.u32 2147483647, %v2150
        %v2167 = vand.u32 2147483647, %v2151
        %v2168 = vand.u32 2147483647, %v2152
        %v2169 = vand.u32 2147483647, %v2153
        %v2170 = vand.u32 2147483647, %v2154
        %v2171 = vand.u32 2147483647, %v2155
        %v2172 = vand.u32 2147483647, %v2156
        %v2173 = vand.u32 2147483647, %v2157
        %v2174 = vand.u32 2147483647, %v2158
        %v2175 = vmin.f32 %v2015, %v2127
        %v2176 = vmin.f32 %v2016, %v2128
        %v2177 = vmin.f32 %v2017, %v2129
        %v2178 = vmin.f32 %v2018, %v2130
        %v2179 = vmin.f32 %v2019, %v2131
        %v2180 = vmin.f32 %v2020, %v2132
        %v2181 = vmin.f32 %v2021, %v2133
        %v2182 = vmin.f32 %v2022, %v2134
        %v2183 = vmin.f32 %v2023, %v2135
        %v2184 = vmin.f32 %v2024, %v2136
        %v2185 = vmin.f32 %v2025, %v2137
        %v2186 = vmin.f32 %v2026, %v2138
        %v2187 = vmin.f32 %v2027, %v2139
        %v2188 = vmin.f32 %v2028, %v2140
        %v2189 = vmin.f32 %v2029, %v2141
        %v2190 = vmin.f32 %v2030, %v2142
        %v2191 = vmul.f32 %v2175, 0.25
        %v2192 = vmul.f32 %v2176, 0.25
        %v2193 = vmul.f32 %v2177, 0.25
        %v2194 = vmul.f32 %v2178, 0.25
        %v2195 = vmul.f32 %v2179, 0.25
        %v2196 = vmul.f32 %v2180, 0.25
        %v2197 = vmul.f32 %v2181, 0.25
        %v2198 = vmul.f32 %v2182, 0.25
        %v2199 = vmul.f32 %v2183, 0.25
        %v2200 = vmul.f32 %v2184, 0.25
        %v2201 = vmul.f32 %v2185, 0.25
        %v2202 = vmul.f32 %v2186, 0.25
        %v2203 = vmul.f32 %v2187, 0.25
        %v2204 = vmul.f32 %v2188, 0.25
        %v2205 = vmul.f32 %v2189, 0.25
        %v2206 = vmul.f32 %v2190, 0.25
        %v2207 = vsub.f32 %v2159, %v2191
        %v2208 = vsub.f32 %v2160, %v2192
        %v2209 = vsub.f32 %v2161, %v2193
        %v2210 = vsub.f32 %v2162, %v2194
        %v2211 = vsub.f32 %v2163, %v2195
        %v2212 = vsub.f32 %v2164, %v2196
        %v2213 = vsub.f32 %v2165, %v2197
        %v2214 = vsub.f32 %v2166, %v2198
        %v2215 = vsub.f32 %v2167, %v2199
        %v2216 = vsub.f32 %v2168, %v2200
        %v2217 = vsub.f32 %v2169, %v2201
        %v2218 = vsub.f32 %v2170, %v2202
        %v2219 = vsub.f32 %v2171, %v2203
        %v2220 = vsub.f32 %v2172, %v2204
        %v2221 = vsub.f32 %v2173, %v2205
        %v2222 = vsub.f32 %v2174, %v2206
        %v2223 = vmax.f32 %v2207, 0.0
        %v2224 = vmax.f32 %v2208, 0.0
        %v2225 = vmax.f32 %v2209, 0.0
        %v2226 = vmax.f32 %v2210, 0.0
        %v2227 = vmax.f32 %v2211, 0.0
        %v2228 = vmax.f32 %v2212, 0.0
        %v2229 = vmax.f32 %v2213, 0.0
        %v2230 = vmax.f32 %v2214, 0.0
        %v2231 = vmax.f32 %v2215, 0.0
        %v2232 = vmax.f32 %v2216, 0.0
        %v2233 = vmax.f32 %v2217, 0.0
        %v2234 = vmax.f32 %v2218, 0.0
        %v2235 = vmax.f32 %v2219, 0.0
        %v2236 = vmax.f32 %v2220, 0.0
        %v2237 = vmax.f32 %v2221, 0.0
        %v2238 = vmax.f32 %v2222, 0.0
        %v2239 = vadd.f32 %v1900, 50.0
        %v2240 = vadd.f32 %v1901, 50.0
        %v2241 = vadd.f32 %v1902, 50.0
        %v2242 = vadd.f32 %v1903, 50.0
        %v2243 = vadd.f32 %v1904, 50.0
        %v2244 = vadd.f32 %v1905, 50.0
        %v2245 = vadd.f32 %v1906, 50.0
        %v2246 = vadd.f32 %v1907, 50.0
        %v2247 = vadd.f32 %v1908, 50.0
        %v2248 = vadd.f32 %v1909, 50.0
        %v2249 = vadd.f32 %v1910, 50.0
        %v2250 = vadd.f32 %v1911, 50.0
        %v2251 = vadd.f32 %v1912, 50.0
        %v2252 = vadd.f32 %v1913, 50.0
        %v2253 = vadd.f32 %v1914, 50.0
        %v2254 = vadd.f32 %v1915, 50.0
        %v2255 = vadd.f32 %v1095, 50.0
        %v2256 = vadd.f32 %v1096, 50.0
        %v2257 = vadd.f32 %v1097, 50.0
        %v2258 = vadd.f32 %v1098, 50.0
        %v2259 = vadd.f32 %v1099, 50.0
        %v2260 = vadd.f32 %v1100, 50.0
        %v2261 = vadd.f32 %v1101, 50.0
        %v2262 = vadd.f32 %v1102, 50.0
        %v2263 = vadd.f32 %v1103, 50.0
        %v2264 = vadd.f32 %v1104, 50.0
        %v2265 = vadd.f32 %v1105, 50.0
        %v2266 = vadd.f32 %v1106, 50.0
        %v2267 = vadd.f32 %v1107, 50.0
        %v2268 = vadd.f32 %v1108, 50.0
        %v2269 = vadd.f32 %v1109, 50.0
        %v2270 = vadd.f32 %v1110, 50.0
        %v2271 = vrcp.pop %v2255
        %v2272 = vmul.f32 %v2255, %v2271
        %v2273 = vsub.f32 1.0, %v2272
        %v2274 = vmul.f32 %v2271, %v2273
        %v2275 = vadd.f32 %v2271, %v2274
        %vm2276 = vweird.f32 %v2255
        %vm2277 = vweird.f32 %v2271
        %vm2278 = vmor %vm2276, %vm2277
        %v2279 = vsel %vm2278, %v2271, %v2275
        %v2280 = vand.u32 2147483647, %v2255
        %vm2281 = vcmp.eq.f32.partialorder %v2280, 8.507059e+37
        %v2282 = vand.u32 %v2255, 2147483648
        %v2283 = vor.u32 1.1754944e-38, %v2282
        %v2284 = vsel %vm2281, %v2283, %v2279
        %v2285 = vmul.f32 %v2239, %v2284
        %v2286 = vrcp.pop %v2256
        %v2287 = vmul.f32 %v2256, %v2286
        %v2288 = vsub.f32 1.0, %v2287
        %v2289 = vmul.f32 %v2286, %v2288
        %v2290 = vadd.f32 %v2286, %v2289
        %vm2291 = vweird.f32 %v2256
        %vm2292 = vweird.f32 %v2286
        %vm2293 = vmor %vm2291, %vm2292
        %v2294 = vsel %vm2293, %v2286, %v2290
        %v2295 = vand.u32 2147483647, %v2256
        %vm2296 = vcmp.eq.f32.partialorder %v2295, 8.507059e+37
        %v2297 = vand.u32 %v2256, 2147483648
        %v2298 = vor.u32 1.1754944e-38, %v2297
        %v2299 = vsel %vm2296, %v2298, %v2294
        %v2300 = vmul.f32 %v2240, %v2299
        %v2301 = vrcp.pop %v2257
        %v2302 = vmul.f32 %v2257, %v2301
        %v2303 = vsub.f32 1.0, %v2302
        %v2304 = vmul.f32 %v2301, %v2303
        %v2305 = vadd.f32 %v2301, %v2304
        %vm2306 = vweird.f32 %v2257
        %vm2307 = vweird.f32 %v2301
        %vm2308 = vmor %vm2306, %vm2307
        %v2309 = vsel %vm2308, %v2301, %v2305
        %v2310 = vand.u32 2147483647, %v2257
        %vm2311 = vcmp.eq.f32.partialorder %v2310, 8.507059e+37
        %v2312 = vand.u32 %v2257, 2147483648
        %v2313 = vor.u32 1.1754944e-38, %v2312
        %v2314 = vsel %vm2311, %v2313, %v2309
        %v2315 = vmul.f32 %v2241, %v2314
        %v2316 = vrcp.pop %v2258
        %v2317 = vmul.f32 %v2258, %v2316
        %v2318 = vsub.f32 1.0, %v2317
        %v2319 = vmul.f32 %v2316, %v2318
        %v2320 = vadd.f32 %v2316, %v2319
        %vm2321 = vweird.f32 %v2258
        %vm2322 = vweird.f32 %v2316
        %vm2323 = vmor %vm2321, %vm2322
        %v2324 = vsel %vm2323, %v2316, %v2320
        %v2325 = vand.u32 2147483647, %v2258
        %vm2326 = vcmp.eq.f32.partialorder %v2325, 8.507059e+37
        %v2327 = vand.u32 %v2258, 2147483648
        %v2328 = vor.u32 1.1754944e-38, %v2327
        %v2329 = vsel %vm2326, %v2328, %v2324
        %v2330 = vmul.f32 %v2242, %v2329
        %v2331 = vrcp.pop %v2259
        %v2332 = vmul.f32 %v2259, %v2331
        %v2333 = vsub.f32 1.0, %v2332
        %v2334 = vmul.f32 %v2331, %v2333
        %v2335 = vadd.f32 %v2331, %v2334
        %vm2336 = vweird.f32 %v2259
        %vm2337 = vweird.f32 %v2331
        %vm2338 = vmor %vm2336, %vm2337
        %v2339 = vsel %vm2338, %v2331, %v2335
        %v2340 = vand.u32 2147483647, %v2259
        %vm2341 = vcmp.eq.f32.partialorder %v2340, 8.507059e+37
        %v2342 = vand.u32 %v2259, 2147483648
        %v2343 = vor.u32 1.1754944e-38, %v2342
        %v2344 = vsel %vm2341, %v2343, %v2339
        %v2345 = vmul.f32 %v2243, %v2344
        %v2346 = vrcp.pop %v2260
        %v2347 = vmul.f32 %v2260, %v2346
        %v2348 = vsub.f32 1.0, %v2347
        %v2349 = vmul.f32 %v2346, %v2348
        %v2350 = vadd.f32 %v2346, %v2349
        %vm2351 = vweird.f32 %v2260
        %vm2352 = vweird.f32 %v2346
        %vm2353 = vmor %vm2351, %vm2352
        %v2354 = vsel %vm2353, %v2346, %v2350
        %v2355 = vand.u32 2147483647, %v2260
        %vm2356 = vcmp.eq.f32.partialorder %v2355, 8.507059e+37
        %v2357 = vand.u32 %v2260, 2147483648
        %v2358 = vor.u32 1.1754944e-38, %v2357
        %v2359 = vsel %vm2356, %v2358, %v2354
        %v2360 = vmul.f32 %v2244, %v2359
        %v2361 = vrcp.pop %v2261
        %v2362 = vmul.f32 %v2261, %v2361
        %v2363 = vsub.f32 1.0, %v2362
        %v2364 = vmul.f32 %v2361, %v2363
        %v2365 = vadd.f32 %v2361, %v2364
        %vm2366 = vweird.f32 %v2261
        %vm2367 = vweird.f32 %v2361
        %vm2368 = vmor %vm2366, %vm2367
        %v2369 = vsel %vm2368, %v2361, %v2365
        %v2370 = vand.u32 2147483647, %v2261
        %vm2371 = vcmp.eq.f32.partialorder %v2370, 8.507059e+37
        %v2372 = vand.u32 %v2261, 2147483648
        %v2373 = vor.u32 1.1754944e-38, %v2372
        %v2374 = vsel %vm2371, %v2373, %v2369
        %v2375 = vmul.f32 %v2245, %v2374
        %v2376 = vrcp.pop %v2262
        %v2377 = vmul.f32 %v2262, %v2376
        %v2378 = vsub.f32 1.0, %v2377
        %v2379 = vmul.f32 %v2376, %v2378
        %v2380 = vadd.f32 %v2376, %v2379
        %vm2381 = vweird.f32 %v2262
        %vm2382 = vweird.f32 %v2376
        %vm2383 = vmor %vm2381, %vm2382
        %v2384 = vsel %vm2383, %v2376, %v2380
        %v2385 = vand.u32 2147483647, %v2262
        %vm2386 = vcmp.eq.f32.partialorder %v2385, 8.507059e+37
        %v2387 = vand.u32 %v2262, 2147483648
        %v2388 = vor.u32 1.1754944e-38, %v2387
        %v2389 = vsel %vm2386, %v2388, %v2384
        %v2390 = vmul.f32 %v2246, %v2389
        %v2391 = vrcp.pop %v2263
        %v2392 = vmul.f32 %v2263, %v2391
        %v2393 = vsub.f32 1.0, %v2392
        %v2394 = vmul.f32 %v2391, %v2393
        %v2395 = vadd.f32 %v2391, %v2394
        %vm2396 = vweird.f32 %v2263
        %vm2397 = vweird.f32 %v2391
        %vm2398 = vmor %vm2396, %vm2397
        %v2399 = vsel %vm2398, %v2391, %v2395
        %v2400 = vand.u32 2147483647, %v2263
        %vm2401 = vcmp.eq.f32.partialorder %v2400, 8.507059e+37
        %v2402 = vand.u32 %v2263, 2147483648
        %v2403 = vor.u32 1.1754944e-38, %v2402
        %v2404 = vsel %vm2401, %v2403, %v2399
        %v2405 = vmul.f32 %v2247, %v2404
        %v2406 = vrcp.pop %v2264
        %v2407 = vmul.f32 %v2264, %v2406
        %v2408 = vsub.f32 1.0, %v2407
        %v2409 = vmul.f32 %v2406, %v2408
        %v2410 = vadd.f32 %v2406, %v2409
        %vm2411 = vweird.f32 %v2264
        %vm2412 = vweird.f32 %v2406
        %vm2413 = vmor %vm2411, %vm2412
        %v2414 = vsel %vm2413, %v2406, %v2410
        %v2415 = vand.u32 2147483647, %v2264
        %vm2416 = vcmp.eq.f32.partialorder %v2415, 8.507059e+37
        %v2417 = vand.u32 %v2264, 2147483648
        %v2418 = vor.u32 1.1754944e-38, %v2417
        %v2419 = vsel %vm2416, %v2418, %v2414
        %v2420 = vmul.f32 %v2248, %v2419
        %v2421 = vrcp.pop %v2265
        %v2422 = vmul.f32 %v2265, %v2421
        %v2423 = vsub.f32 1.0, %v2422
        %v2424 = vmul.f32 %v2421, %v2423
        %v2425 = vadd.f32 %v2421, %v2424
        %vm2426 = vweird.f32 %v2265
        %vm2427 = vweird.f32 %v2421
        %vm2428 = vmor %vm2426, %vm2427
        %v2429 = vsel %vm2428, %v2421, %v2425
        %v2430 = vand.u32 2147483647, %v2265
        %vm2431 = vcmp.eq.f32.partialorder %v2430, 8.507059e+37
        %v2432 = vand.u32 %v2265, 2147483648
        %v2433 = vor.u32 1.1754944e-38, %v2432
        %v2434 = vsel %vm2431, %v2433, %v2429
        %v2435 = vmul.f32 %v2249, %v2434
        %v2436 = vrcp.pop %v2266
        %v2437 = vmul.f32 %v2266, %v2436
        %v2438 = vsub.f32 1.0, %v2437
        %v2439 = vmul.f32 %v2436, %v2438
        %v2440 = vadd.f32 %v2436, %v2439
        %vm2441 = vweird.f32 %v2266
        %vm2442 = vweird.f32 %v2436
        %vm2443 = vmor %vm2441, %vm2442
        %v2444 = vsel %vm2443, %v2436, %v2440
        %v2445 = vand.u32 2147483647, %v2266
        %vm2446 = vcmp.eq.f32.partialorder %v2445, 8.507059e+37
        %v2447 = vand.u32 %v2266, 2147483648
        %v2448 = vor.u32 1.1754944e-38, %v2447
        %v2449 = vsel %vm2446, %v2448, %v2444
        %v2450 = vmul.f32 %v2250, %v2449
        %v2451 = vrcp.pop %v2267
        %v2452 = vmul.f32 %v2267, %v2451
        %v2453 = vsub.f32 1.0, %v2452
        %v2454 = vmul.f32 %v2451, %v2453
        %v2455 = vadd.f32 %v2451, %v2454
        %vm2456 = vweird.f32 %v2267
        %vm2457 = vweird.f32 %v2451
        %vm2458 = vmor %vm2456, %vm2457
        %v2459 = vsel %vm2458, %v2451, %v2455
        %v2460 = vand.u32 2147483647, %v2267
        %vm2461 = vcmp.eq.f32.partialorder %v2460, 8.507059e+37
        %v2462 = vand.u32 %v2267, 2147483648
        %v2463 = vor.u32 1.1754944e-38, %v2462
        %v2464 = vsel %vm2461, %v2463, %v2459
        %v2465 = vmul.f32 %v2251, %v2464
        %v2466 = vrcp.pop %v2268
        %v2467 = vmul.f32 %v2268, %v2466
        %v2468 = vsub.f32 1.0, %v2467
        %v2469 = vmul.f32 %v2466, %v2468
        %v2470 = vadd.f32 %v2466, %v2469
        %vm2471 = vweird.f32 %v2268
        %vm2472 = vweird.f32 %v2466
        %vm2473 = vmor %vm2471, %vm2472
        %v2474 = vsel %vm2473, %v2466, %v2470
        %v2475 = vand.u32 2147483647, %v2268
        %vm2476 = vcmp.eq.f32.partialorder %v2475, 8.507059e+37
        %v2477 = vand.u32 %v2268, 2147483648
        %v2478 = vor.u32 1.1754944e-38, %v2477
        %v2479 = vsel %vm2476, %v2478, %v2474
        %v2480 = vmul.f32 %v2252, %v2479
        %v2481 = vrcp.pop %v2269
        %v2482 = vmul.f32 %v2269, %v2481
        %v2483 = vsub.f32 1.0, %v2482
        %v2484 = vmul.f32 %v2481, %v2483
        %v2485 = vadd.f32 %v2481, %v2484
        %vm2486 = vweird.f32 %v2269
        %vm2487 = vweird.f32 %v2481
        %vm2488 = vmor %vm2486, %vm2487
        %v2489 = vsel %vm2488, %v2481, %v2485
        %v2490 = vand.u32 2147483647, %v2269
        %vm2491 = vcmp.eq.f32.partialorder %v2490, 8.507059e+37
        %v2492 = vand.u32 %v2269, 2147483648
        %v2493 = vor.u32 1.1754944e-38, %v2492
        %v2494 = vsel %vm2491, %v2493, %v2489
        %v2495 = vmul.f32 %v2253, %v2494
        %v2496 = vrcp.pop %v2270
        %v2497 = vmul.f32 %v2270, %v2496
        %v2498 = vsub.f32 1.0, %v2497
        %v2499 = vmul.f32 %v2496, %v2498
        %v2500 = vadd.f32 %v2496, %v2499
        %vm2501 = vweird.f32 %v2270
        %vm2502 = vweird.f32 %v2496
        %vm2503 = vmor %vm2501, %vm2502
        %v2504 = vsel %vm2503, %v2496, %v2500
        %v2505 = vand.u32 2147483647, %v2270
        %vm2506 = vcmp.eq.f32.partialorder %v2505, 8.507059e+37
        %v2507 = vand.u32 %v2270, 2147483648
        %v2508 = vor.u32 1.1754944e-38, %v2507
        %v2509 = vsel %vm2506, %v2508, %v2504
        %v2510 = vmul.f32 %v2254, %v2509
        %v2511 = vpow.f32 %v2285, 1.2
        %v2512 = vpow.f32 %v2300, 1.2
        %v2513 = vpow.f32 %v2315, 1.2
        %v2514 = vpow.f32 %v2330, 1.2
        %v2515 = vpow.f32 %v2345, 1.2
        %v2516 = vpow.f32 %v2360, 1.2
        %v2517 = vpow.f32 %v2375, 1.2
        %v2518 = vpow.f32 %v2390, 1.2
        %v2519 = vpow.f32 %v2405, 1.2
        %v2520 = vpow.f32 %v2420, 1.2
        %v2521 = vpow.f32 %v2435, 1.2
        %v2522 = vpow.f32 %v2450, 1.2
        %v2523 = vpow.f32 %v2465, 1.2
        %v2524 = vpow.f32 %v2480, 1.2
        %v2525 = vpow.f32 %v2495, 1.2
        %v2526 = vpow.f32 %v2510, 1.2
        %vm2527 = vcmp.lt.f32.partialorder %v2511, 3.0
        %vm2528 = vcmp.lt.f32.partialorder %v2512, 3.0
        %vm2529 = vcmp.lt.f32.partialorder %v2513, 3.0
        %vm2530 = vcmp.lt.f32.partialorder %v2514, 3.0
        %vm2531 = vcmp.lt.f32.partialorder %v2515, 3.0
        %vm2532 = vcmp.lt.f32.partialorder %v2516, 3.0
        %vm2533 = vcmp.lt.f32.partialorder %v2517, 3.0
        %vm2534 = vcmp.lt.f32.partialorder %v2518, 3.0
        %vm2535 = vcmp.lt.f32.partialorder %v2519, 3.0
        %vm2536 = vcmp.lt.f32.partialorder %v2520, 3.0
        %vm2537 = vcmp.lt.f32.partialorder %v2521, 3.0
        %vm2538 = vcmp.lt.f32.partialorder %v2522, 3.0
        %vm2539 = vcmp.lt.f32.partialorder %v2523, 3.0
        %vm2540 = vcmp.lt.f32.partialorder %v2524, 3.0
        %vm2541 = vcmp.lt.f32.partialorder %v2525, 3.0
        %vm2542 = vcmp.lt.f32.partialorder %v2526, 3.0
        %v2543 = vmin.f32 %v2511, 12.0
        %v2544 = vmin.f32 %v2512, 12.0
        %v2545 = vmin.f32 %v2513, 12.0
        %v2546 = vmin.f32 %v2514, 12.0
        %v2547 = vmin.f32 %v2515, 12.0
        %v2548 = vmin.f32 %v2516, 12.0
        %v2549 = vmin.f32 %v2517, 12.0
        %v2550 = vmin.f32 %v2518, 12.0
        %v2551 = vmin.f32 %v2519, 12.0
        %v2552 = vmin.f32 %v2520, 12.0
        %v2553 = vmin.f32 %v2521, 12.0
        %v2554 = vmin.f32 %v2522, 12.0
        %v2555 = vmin.f32 %v2523, 12.0
        %v2556 = vmin.f32 %v2524, 12.0
        %v2557 = vmin.f32 %v2525, 12.0
        %v2558 = vmin.f32 %v2526, 12.0
        %v2559 = vsel %vm2527, 0.0, %v2543
        %v2560 = vsel %vm2528, 0.0, %v2544
        %v2561 = vsel %vm2529, 0.0, %v2545
        %v2562 = vsel %vm2530, 0.0, %v2546
        %v2563 = vsel %vm2531, 0.0, %v2547
        %v2564 = vsel %vm2532, 0.0, %v2548
        %v2565 = vsel %vm2533, 0.0, %v2549
        %v2566 = vsel %vm2534, 0.0, %v2550
        %v2567 = vsel %vm2535, 0.0, %v2551
        %v2568 = vsel %vm2536, 0.0, %v2552
        %v2569 = vsel %vm2537, 0.0, %v2553
        %v2570 = vsel %vm2538, 0.0, %v2554
        %v2571 = vsel %vm2539, 0.0, %v2555
        %v2572 = vsel %vm2540, 0.0, %v2556
        %v2573 = vsel %vm2541, 0.0, %v2557
        %v2574 = vsel %vm2542, 0.0, %v2558
        %v2575 = vmul.f32 %v2559, %v2223
        %v2576 = vmul.f32 %v2560, %v2224
        %v2577 = vmul.f32 %v2561, %v2225
        %v2578 = vmul.f32 %v2562, %v2226
        %v2579 = vmul.f32 %v2563, %v2227
        %v2580 = vmul.f32 %v2564, %v2228
        %v2581 = vmul.f32 %v2565, %v2229
        %v2582 = vmul.f32 %v2566, %v2230
        %v2583 = vmul.f32 %v2567, %v2231
        %v2584 = vmul.f32 %v2568, %v2232
        %v2585 = vmul.f32 %v2569, %v2233
        %v2586 = vmul.f32 %v2570, %v2234
        %v2587 = vmul.f32 %v2571, %v2235
        %v2588 = vmul.f32 %v2572, %v2236
        %v2589 = vmul.f32 %v2573, %v2237
        %v2590 = vmul.f32 %v2574, %v2238
        %v2591 = vperm.slane %v402, 0
        %v2592 = vmul.f32 %v2223, %v2591
        %v2593 = vmul.f32 %v2224, %v2591
        %v2594 = vmul.f32 %v2225, %v2591
        %v2595 = vmul.f32 %v2226, %v2591
        %v2596 = vmul.f32 %v2227, %v2591
        %v2597 = vmul.f32 %v2228, %v2591
        %v2598 = vmul.f32 %v2229, %v2591
        %v2599 = vmul.f32 %v2230, %v2591
        %v2600 = vmul.f32 %v2231, %v2591
        %v2601 = vmul.f32 %v2232, %v2591
        %v2602 = vmul.f32 %v2233, %v2591
        %v2603 = vmul.f32 %v2234, %v2591
        %v2604 = vmul.f32 %v2235, %v2591
        %v2605 = vmul.f32 %v2236, %v2591
        %v2606 = vmul.f32 %v2237, %v2591
        %v2607 = vmul.f32 %v2238, %v2591
        %v2608 = vmul.f32 %v2592, %v2592
        %v2609 = vmul.f32 %v2593, %v2593
        %v2610 = vmul.f32 %v2594, %v2594
        %v2611 = vmul.f32 %v2595, %v2595
        %v2612 = vmul.f32 %v2596, %v2596
        %v2613 = vmul.f32 %v2597, %v2597
        %v2614 = vmul.f32 %v2598, %v2598
        %v2615 = vmul.f32 %v2599, %v2599
        %v2616 = vmul.f32 %v2600, %v2600
        %v2617 = vmul.f32 %v2601, %v2601
        %v2618 = vmul.f32 %v2602, %v2602
        %v2619 = vmul.f32 %v2603, %v2603
        %v2620 = vmul.f32 %v2604, %v2604
        %v2621 = vmul.f32 %v2605, %v2605
        %v2622 = vmul.f32 %v2606, %v2606
        %v2623 = vmul.f32 %v2607, %v2607
        %v2624 = vsel %vm1165, %v2608, 0.0
        %2625 = vadd.xlane.f32.xlu0 %v2624
        %v2626 = vpop.xlane.xlu0 %2625
        %v2627 = vsel %vm1165, %v2609, 0.0
        %2628 = vadd.xlane.f32.xlu0 %v2627
        %v2629 = vpop.xlane.xlu0 %2628
        %v2630 = vsel %vm1165, %v2610, 0.0
        %2631 = vadd.xlane.f32.xlu0 %v2630
        %v2632 = vpop.xlane.xlu0 %2631
        %v2633 = vsel %vm1165, %v2611, 0.0
        %2634 = vadd.xlane.f32.xlu0 %v2633
        %v2635 = vpop.xlane.xlu0 %2634
        %v2636 = vsel %vm1165, %v2612, 0.0
        %2637 = vadd.xlane.f32.xlu0 %v2636
        %v2638 = vpop.xlane.xlu0 %2637
        %v2639 = vsel %vm1165, %v2613, 0.0
        %2640 = vadd.xlane.f32.xlu0 %v2639
        %v2641 = vpop.xlane.xlu0 %2640
        %v2642 = vsel %vm1165, %v2614, 0.0
        %2643 = vadd.xlane.f32.xlu0 %v2642
        %v2644 = vpop.xlane.xlu0 %2643
        %v2645 = vsel %vm1165, %v2615, 0.0
        %2646 = vadd.xlane.f32.xlu0 %v2645
        %v2647 = vpop.xlane.xlu0 %2646
        %v2648 = vsel %vm1165, %v2616, 0.0
        %2649 = vadd.xlane.f32.xlu0 %v2648
        %v2650 = vpop.xlane.xlu0 %2649
        %v2651 = vsel %vm1165, %v2617, 0.0
        %2652 = vadd.xlane.f32.xlu0 %v2651
        %v2653 = vpop.xlane.xlu0 %2652
        %v2654 = vsel %vm1165, %v2618, 0.0
        %2655 = vadd.xlane.f32.xlu0 %v2654
        %v2656 = vpop.xlane.xlu0 %2655
        %v2657 = vsel %vm1165, %v2619, 0.0
        %2658 = vadd.xlane.f32.xlu0 %v2657
        %v2659 = vpop.xlane.xlu0 %2658
        %v2660 = vsel %vm1165, %v2620, 0.0
        %2661 = vadd.xlane.f32.xlu0 %v2660
        %v2662 = vpop.xlane.xlu0 %2661
        %v2663 = vsel %vm1165, %v2621, 0.0
        %2664 = vadd.xlane.f32.xlu0 %v2663
        %v2665 = vpop.xlane.xlu0 %2664
        %v2666 = vsel %vm1165, %v2622, 0.0
        %2667 = vadd.xlane.f32.xlu0 %v2666
        %v2668 = vpop.xlane.xlu0 %2667
        %v2669 = vsel %vm1165, %v2623, 0.0
        %2670 = vadd.xlane.f32.xlu0 %v2669
        %v2671 = vpop.xlane.xlu0 %2670
        %v2672 = vmul.f32 %v2575, %v2591
        %v2673 = vmul.f32 %v2576, %v2591
        %v2674 = vmul.f32 %v2577, %v2591
        %v2675 = vmul.f32 %v2578, %v2591
        %v2676 = vmul.f32 %v2579, %v2591
        %v2677 = vmul.f32 %v2580, %v2591
        %v2678 = vmul.f32 %v2581, %v2591
        %v2679 = vmul.f32 %v2582, %v2591
        %v2680 = vmul.f32 %v2583, %v2591
        %v2681 = vmul.f32 %v2584, %v2591
        %v2682 = vmul.f32 %v2585, %v2591
        %v2683 = vmul.f32 %v2586, %v2591
        %v2684 = vmul.f32 %v2587, %v2591
        %v2685 = vmul.f32 %v2588, %v2591
        %v2686 = vmul.f32 %v2589, %v2591
        %v2687 = vmul.f32 %v2590, %v2591
        %v2688 = vsel %vm1165, %v2672, 0.0
        %2689 = vadd.xlane.f32.xlu0 %v2688
        %v2690 = vpop.xlane.xlu0 %2689
        %v2691 = vsel %vm1165, %v2673, 0.0
        %2692 = vadd.xlane.f32.xlu0 %v2691
        %v2693 = vpop.xlane.xlu0 %2692
        %v2694 = vsel %vm1165, %v2674, 0.0
        %2695 = vadd.xlane.f32.xlu0 %v2694
        %v2696 = vpop.xlane.xlu0 %2695
        %v2697 = vsel %vm1165, %v2675, 0.0
        %2698 = vadd.xlane.f32.xlu0 %v2697
        %v2699 = vpop.xlane.xlu0 %2698
        %v2700 = vsel %vm1165, %v2676, 0.0
        %2701 = vadd.xlane.f32.xlu0 %v2700
        %v2702 = vpop.xlane.xlu0 %2701
        %v2703 = vsel %vm1165, %v2677, 0.0
        %2704 = vadd.xlane.f32.xlu0 %v2703
        %v2705 = vpop.xlane.xlu0 %2704
        %v2706 = vsel %vm1165, %v2678, 0.0
        %2707 = vadd.xlane.f32.xlu0 %v2706
        %v2708 = vpop.xlane.xlu0 %2707
        %v2709 = vsel %vm1165, %v2679, 0.0
        %2710 = vadd.xlane.f32.xlu0 %v2709
        %v2711 = vpop.xlane.xlu0 %2710
        %v2712 = vsel %vm1165, %v2680, 0.0
        %2713 = vadd.xlane.f32.xlu0 %v2712
        %v2714 = vpop.xlane.xlu0 %2713
        %v2715 = vsel %vm1165, %v2681, 0.0
        %2716 = vadd.xlane.f32.xlu0 %v2715
        %v2717 = vpop.xlane.xlu0 %2716
        %v2718 = vsel %vm1165, %v2682, 0.0
        %2719 = vadd.xlane.f32.xlu0 %v2718
        %v2720 = vpop.xlane.xlu0 %2719
        %v2721 = vsel %vm1165, %v2683, 0.0
        %2722 = vadd.xlane.f32.xlu0 %v2721
        %v2723 = vpop.xlane.xlu0 %2722
        %v2724 = vsel %vm1165, %v2684, 0.0
        %2725 = vadd.xlane.f32.xlu0 %v2724
        %v2726 = vpop.xlane.xlu0 %2725
        %v2727 = vsel %vm1165, %v2685, 0.0
        %2728 = vadd.xlane.f32.xlu0 %v2727
        %v2729 = vpop.xlane.xlu0 %2728
        %v2730 = vsel %vm1165, %v2686, 0.0
        %2731 = vadd.xlane.f32.xlu0 %v2730
        %v2732 = vpop.xlane.xlu0 %2731
        %v2733 = vsel %vm1165, %v2687, 0.0
        %2734 = vadd.xlane.f32.xlu0 %v2733
        %v2735 = vpop.xlane.xlu0 %2734
        %2736 = vxpose.xlu0.b32.start [1/16] %v2626, 128
        %2737 = vxpose.xlu0.b32.cont [2/16] %v2629, 128
        %2738 = vxpose.xlu0.b32.cont [3/16] %v2632, 128
        %2739 = vxpose.xlu0.b32.cont [4/16] %v2635, 128
        %2740 = vxpose.xlu0.b32.cont [5/16] %v2638, 128
        %2741 = vxpose.xlu0.b32.cont [6/16] %v2641, 128
        %2742 = vxpose.xlu0.b32.cont [7/16] %v2644, 128
        %2743 = vxpose.xlu0.b32.cont [8/16] %v2647, 128
        %2744 = vxpose.xlu0.b32.cont [9/16] %v2650, 128
        %2745 = vxpose.xlu0.b32.cont [10/16] %v2653, 128
        %2746 = vxpose.xlu0.b32.cont [11/16] %v2656, 128
        %2747 = vxpose.xlu0.b32.cont [12/16] %v2659, 128
        %2748 = vxpose.xlu0.b32.cont [13/16] %v2662, 128
        %2749 = vxpose.xlu0.b32.cont [14/16] %v2665, 128
        %2750 = vxpose.xlu0.b32.cont [15/16] %v2668, 128
        %2751 = vxpose.xlu0.b32.end [16/16] %v2671, 128
        %v2752 = vpop.trf.xlu0
        %v2753 = vpop.trf.xlu0
        %v2754 = vpop.trf.xlu0
        %v2755 = vpop.trf.xlu0
        %v2756 = vpop.trf.xlu0
        %v2757 = vpop.trf.xlu0
        %v2758 = vpop.trf.xlu0
        %v2759 = vpop.trf.xlu0
        %v2760 = vpop.trf.xlu0
        %v2761 = vpop.trf.xlu0
        %v2762 = vpop.trf.xlu0
        %v2763 = vpop.trf.xlu0
        %v2764 = vpop.trf.xlu0
        %v2765 = vpop.trf.xlu0
        %v2766 = vpop.trf.xlu0
        %v2767 = vpop.trf.xlu0
        %2768 = vxpose.xlu0.b32.start [1/16] %v2690, 128
        %2769 = vxpose.xlu0.b32.cont [2/16] %v2693, 128
        %2770 = vxpose.xlu0.b32.cont [3/16] %v2696, 128
        %2771 = vxpose.xlu0.b32.cont [4/16] %v2699, 128
        %2772 = vxpose.xlu0.b32.cont [5/16] %v2702, 128
        %2773 = vxpose.xlu0.b32.cont [6/16] %v2705, 128
        %2774 = vxpose.xlu0.b32.cont [7/16] %v2708, 128
        %2775 = vxpose.xlu0.b32.cont [8/16] %v2711, 128
        %2776 = vxpose.xlu0.b32.cont [9/16] %v2714, 128
        %2777 = vxpose.xlu0.b32.cont [10/16] %v2717, 128
        %2778 = vxpose.xlu0.b32.cont [11/16] %v2720, 128
        %2779 = vxpose.xlu0.b32.cont [12/16] %v2723, 128
        %2780 = vxpose.xlu0.b32.cont [13/16] %v2726, 128
        %2781 = vxpose.xlu0.b32.cont [14/16] %v2729, 128
        %2782 = vxpose.xlu0.b32.cont [15/16] %v2732, 128
        %2783 = vxpose.xlu0.b32.end [16/16] %v2735, 128
        %v2784 = vpop.trf.xlu0
        %v2785 = vpop.trf.xlu0
        %v2786 = vpop.trf.xlu0
        %v2787 = vpop.trf.xlu0
        %v2788 = vpop.trf.xlu0
        %v2789 = vpop.trf.xlu0
        %v2790 = vpop.trf.xlu0
        %v2791 = vpop.trf.xlu0
        %v2792 = vpop.trf.xlu0
        %v2793 = vpop.trf.xlu0
        %v2794 = vpop.trf.xlu0
        %v2795 = vpop.trf.xlu0
        %v2796 = vpop.trf.xlu0
        %v2797 = vpop.trf.xlu0
        %v2798 = vpop.trf.xlu0
        %v2799 = vpop.trf.xlu0
        %2800 = vxpose.xlu0.b32.start [1/16] %v1470, 128
        %2801 = vxpose.xlu0.b32.cont [2/16] %v1473, 128
        %2802 = vxpose.xlu0.b32.cont [3/16] %v1476, 128
        %2803 = vxpose.xlu0.b32.cont [4/16] %v1479, 128
        %2804 = vxpose.xlu0.b32.cont [5/16] %v1482, 128
        %2805 = vxpose.xlu0.b32.cont [6/16] %v1485, 128
        %2806 = vxpose.xlu0.b32.cont [7/16] %v1488, 128
        %2807 = vxpose.xlu0.b32.cont [8/16] %v1491, 128
        %2808 = vxpose.xlu0.b32.cont [9/16] %v1494, 128
        %2809 = vxpose.xlu0.b32.cont [10/16] %v1497, 128
        %2810 = vxpose.xlu0.b32.cont [11/16] %v1500, 128
        %2811 = vxpose.xlu0.b32.cont [12/16] %v1503, 128
        %2812 = vxpose.xlu0.b32.cont [13/16] %v1506, 128
        %2813 = vxpose.xlu0.b32.cont [14/16] %v1509, 128
        %2814 = vxpose.xlu0.b32.cont [15/16] %v1512, 128
        %2815 = vxpose.xlu0.b32.end [16/16] %v1515, 128
        %v2816 = vpop.trf.xlu0
        %v2817 = vpop.trf.xlu0
        %v2818 = vpop.trf.xlu0
        %v2819 = vpop.trf.xlu0
        %v2820 = vpop.trf.xlu0
        %v2821 = vpop.trf.xlu0
        %v2822 = vpop.trf.xlu0
        %v2823 = vpop.trf.xlu0
        %v2824 = vpop.trf.xlu0
        %v2825 = vpop.trf.xlu0
        %v2826 = vpop.trf.xlu0
        %v2827 = vpop.trf.xlu0
        %v2828 = vpop.trf.xlu0
        %v2829 = vpop.trf.xlu0
        %v2830 = vpop.trf.xlu0
        %v2831 = vpop.trf.xlu0
        %v2832 = vadd.f32 %v2816, 100000.0
        %v2833 = vmul.f32 %v2832, 1e-07
        %v2834 = vpow.f32 %v2833, -0.04
        %v2835 = vrsqrt.pop %v2752
        %v2836 = vmul.f32 %v2835, %v2752
        %v2837 = vmul.f32 %v2836, %v2835
        %v2838 = vmul.f32 0.5, %v2837
        %v2839 = vsub.f32 1.5, %v2838
        %v2840 = vmul.f32 %v2835, %v2839
        %v2841 = vmul.f32 %v2752, %v2840
        %vm2842 = vcmp.eq.f32.partialorder %v2752, inf
        %v2843 = vsel %vm2842, %v2752, %v2841
        %vm2844 = vcmp.eq.f32.partialorder %v2752, 0.0
        %v2845 = vand.u32 %v2752, 2147483648
        %v2846 = vsel %vm2844, %v2845, %v2843
        %v2847 = vmul.f32 %v2846, 4.619053
        %v2848 = vmul.f32 %v2847, %v2834
        %v2849 = vmin.f32 %v2848, 45.0
        %2850 = vst [vmem:[%s235] sm:$0x1] %v2849
        %v2851 = vmul.f32 %v2784, %v2834
        %v2852 = vmin.f32 %v2851, 45.0
        %2853 = vst [vmem:[%s241] sm:$0x1] %v2852
        %s2854 = sand.u32 %s125, 1
        %s2855 = scalar_lea.sflag [#allocation3], %s2854
        %s2856 = sand.u32 %s125, 1
        %s2857 = scalar_lea.vmem [#allocation2], %s2856
        %s2858 = sand.u32 %s151, 1
        %s2859 = scalar_lea.sflag [#allocation5], %s2858
        %s2860 = sand.u32 %s151, 1
        %s2861 = scalar_lea.vmem [#allocation4], %s2860
        // Predicated region
        $region37: #{tpu_custom_call.1} parent=35 // pred_check
          %p2862 = pneg %p135
        $region38: #{tpu_custom_call.1} parent=35 // pred_check_branch
          %2864 = sbr.rel (%p2862) target = $region40
        $region39: #{tpu_custom_call.1} parent=35 // pred_region
          %2866 = vsyncadd %s2855, 0
          %s2867 = scalar_lea.hbm %s4, %s23
          %s2869 = sshll.u32 %s2857, 4
          %s2870 = int_to_ptr.vmem [resolvable:$true] %s2869
          %s2871 = sshll.u32 %s2867, 4
          %s2872 = int_to_ptr.hbm [resolvable:$true] %s2871
          %2874 = dma.vmem_to_hbm [thread:$0]  %s2870, 16, %s2872, %s2855
        $region40: #{tpu_custom_call.1} parent=35 // pred_fallthru
          _
        // Predicated region
        $region41: #{tpu_custom_call.1} parent=35 // pred_check
          %p2875 = pneg %p161
        $region42: #{tpu_custom_call.1} parent=35 // pred_check_branch
          %2877 = sbr.rel (%p2875) target = $region44
        $region43: #{tpu_custom_call.1} parent=35 // pred_region
          %2879 = vsyncadd %s2859, 0
          %s2880 = scalar_lea.hbm %s5, %s23
          %s2882 = sshll.u32 %s2861, 4
          %s2883 = int_to_ptr.vmem [resolvable:$true] %s2882
          %s2884 = sshll.u32 %s2880, 4
          %s2885 = int_to_ptr.hbm [resolvable:$true] %s2884
          %2887 = dma.vmem_to_hbm [thread:$0]  %s2883, 16, %s2885, %s2859
        $region44: #{tpu_custom_call.1} parent=35 // pred_fallthru
          _
      $region36: #{tpu_custom_call.1} parent=5 // pred_fallthru
        _
      %p2888 = scmp.le.s32.totalorder 2, %s18
      // Predicated region
      $region45: #{tpu_custom_call.1} parent=5 // pred_check
        %p2889 = pneg %p2888
      $region46: #{tpu_custom_call.1} parent=5 // pred_check_branch
        %2891 = sbr.rel (%p2889) target = $region48
      $region47: #{tpu_custom_call.1} parent=5 // pred_region
        %s2892 = ssub.s32 %s18, 2
        // Predicated region
        $region49: #{tpu_custom_call.1} parent=47 // pred_check
          %p2893 = pneg %p141
        $region50: #{tpu_custom_call.1} parent=47 // pred_check_branch
          %2895 = sbr.rel (%p2893) target = $region52
        $region51: #{tpu_custom_call.1} parent=47 // pred_region
          %s2896 = sand.u32 %s126, 1
          %s2897 = scalar_lea.sflag [#allocation3], %s2896
          %s2898 = sand.u32 %s126, 1
          %s2899 = scalar_lea.vmem [#allocation2], %s2898
          %2901 = dma.done %s2897, 16
        $region52: #{tpu_custom_call.1} parent=47 // pred_fallthru
          _
        // Predicated region
        $region53: #{tpu_custom_call.1} parent=47 // pred_check
          %p2902 = pneg %p167
        $region54: #{tpu_custom_call.1} parent=47 // pred_check_branch
          %2904 = sbr.rel (%p2902) target = $region56
        $region55: #{tpu_custom_call.1} parent=47 // pred_region
          %s2905 = sand.u32 %s152, 1
          %s2906 = scalar_lea.sflag [#allocation5], %s2905
          %s2907 = sand.u32 %s152, 1
          %s2908 = scalar_lea.vmem [#allocation4], %s2907
          %2910 = dma.done %s2906, 16
        $region56: #{tpu_custom_call.1} parent=47 // pred_fallthru
          _
      $region48: #{tpu_custom_call.1} parent=5 // pred_fallthru
        _
    $region6: #{tpu_custom_call.1} parent=1 // loop_footer
      %s22 = sadd.s32 1, %s18
    $region7: #{tpu_custom_call.1} parent=1 // loop_footer_branch
      %17 = sbr.rel target = $region3
    $region8: #{tpu_custom_call.1} parent=1 // loop_exit
      _
    %2911 = vsyncpa [#allocation3], 1
    %s2912 = scalar_lea.sflag [#allocation3], 1
    %2913 = vsyncpa %s2912, 1
    %2914 = vsyncpa [#allocation5], 1
    %s2915 = scalar_lea.sflag [#allocation5], 1
    %2916 = vsyncpa %s2915, 1

</llo_original>
